<compile_context>
chip_gen: v7x
topology: tpu7x:2x2x1
jax: 0.10.0
libtpu: 0.0.40
codegen_flags: <defaults>
</compile_context>

<pallas_src>
import jax
import jax.numpy as jnp
from jax.experimental import pallas as pl
from jax.experimental.pallas import tpu as pltpu

KS = 3  # conv kernel size; padding = (KS - 1) // 2 = 1, stride 1, dilation 1


# ------------------------------- Pallas kernel --------------------------------

def decoder_kernel(x_ref, w1_ref, w2_ref, w3t_ref, o_ref, pad1, pad2):
    # x_ref  : (1, H, W, Cin1)  concat(upsampled x, x_big) in NHWC, one batch element
    # w1_ref : (9*Cin1, Cy)     im2col-packed conv1 weights (rows ordered kh, kw, cin)
    # w2_ref : (9*Cy,  Cy)      im2col-packed conv2 weights
    # w3t_ref: (Cy, 9*Cy)       conv3 weights, transposed pack (for the NT matmul)
    # o_ref  : (1, Cy, H*W)     NCHW output with flattened spatial dim (lane-dense store)
    # pad1   : VMEM (H+2, W+2, Cin1) f32  zero-halo input of conv1
    # pad2   : VMEM (H+2, W+2, Cy)   f32  zero-halo intermediate (reused by conv2/conv3)
    _, H, W, _ = x_ref.shape
    Cy = o_ref.shape[1]

    def im2col(pad_ref):
        # 9 shifted windows concatenated along the channel (lane) axis -> (H, W, 9*Cin)
        return jnp.concatenate(
            [pad_ref[kh:kh + H, kw:kw + W, :] for kh in range(KS) for kw in range(KS)],
            axis=-1)

    # Zero the halos once per grid step; interiors are overwritten below.
    pad1[...] = jnp.zeros_like(pad1)
    pad2[...] = jnp.zeros_like(pad2)
    pad1[1:H + 1, 1:W + 1, :] = x_ref[0].astype(jnp.float32)

    # conv1 + ReLU : single (H*W x 9*Cin1) @ (9*Cin1 x Cy) matmul (expressed as a 3-D dot).
    y = jax.lax.dot_general(im2col(pad1), w1_ref[...],
                            dimension_numbers=(((2,), (0,)), ((), ())),
                            preferred_element_type=jnp.float32)
    pad2[1:H + 1, 1:W + 1, :] = jnp.maximum(y, 0.0)

    # conv2 + ReLU
    y = jax.lax.dot_general(im2col(pad2), w2_ref[...],
                            dimension_numbers=(((2,), (0,)), ((), ())),
                            preferred_element_type=jnp.float32)
    pad2[1:H + 1, 1:W + 1, :] = jnp.maximum(y, 0.0)

    # conv3 + ReLU, computed directly in (Cy, H*W) orientation ("NT" dot, like q @ k.T) so the
    # final store is lane-dense (256 lanes) and already NCHW memory order.
    cols = jnp.reshape(im2col(pad2), (H * W, KS * KS * Cy))     # collapse major dims only
    y = jax.lax.dot_general(w3t_ref[...], cols,
                            dimension_numbers=(((1,), (1,)), ((), ())),
                            preferred_element_type=jnp.float32)  # (Cy, H*W)
    o_ref[0] = jnp.maximum(y, 0.0).astype(o_ref.dtype)


# ---------------------------------- wrappers -----------------------------------

def _bilinear_matrix(out_size, in_size):
    """Interpolation matrix matching F.interpolate(mode='bilinear', align_corners=False)."""
    i = jnp.arange(out_size, dtype=jnp.float32)
    src = jnp.maximum((i + 0.5) * (in_size / out_size) - 0.5, 0.0)
    i0 = jnp.clip(jnp.floor(src).astype(jnp.int32), 0, in_size - 1)
    i1 = jnp.minimum(i0 + 1, in_size - 1)
    frac = src - i0.astype(jnp.float32)
    return ((1.0 - frac)[:, None] * jax.nn.one_hot(i0, in_size, dtype=jnp.float32)
            + frac[:, None] * jax.nn.one_hot(i1, in_size, dtype=jnp.float32))


def _pack_weight(w_oihw):
    """nn.Conv2d weight (Cout, Cin, 3, 3) -> im2col matrix (9*Cin, Cout), rows ordered (kh, kw, cin)."""
    cout, cin, kh, kw = w_oihw.shape
    return jnp.transpose(w_oihw, (2, 3, 1, 0)).reshape(kh * kw * cin, cout)


def _fused_decode_convs(cat_nhwc, w1p, w2p, w3p):
    N, H, W, Cin1 = cat_nhwc.shape
    Cy = w1p.shape[1]
    out = pl.pallas_call(
        decoder_kernel,
        out_shape=jax.ShapeDtypeStruct((N, Cy, H * W), cat_nhwc.dtype),
        grid=(N,),
        in_specs=[
            pl.BlockSpec((1, H, W, Cin1), lambda n: (n, 0, 0, 0)),
            pl.BlockSpec((KS * KS * Cin1, Cy), lambda n: (0, 0)),
            pl.BlockSpec((KS * KS * Cy, Cy), lambda n: (0, 0)),
            pl.BlockSpec((Cy, KS * KS * Cy), lambda n: (0, 0)),
        ],
        out_specs=pl.BlockSpec((1, Cy, H * W), lambda n: (n, 0, 0)),
        scratch_shapes=[
            pltpu.VMEM((H + 2, W + 2, Cin1), jnp.float32),
            pltpu.VMEM((H + 2, W + 2, Cy), jnp.float32),
        ],
        compiler_params=pltpu.CompilerParams(dimension_semantics=("parallel",)),
    )(cat_nhwc, w1p, w2p, w3p.T)
    return out.reshape(N, Cy, H, W)   # free reshape: (Cy, H*W) is already NCHW memory


def stack_decoder_forward(x_big, x, w1, w2, w3):
    """StackDecoder.forward. x_big: (N, Cb, H, W), x: (N, Cx, h, w), w*: OIHW conv weights."""
    _, _, H, W = x_big.shape
    _, _, h, w = x.shape
    # F.upsample(x, size=(H, W), mode='bilinear') as two separable interpolation matmuls.
    ah = _bilinear_matrix(H, h)                      # (H, h)
    aw = _bilinear_matrix(W, w)                      # (W, w)
    up = jnp.einsum('Hh,nchw->ncHw', ah, x)
    up = jnp.einsum('Ww,ncHw->ncHW', aw, up)
    cat = jnp.concatenate([up, x_big], axis=1)       # torch.cat([y, x_big], 1)
    cat_nhwc = jnp.transpose(cat, (0, 2, 3, 1))      # channels into the lane (contraction) dim
    return _fused_decode_convs(cat_nhwc, _pack_weight(w1), _pack_weight(w2), _pack_weight(w3))


# --------------------------- pure-JAX reference check ---------------------------

def _ref_forward(x_big, x, w1, w2, w3):
    _, _, H, W = x_big.shape
    _, _, h, w = x.shape
    ah = _bilinear_matrix(H, h)
    aw = _bilinear_matrix(W, w)
    up = jnp.einsum('Hh,nchw->ncHw', ah, x)
    up = jnp.einsum('Ww,ncHw->ncHW', aw, up)
    y = jnp.concatenate([up, x_big], axis=1)
    for wt in (w1, w2, w3):
        y = jax.lax.conv_general_dilated(y, wt, (1, 1), 'SAME',
                                         dimension_numbers=('NCHW', 'OIHW', 'NCHW'))
        y = jax.nn.relu(y)
    return y


# ------------------------------------ main --------------------------------------

if __name__ == "__main__":
    N = 2
    Cb, Cx, Cy = 8, 4, 8          # x_big_channels, x_channels, y_channels
    H = W = 16                    # x_big spatial size
    h = w = 8                     # x spatial size (upsampled 2x, as in the UNet decoder)

    key = jax.random.PRNGKey(0)
    kb, kx, k1, k2, k3 = jax.random.split(key, 5)
    x_big = jax.random.normal(kb, (N, Cb, H, W), dtype=jnp.float32)
    x = jax.random.normal(kx, (N, Cx, h, w), dtype=jnp.float32)
    # nn.Conv2d(..., bias=False) weights in PyTorch OIHW layout.
    w1 = 0.1 * jax.random.normal(k1, (Cy, Cb + Cx, KS, KS), dtype=jnp.float32)
    w2 = 0.1 * jax.random.normal(k2, (Cy, Cy, KS, KS), dtype=jnp.float32)
    w3 = 0.1 * jax.random.normal(k3, (Cy, Cy, KS, KS), dtype=jnp.float32)

    y_out = jax.jit(stack_decoder_forward)(x_big, x, w1, w2, w3)
    jax.block_until_ready(y_out)

    y_ref = _ref_forward(x_big, x, w1, w2, w3)
    assert y_out.shape == (N, Cy, H, W)
    assert jnp.allclose(y_out, y_ref, atol=1e-4, rtol=1e-4), float(jnp.max(jnp.abs(y_out - y_ref)))

    print("KERNEL_OK")
</pallas_src>

<mosaic_0001>
module attributes {stable_mosaic.version = 11 : i64} {
  func.func @decoder_kernel(%arg0: i32, %arg1: memref<1x16x16x12xf32, #tpu.memory_space<vmem>>, %arg2: memref<108x8xf32, #tpu.memory_space<vmem>>, %arg3: memref<72x8xf32, #tpu.memory_space<vmem>>, %arg4: memref<8x72xf32, #tpu.memory_space<vmem>>, %arg5: memref<1x8x256xf32, #tpu.memory_space<vmem>>, %arg6: memref<18x18x12xf32, #tpu.memory_space<vmem>>, %arg7: memref<18x18x8xf32, #tpu.memory_space<vmem>>) attributes {dimension_semantics = [#tpu.dimension_semantics<parallel>], iteration_bounds = array<i64: 2>, scalar_prefetch = 0 : i64, scratch_operands = 2 : i64, tpu.core_type = #tpu.core_type<tc>, window_params = [{transform_indices = @transform_0, window_bounds = array<i64: 1, 16, 16, 12>}, {pipeline_mode = #tpu.pipeline_mode<synchronous>, transform_indices = @transform_1, window_bounds = array<i64: 108, 8>}, {pipeline_mode = #tpu.pipeline_mode<synchronous>, transform_indices = @transform_2, window_bounds = array<i64: 72, 8>}, {pipeline_mode = #tpu.pipeline_mode<synchronous>, transform_indices = @transform_3, window_bounds = array<i64: 8, 72>}, {transform_indices = @transform_4, window_bounds = array<i64: 1, 8, 256>}]} {
    %cst = arith.constant 0.000000e+00 : f32
    %0 = vector.broadcast %cst : f32 to vector<18x18x12xf32>
    %c0 = arith.constant 0 : index
    %c0_0 = arith.constant 0 : index
    %c0_1 = arith.constant 0 : index
    %1 = vector.load %arg6[%c0, %c0_0, %c0_1] : memref<18x18x12xf32, #tpu.memory_space<vmem>>, vector<18x18x12xf32>
    tpu.vector_store %arg6[%c0, %c0_0, %c0_1], %0 {strides = array<i32>} : memref<18x18x12xf32, #tpu.memory_space<vmem>>, vector<18x18x12xf32>,
    %cst_2 = arith.constant 0.000000e+00 : f32
    %2 = vector.broadcast %cst_2 : f32 to vector<18x18x8xf32>
    %c0_3 = arith.constant 0 : index
    %c0_4 = arith.constant 0 : index
    %c0_5 = arith.constant 0 : index
    %3 = vector.load %arg7[%c0_3, %c0_4, %c0_5] : memref<18x18x8xf32, #tpu.memory_space<vmem>>, vector<18x18x8xf32>
    tpu.vector_store %arg7[%c0_3, %c0_4, %c0_5], %2 {strides = array<i32>} : memref<18x18x8xf32, #tpu.memory_space<vmem>>, vector<18x18x8xf32>,
    %c0_6 = arith.constant 0 : index
    %c0_7 = arith.constant 0 : index
    %c0_8 = arith.constant 0 : index
    %c0_9 = arith.constant 0 : index
    %4 = vector.load %arg1[%c0_6, %c0_7, %c0_8, %c0_9] : memref<1x16x16x12xf32, #tpu.memory_space<vmem>>, vector<1x16x16x12xf32>
    %5 = vector.shape_cast %4 : vector<1x16x16x12xf32> to vector<16x16x12xf32>
    %c1 = arith.constant 1 : index
    %c1_10 = arith.constant 1 : index
    %c0_11 = arith.constant 0 : index
    %6 = vector.load %arg6[%c1, %c1_10, %c0_11] : memref<18x18x12xf32, #tpu.memory_space<vmem>>, vector<16x16x12xf32>
    tpu.vector_store %arg6[%c1, %c1_10, %c0_11], %5 {strides = array<i32>} : memref<18x18x12xf32, #tpu.memory_space<vmem>>, vector<16x16x12xf32>,
    %c0_12 = arith.constant 0 : index
    %c0_13 = arith.constant 0 : index
    %c0_14 = arith.constant 0 : index
    %7 = vector.load %arg6[%c0_12, %c0_13, %c0_14] : memref<18x18x12xf32, #tpu.memory_space<vmem>>, vector<16x16x12xf32>
    %c0_15 = arith.constant 0 : index
    %c1_16 = arith.constant 1 : index
    %c0_17 = arith.constant 0 : index
    %8 = vector.load %arg6[%c0_15, %c1_16, %c0_17] : memref<18x18x12xf32, #tpu.memory_space<vmem>>, vector<16x16x12xf32>
    %c0_18 = arith.constant 0 : index
    %c2 = arith.constant 2 : index
    %c0_19 = arith.constant 0 : index
    %9 = vector.load %arg6[%c0_18, %c2, %c0_19] : memref<18x18x12xf32, #tpu.memory_space<vmem>>, vector<16x16x12xf32>
    %c1_20 = arith.constant 1 : index
    %c0_21 = arith.constant 0 : index
    %c0_22 = arith.constant 0 : index
    %10 = vector.load %arg6[%c1_20, %c0_21, %c0_22] : memref<18x18x12xf32, #tpu.memory_space<vmem>>, vector<16x16x12xf32>
    %c1_23 = arith.constant 1 : index
    %c1_24 = arith.constant 1 : index
    %c0_25 = arith.constant 0 : index
    %11 = vector.load %arg6[%c1_23, %c1_24, %c0_25] : memref<18x18x12xf32, #tpu.memory_space<vmem>>, vector<16x16x12xf32>
    %c1_26 = arith.constant 1 : index
    %c2_27 = arith.constant 2 : index
    %c0_28 = arith.constant 0 : index
    %12 = vector.load %arg6[%c1_26, %c2_27, %c0_28] : memref<18x18x12xf32, #tpu.memory_space<vmem>>, vector<16x16x12xf32>
    %c2_29 = arith.constant 2 : index
    %c0_30 = arith.constant 0 : index
    %c0_31 = arith.constant 0 : index
    %13 = vector.load %arg6[%c2_29, %c0_30, %c0_31] : memref<18x18x12xf32, #tpu.memory_space<vmem>>, vector<16x16x12xf32>
    %c2_32 = arith.constant 2 : index
    %c1_33 = arith.constant 1 : index
    %c0_34 = arith.constant 0 : index
    %14 = vector.load %arg6[%c2_32, %c1_33, %c0_34] : memref<18x18x12xf32, #tpu.memory_space<vmem>>, vector<16x16x12xf32>
    %c2_35 = arith.constant 2 : index
    %c2_36 = arith.constant 2 : index
    %c0_37 = arith.constant 0 : index
    %15 = vector.load %arg6[%c2_35, %c2_36, %c0_37] : memref<18x18x12xf32, #tpu.memory_space<vmem>>, vector<16x16x12xf32>
    %16 = tpu.concatenate %7, %8, %9, %10, %11, %12, %13, %14, %15 in 2 : vector<16x16x12xf32>, vector<16x16x12xf32>, vector<16x16x12xf32>, vector<16x16x12xf32>, vector<16x16x12xf32>, vector<16x16x12xf32>, vector<16x16x12xf32>, vector<16x16x12xf32>, vector<16x16x12xf32> -> vector<16x16x108xf32>
    %c0_38 = arith.constant 0 : index
    %c0_39 = arith.constant 0 : index
    %17 = vector.load %arg2[%c0_38, %c0_39] : memref<108x8xf32, #tpu.memory_space<vmem>>, vector<108x8xf32>
    %cst_40 = arith.constant dense<0.000000e+00> : vector<16x16x8xf32>
    %18 = tpu.matmul %16, %17, %cst_40 {dimension_numbers = #tpu.dot_dimension_numbers<[2], [0], [0, 1], [1], [0, 0, 0, 1, 1, 1], [], []>} : vector<16x16x108xf32>, vector<108x8xf32>, vector<16x16x8xf32> -> vector<16x16x8xf32>
    %cst_41 = arith.constant 0.000000e+00 : f32
    %19 = vector.broadcast %cst_41 : f32 to vector<16x16x8xf32>
    %20 = arith.maximumf %18, %19 : vector<16x16x8xf32>
    %c1_42 = arith.constant 1 : index
    %c1_43 = arith.constant 1 : index
    %c0_44 = arith.constant 0 : index
    %21 = vector.load %arg7[%c1_42, %c1_43, %c0_44] : memref<18x18x8xf32, #tpu.memory_space<vmem>>, vector<16x16x8xf32>
    tpu.vector_store %arg7[%c1_42, %c1_43, %c0_44], %20 {strides = array<i32>} : memref<18x18x8xf32, #tpu.memory_space<vmem>>, vector<16x16x8xf32>,
    %c0_45 = arith.constant 0 : index
    %c0_46 = arith.constant 0 : index
    %c0_47 = arith.constant 0 : index
    %22 = vector.load %arg7[%c0_45, %c0_46, %c0_47] : memref<18x18x8xf32, #tpu.memory_space<vmem>>, vector<16x16x8xf32>
    %c0_48 = arith.constant 0 : index
    %c1_49 = arith.constant 1 : index
    %c0_50 = arith.constant 0 : index
    %23 = vector.load %arg7[%c0_48, %c1_49, %c0_50] : memref<18x18x8xf32, #tpu.memory_space<vmem>>, vector<16x16x8xf32>
    %c0_51 = arith.constant 0 : index
    %c2_52 = arith.constant 2 : index
    %c0_53 = arith.constant 0 : index
    %24 = vector.load %arg7[%c0_51, %c2_52, %c0_53] : memref<18x18x8xf32, #tpu.memory_space<vmem>>, vector<16x16x8xf32>
    %c1_54 = arith.constant 1 : index
    %c0_55 = arith.constant 0 : index
    %c0_56 = arith.constant 0 : index
    %25 = vector.load %arg7[%c1_54, %c0_55, %c0_56] : memref<18x18x8xf32, #tpu.memory_space<vmem>>, vector<16x16x8xf32>
    %c1_57 = arith.constant 1 : index
    %c1_58 = arith.constant 1 : index
    %c0_59 = arith.constant 0 : index
    %26 = vector.load %arg7[%c1_57, %c1_58, %c0_59] : memref<18x18x8xf32, #tpu.memory_space<vmem>>, vector<16x16x8xf32>
    %c1_60 = arith.constant 1 : index
    %c2_61 = arith.constant 2 : index
    %c0_62 = arith.constant 0 : index
    %27 = vector.load %arg7[%c1_60, %c2_61, %c0_62] : memref<18x18x8xf32, #tpu.memory_space<vmem>>, vector<16x16x8xf32>
    %c2_63 = arith.constant 2 : index
    %c0_64 = arith.constant 0 : index
    %c0_65 = arith.constant 0 : index
    %28 = vector.load %arg7[%c2_63, %c0_64, %c0_65] : memref<18x18x8xf32, #tpu.memory_space<vmem>>, vector<16x16x8xf32>
    %c2_66 = arith.constant 2 : index
    %c1_67 = arith.constant 1 : index
    %c0_68 = arith.constant 0 : index
    %29 = vector.load %arg7[%c2_66, %c1_67, %c0_68] : memref<18x18x8xf32, #tpu.memory_space<vmem>>, vector<16x16x8xf32>
    %c2_69 = arith.constant 2 : index
    %c2_70 = arith.constant 2 : index
    %c0_71 = arith.constant 0 : index
    %30 = vector.load %arg7[%c2_69, %c2_70, %c0_71] : memref<18x18x8xf32, #tpu.memory_space<vmem>>, vector<16x16x8xf32>
    %31 = tpu.concatenate %22, %23, %24, %25, %26, %27, %28, %29, %30 in 2 : vector<16x16x8xf32>, vector<16x16x8xf32>, vector<16x16x8xf32>, vector<16x16x8xf32>, vector<16x16x8xf32>, vector<16x16x8xf32>, vector<16x16x8xf32>, vector<16x16x8xf32>, vector<16x16x8xf32> -> vector<16x16x72xf32>
    %c0_72 = arith.constant 0 : index
    %c0_73 = arith.constant 0 : index
    %32 = vector.load %arg3[%c0_72, %c0_73] : memref<72x8xf32, #tpu.memory_space<vmem>>, vector<72x8xf32>
    %cst_74 = arith.constant dense<0.000000e+00> : vector<16x16x8xf32>
    %33 = tpu.matmul %31, %32, %cst_74 {dimension_numbers = #tpu.dot_dimension_numbers<[2], [0], [0, 1], [1], [0, 0, 0, 1, 1, 1], [], []>} : vector<16x16x72xf32>, vector<72x8xf32>, vector<16x16x8xf32> -> vector<16x16x8xf32>
    %cst_75 = arith.constant 0.000000e+00 : f32
    %34 = vector.broadcast %cst_75 : f32 to vector<16x16x8xf32>
    %35 = arith.maximumf %33, %34 : vector<16x16x8xf32>
    %c1_76 = arith.constant 1 : index
    %c1_77 = arith.constant 1 : index
    %c0_78 = arith.constant 0 : index
    %36 = vector.load %arg7[%c1_76, %c1_77, %c0_78] : memref<18x18x8xf32, #tpu.memory_space<vmem>>, vector<16x16x8xf32>
    tpu.vector_store %arg7[%c1_76, %c1_77, %c0_78], %35 {strides = array<i32>} : memref<18x18x8xf32, #tpu.memory_space<vmem>>, vector<16x16x8xf32>,
    %c0_79 = arith.constant 0 : index
    %c0_80 = arith.constant 0 : index
    %c0_81 = arith.constant 0 : index
    %37 = vector.load %arg7[%c0_79, %c0_80, %c0_81] : memref<18x18x8xf32, #tpu.memory_space<vmem>>, vector<16x16x8xf32>
    %c0_82 = arith.constant 0 : index
    %c1_83 = arith.constant 1 : index
    %c0_84 = arith.constant 0 : index
    %38 = vector.load %arg7[%c0_82, %c1_83, %c0_84] : memref<18x18x8xf32, #tpu.memory_space<vmem>>, vector<16x16x8xf32>
    %c0_85 = arith.constant 0 : index
    %c2_86 = arith.constant 2 : index
    %c0_87 = arith.constant 0 : index
    %39 = vector.load %arg7[%c0_85, %c2_86, %c0_87] : memref<18x18x8xf32, #tpu.memory_space<vmem>>, vector<16x16x8xf32>
    %c1_88 = arith.constant 1 : index
    %c0_89 = arith.constant 0 : index
    %c0_90 = arith.constant 0 : index
    %40 = vector.load %arg7[%c1_88, %c0_89, %c0_90] : memref<18x18x8xf32, #tpu.memory_space<vmem>>, vector<16x16x8xf32>
    %c1_91 = arith.constant 1 : index
    %c1_92 = arith.constant 1 : index
    %c0_93 = arith.constant 0 : index
    %41 = vector.load %arg7[%c1_91, %c1_92, %c0_93] : memref<18x18x8xf32, #tpu.memory_space<vmem>>, vector<16x16x8xf32>
    %c1_94 = arith.constant 1 : index
    %c2_95 = arith.constant 2 : index
    %c0_96 = arith.constant 0 : index
    %42 = vector.load %arg7[%c1_94, %c2_95, %c0_96] : memref<18x18x8xf32, #tpu.memory_space<vmem>>, vector<16x16x8xf32>
    %c2_97 = arith.constant 2 : index
    %c0_98 = arith.constant 0 : index
    %c0_99 = arith.constant 0 : index
    %43 = vector.load %arg7[%c2_97, %c0_98, %c0_99] : memref<18x18x8xf32, #tpu.memory_space<vmem>>, vector<16x16x8xf32>
    %c2_100 = arith.constant 2 : index
    %c1_101 = arith.constant 1 : index
    %c0_102 = arith.constant 0 : index
    %44 = vector.load %arg7[%c2_100, %c1_101, %c0_102] : memref<18x18x8xf32, #tpu.memory_space<vmem>>, vector<16x16x8xf32>
    %c2_103 = arith.constant 2 : index
    %c2_104 = arith.constant 2 : index
    %c0_105 = arith.constant 0 : index
    %45 = vector.load %arg7[%c2_103, %c2_104, %c0_105] : memref<18x18x8xf32, #tpu.memory_space<vmem>>, vector<16x16x8xf32>
    %46 = tpu.concatenate %37, %38, %39, %40, %41, %42, %43, %44, %45 in 2 : vector<16x16x8xf32>, vector<16x16x8xf32>, vector<16x16x8xf32>, vector<16x16x8xf32>, vector<16x16x8xf32>, vector<16x16x8xf32>, vector<16x16x8xf32>, vector<16x16x8xf32>, vector<16x16x8xf32> -> vector<16x16x72xf32>
    %47 = vector.shape_cast %46 : vector<16x16x72xf32> to vector<256x72xf32>
    %c0_106 = arith.constant 0 : index
    %c0_107 = arith.constant 0 : index
    %48 = vector.load %arg4[%c0_106, %c0_107] : memref<8x72xf32, #tpu.memory_space<vmem>>, vector<8x72xf32>
    %cst_108 = arith.constant dense<0.000000e+00> : vector<8x256xf32>
    %49 = tpu.matmul %48, %47, %cst_108 {dimension_numbers = #tpu.dot_dimension_numbers<[1], [1], [0], [0], [0, 0, 1, 0], [], []>} : vector<8x72xf32>, vector<256x72xf32>, vector<8x256xf32> -> vector<8x256xf32>
    %cst_109 = arith.constant 0.000000e+00 : f32
    %50 = vector.broadcast %cst_109 : f32 to vector<8x256xf32>
    %51 = arith.maximumf %49, %50 : vector<8x256xf32>
    %c0_110 = arith.constant 0 : index
    %c0_111 = arith.constant 0 : index
    %c0_112 = arith.constant 0 : index
    %52 = vector.load %arg5[%c0_110, %c0_111, %c0_112] : memref<1x8x256xf32, #tpu.memory_space<vmem>>, vector<1x8x256xf32>
    %53 = vector.shape_cast %52 : vector<1x8x256xf32> to vector<8x256xf32>
    %54 = vector.shape_cast %51 : vector<8x256xf32> to vector<1x8x256xf32>
    tpu.vector_store %arg5[%c0_110, %c0_111, %c0_112], %54 {strides = array<i32>} : memref<1x8x256xf32, #tpu.memory_space<vmem>>, vector<1x8x256xf32>,
    return
  }
  func.func @transform_0(%arg0: i32) -> (i32, i32, i32, i32) {
    %c0_i32 = arith.constant 0 : i32
    %c0_i32_0 = arith.constant 0 : i32
    %c0_i32_1 = arith.constant 0 : i32
    %c0_i32_2 = arith.constant 0 : i32
    return %arg0, %c0_i32, %c0_i32_0, %c0_i32_1 : i32, i32, i32, i32
  }
  func.func @transform_1(%arg0: i32) -> (i32, i32) {
    %c0_i32 = arith.constant 0 : i32
    %c0_i32_0 = arith.constant 0 : i32
    %c0_i32_1 = arith.constant 0 : i32
    return %c0_i32, %c0_i32_0 : i32, i32
  }
  func.func @transform_2(%arg0: i32) -> (i32, i32) {
    %c0_i32 = arith.constant 0 : i32
    %c0_i32_0 = arith.constant 0 : i32
    %c0_i32_1 = arith.constant 0 : i32
    return %c0_i32, %c0_i32_0 : i32, i32
  }
  func.func @transform_3(%arg0: i32) -> (i32, i32) {
    %c0_i32 = arith.constant 0 : i32
    %c0_i32_0 = arith.constant 0 : i32
    %c0_i32_1 = arith.constant 0 : i32
    return %c0_i32, %c0_i32_0 : i32, i32
  }
  func.func @transform_4(%arg0: i32) -> (i32, i32, i32) {
    %c0_i32 = arith.constant 0 : i32
    %c0_i32_0 = arith.constant 0 : i32
    %c0_i32_1 = arith.constant 0 : i32
    return %arg0, %c0_i32, %c0_i32_0 : i32, i32, i32
  }
}

</mosaic_0001>

<llo_original>
// kernel: stack_decoder_forward.1
$region0: #{stack_decoder_forward.1}
  #allocation0 [shape = 'u32[]', space=smem, size = 0x4, offset = 0x4, fixed_abs, tag = 'smem constant byte address 0x4 - core index']
  #allocation1 [shape = 'u32[144,128]{1,0:T(1,128)}', space=vmem, size = 0x12000, scoped, tag = 'internal scratch']
  #allocation2 [shape = 'f32[18,18,12]{2,1,0:T(8,128)}', space=vmem, size = 0x36000, scoped, tag = 'scratch operand']
  #allocation3 [shape = 'f32[18,18,8]{2,1,0:T(8,128)}', space=vmem, size = 0x36000, scoped, tag = 'scratch operand']
  %s0 = inlined_call_operand.vmem [shape: f32[2,16,16,12], index: 0, kind: input, shape index: {}]
  %s1 = inlined_call_operand.vmem [shape: f32[108,8], index: 1, kind: input, shape index: {}]
  %s2 = inlined_call_operand.vmem [shape: f32[72,8], index: 2, kind: input, shape index: {}]
  %s3 = inlined_call_operand.vmem [shape: f32[8,72], index: 3, kind: input, shape index: {}]
  %s4 = inlined_call_operand.vmem [shape: f32[2,8,256], index: 4, kind: output, shape index: {}]
  %s5 = sld [smem:[#allocation0]]
  $region49: #{stack_decoder_forward.1} parent=0
    _
  %s7 = ssub.s32 1, %s5
  %s8 = scalar_select 0, %s7, %s5
  loop: start=0, step=1, limit=4
  $region2: #{stack_decoder_forward.1} parent=0 // loop_pre_header
    _
  $region3: #{stack_decoder_forward.1} parent=0 // loop_header
    %s10 = sphi 0, %s14
    %p11 = scmp.ge.s32.totalorder %s10, 4
    %s20 = sphi 0, %s22
    %s23 = sphi 0, %s20
    %s24 = sphi 0, %s23
    %s40 = sphi 0, %s24
    %s44 = sphi 0, %s44
    %s46 = sphi 0, %s44
    %s47 = sphi 0, %s46
    %s61 = sphi 0, %s47
    %s65 = sphi 0, %s65
    %s67 = sphi 0, %s65
    %s68 = sphi 0, %s67
    %s82 = sphi 0, %s68
    %s86 = sphi 0, %s86
    %s88 = sphi 0, %s86
    %s89 = sphi 0, %s88
    %s103 = sphi 0, %s89
    %s109 = sphi 0, %s111
    %s112 = sphi 0, %s109
    %s113 = sphi 0, %s112
    %s129 = sphi 0, %s113
  $region4: #{stack_decoder_forward.1} parent=0 // loop_header_branch
    %13 = sbr.rel (%p11) target = $region8
  $region5: #{stack_decoder_forward.1} parent=0 // loop_body
    %s15 = ssub.s32 %s10, 1
    %s16 = ssub.s32 %s10, 2
    %s17 = sadd.s32 %s10, 1
    %s18 = ssub.s32 %s10, %s17
    %p19 = scmp.eq.s32.totalorder %s18, 0
    %s21 = sadd.s32 %s20, 1
    %s22 = scalar_select %p19, %s20, %s21
    %p25 = pneg %p19
    %p26 = scmp.eq.s32.totalorder %s10, 1
    %p27 = por %p25, %p26
    %p28 = scmp.ne.s32.totalorder %s20, %s23
    %p29 = scmp.eq.s32.totalorder %s10, 0
    %p30 = por %p28, %p29
    %p31 = scmp.ne.s32.totalorder %s20, %s23
    %p32 = scmp.eq.s32.totalorder %s15, 1
    %p33 = por %p31, %p32
    %p34 = scmp.ne.s32.totalorder %s23, %s24
    %p35 = scmp.eq.s32.totalorder %s15, 0
    %p36 = por %p34, %p35
    %p37 = scmp.ne.s32.totalorder %s23, %s24
    %p38 = scmp.eq.s32.totalorder %s16, 1
    %p39 = por %p37, %p38
    %p41 = scmp.ne.s32.totalorder %s24, %s40
    %p42 = scmp.eq.s32.totalorder %s16, 0
    %p43 = por %p41, %p42
    %s45 = sadd.s32 %s44, 1
    %p48 = scmp.eq.s32.totalorder %s10, 1
    %p49 = scmp.ne.s32.totalorder %s44, %s46
    %p50 = scmp.eq.s32.totalorder %s10, 0
    %p51 = por %p49, %p50
    %p52 = scmp.ne.s32.totalorder %s44, %s46
    %p53 = scmp.eq.s32.totalorder %s15, 1
    %p54 = por %p52, %p53
    %p55 = scmp.ne.s32.totalorder %s46, %s47
    %p56 = scmp.eq.s32.totalorder %s15, 0
    %p57 = por %p55, %p56
    %p58 = scmp.ne.s32.totalorder %s46, %s47
    %p59 = scmp.eq.s32.totalorder %s16, 1
    %p60 = por %p58, %p59
    %p62 = scmp.ne.s32.totalorder %s47, %s61
    %p63 = scmp.eq.s32.totalorder %s16, 0
    %p64 = por %p62, %p63
    %s66 = sadd.s32 %s65, 1
    %p69 = scmp.eq.s32.totalorder %s10, 1
    %p70 = scmp.ne.s32.totalorder %s65, %s67
    %p71 = scmp.eq.s32.totalorder %s10, 0
    %p72 = por %p70, %p71
    %p73 = scmp.ne.s32.totalorder %s65, %s67
    %p74 = scmp.eq.s32.totalorder %s15, 1
    %p75 = por %p73, %p74
    %p76 = scmp.ne.s32.totalorder %s67, %s68
    %p77 = scmp.eq.s32.totalorder %s15, 0
    %p78 = por %p76, %p77
    %p79 = scmp.ne.s32.totalorder %s67, %s68
    %p80 = scmp.eq.s32.totalorder %s16, 1
    %p81 = por %p79, %p80
    %p83 = scmp.ne.s32.totalorder %s68, %s82
    %p84 = scmp.eq.s32.totalorder %s16, 0
    %p85 = por %p83, %p84
    %s87 = sadd.s32 %s86, 1
    %p90 = scmp.eq.s32.totalorder %s10, 1
    %p91 = scmp.ne.s32.totalorder %s86, %s88
    %p92 = scmp.eq.s32.totalorder %s10, 0
    %p93 = por %p91, %p92
    %p94 = scmp.ne.s32.totalorder %s86, %s88
    %p95 = scmp.eq.s32.totalorder %s15, 1
    %p96 = por %p94, %p95
    %p97 = scmp.ne.s32.totalorder %s88, %s89
    %p98 = scmp.eq.s32.totalorder %s15, 0
    %p99 = por %p97, %p98
    %p100 = scmp.ne.s32.totalorder %s88, %s89
    %p101 = scmp.eq.s32.totalorder %s16, 1
    %p102 = por %p100, %p101
    %p104 = scmp.ne.s32.totalorder %s89, %s103
    %p105 = scmp.eq.s32.totalorder %s16, 0
    %p106 = por %p104, %p105
    %s107 = ssub.s32 %s10, %s17
    %p108 = scmp.eq.s32.totalorder %s107, 0
    %s110 = sadd.s32 %s109, 1
    %s111 = scalar_select %p108, %s109, %s110
    %p114 = pneg %p108
    %p115 = scmp.eq.s32.totalorder %s10, 1
    %p116 = por %p114, %p115
    %p117 = scmp.ne.s32.totalorder %s109, %s112
    %p118 = scmp.eq.s32.totalorder %s10, 0
    %p119 = por %p117, %p118
    %p120 = scmp.ne.s32.totalorder %s109, %s112
    %p121 = scmp.eq.s32.totalorder %s15, 1
    %p122 = por %p120, %p121
    %p123 = scmp.ne.s32.totalorder %s112, %s113
    %p124 = scmp.eq.s32.totalorder %s15, 0
    %p125 = por %p123, %p124
    %p126 = scmp.ne.s32.totalorder %s112, %s113
    %p127 = scmp.eq.s32.totalorder %s16, 1
    %p128 = por %p126, %p127
    %p130 = scmp.ne.s32.totalorder %s113, %s129
    %p131 = scmp.eq.s32.totalorder %s16, 0
    %p132 = por %p130, %p131
    %p133 = scmp.le.s32.totalorder 1, %s10
    %p134 = scmp.lt.s32.totalorder %s10, 3
    %p135 = pnand %p133, %p134
    %p136 = pneg %p135
    // Predicated region
    $region9: #{stack_decoder_forward.1} parent=5 // pred_check
      _
    $region10: #{stack_decoder_forward.1} parent=5 // pred_check_branch
      %138 = sbr.rel (%p135) target = $region12
    $region11: #{stack_decoder_forward.1} parent=5 // pred_region
      %s139 = ssub.s32 %s10, 1
      // Predicated region
      $region13: #{stack_decoder_forward.1} parent=11 // pred_check
        %p140 = pneg %p57
      $region14: #{stack_decoder_forward.1} parent=11 // pred_check_branch
        %142 = sbr.rel (%p140) target = $region16
      $region15: #{stack_decoder_forward.1} parent=11 // pred_region
        _
      $region16: #{stack_decoder_forward.1} parent=11 // pred_fallthru
        _
      // Predicated region
      $region17: #{stack_decoder_forward.1} parent=11 // pred_check
        %p143 = pneg %p78
      $region18: #{stack_decoder_forward.1} parent=11 // pred_check_branch
        %145 = sbr.rel (%p143) target = $region20
      $region19: #{stack_decoder_forward.1} parent=11 // pred_region
        _
      $region20: #{stack_decoder_forward.1} parent=11 // pred_fallthru
        _
      // Predicated region
      $region21: #{stack_decoder_forward.1} parent=11 // pred_check
        %p146 = pneg %p99
      $region22: #{stack_decoder_forward.1} parent=11 // pred_check_branch
        %148 = sbr.rel (%p146) target = $region24
      $region23: #{stack_decoder_forward.1} parent=11 // pred_region
        _
      $region24: #{stack_decoder_forward.1} parent=11 // pred_fallthru
        _
    $region12: #{stack_decoder_forward.1} parent=5 // pred_fallthru
      _
    %p149 = scmp.lt.s32.totalorder %s10, 2
    // Predicated region
    $region25: #{stack_decoder_forward.1} parent=5 // pred_check
      %p150 = pneg %p149
    $region26: #{stack_decoder_forward.1} parent=5 // pred_check_branch
      %152 = sbr.rel (%p150) target = $region28
    $region27: #{stack_decoder_forward.1} parent=5 // pred_region
      // Predicated region
      $region29: #{stack_decoder_forward.1} parent=27 // pred_check
        %p153 = pneg %p30
      $region30: #{stack_decoder_forward.1} parent=27 // pred_check_branch
        %155 = sbr.rel (%p153) target = $region32
      $region31: #{stack_decoder_forward.1} parent=27 // pred_region
        %p156 = scmp.lt.s32.totalorder %s10, 1
        %s157 = scalar_select %p156, %s10, 1
        %s158 = smul.addr %s157, 32
        %s159 = smul.addr %s158, 8
        %s160 = scalar_lea.vmem %s0, %s159
      $region32: #{stack_decoder_forward.1} parent=27 // pred_fallthru
        _
    $region28: #{stack_decoder_forward.1} parent=5 // pred_fallthru
      _
    %p161 = scmp.le.s32.totalorder 1, %s10
    %p162 = scmp.lt.s32.totalorder %s10, 3
    %p163 = pnand %p161, %p162
    %p164 = pneg %p163
    // Predicated region
    $region33: #{stack_decoder_forward.1} parent=5 // pred_check
      _
    $region34: #{stack_decoder_forward.1} parent=5 // pred_check_branch
      %166 = sbr.rel (%p163) target = $region36
    $region35: #{stack_decoder_forward.1} parent=5 // pred_region
      %s167 = ssub.s32 %s10, 1
      %p168 = scmp.lt.s32.totalorder %s15, 1
      %s169 = scalar_select %p168, %s15, 1
      %s170 = smul.addr %s169, 32
      %s171 = smul.addr %s170, 8
      %s172 = scalar_lea.vmem %s0, %s171
      %p173 = pneg %p36
      %p174 = pneg %p33
      %p175 = pneg %p57
      %p176 = pneg %p54
      %p177 = pneg %p78
      %p178 = pneg %p75
      %p179 = pneg %p99
      %p180 = pneg %p96
      %p181 = pneg %p125
      %p182 = pneg %p122
      %p183 = scmp.lt.s32.totalorder %s15, 1
      %s184 = scalar_select %p183, %s15, 1
      %s185 = smul.addr %s184, 2
      %s186 = smul.addr %s185, 8
      %s187 = scalar_lea.vmem %s4, %s186
      %p188 = scmp.lt.s32.totalorder %s15, 1
      %s189 = scalar_select %p188, %s15, 1
      %s190 = smul.addr %s189, 32
      %s191 = smul.addr %s190, 8
      %s192 = scalar_lea.vmem %s0, %s191
      %p193 = scmp.lt.s32.totalorder %s15, 1
      %s194 = scalar_select %p193, %s15, 1
      %s195 = smul.addr %s194, 2
      %s196 = smul.addr %s195, 8
      %s197 = scalar_lea.vmem %s4, %s196
      %vm198 = vcmask 97280
      %199 = vst.msk [vmem:[#allocation2] sm:$0xff] %vm198, 0.0
      %200 = vst.msk [vmem:[#allocation2 + $0x8] sm:$0xff] %vm198, 0.0
      %vm201 = vcmask 91136
      %202 = vst.msk [vmem:[#allocation2 + $0x10] sm:$0x3] %vm201, 0.0
      %203 = vst.msk [vmem:[#allocation2 + $0x18] sm:$0xff] %vm198, 0.0
      %204 = vst.msk [vmem:[#allocation2 + $0x20] sm:$0xff] %vm198, 0.0
      %205 = vst.msk [vmem:[#allocation2 + $0x28] sm:$0x3] %vm201, 0.0
      %206 = vst.msk [vmem:[#allocation2 + $0x30] sm:$0xff] %vm198, 0.0
      %207 = vst.msk [vmem:[#allocation2 + $0x38] sm:$0xff] %vm198, 0.0
      %208 = vst.msk [vmem:[#allocation2 + $0x40] sm:$0x3] %vm201, 0.0
      %209 = vst.msk [vmem:[#allocation2 + $0x48] sm:$0xff] %vm198, 0.0
      %210 = vst.msk [vmem:[#allocation2 + $0x50] sm:$0xff] %vm198, 0.0
      %211 = vst.msk [vmem:[#allocation2 + $0x58] sm:$0x3] %vm201, 0.0
      %212 = vst.msk [vmem:[#allocation2 + $0x60] sm:$0xff] %vm198, 0.0
      %213 = vst.msk [vmem:[#allocation2 + $0x68] sm:$0xff] %vm198, 0.0
      %214 = vst.msk [vmem:[#allocation2 + $0x70] sm:$0x3] %vm201, 0.0
      %215 = vst.msk [vmem:[#allocation2 + $0x78] sm:$0xff] %vm198, 0.0
      %216 = vst.msk [vmem:[#allocation2 + $0x80] sm:$0xff] %vm198, 0.0
      %217 = vst.msk [vmem:[#allocation2 + $0x88] sm:$0x3] %vm201, 0.0
      %218 = vst.msk [vmem:[#allocation2 + $0x90] sm:$0xff] %vm198, 0.0
      %219 = vst.msk [vmem:[#allocation2 + $0x98] sm:$0xff] %vm198, 0.0
      %220 = vst.msk [vmem:[#allocation2 + $0xa0] sm:$0x3] %vm201, 0.0
      %221 = vst.msk [vmem:[#allocation2 + $0xa8] sm:$0xff] %vm198, 0.0
      %222 = vst.msk [vmem:[#allocation2 + $0xb0] sm:$0xff] %vm198, 0.0
      %223 = vst.msk [vmem:[#allocation2 + $0xb8] sm:$0x3] %vm201, 0.0
      %224 = vst.msk [vmem:[#allocation2 + $0xc0] sm:$0xff] %vm198, 0.0
      %225 = vst.msk [vmem:[#allocation2 + $0xc8] sm:$0xff] %vm198, 0.0
      %226 = vst.msk [vmem:[#allocation2 + $0xd0] sm:$0x3] %vm201, 0.0
      %227 = vst.msk [vmem:[#allocation2 + $0xd8] sm:$0xff] %vm198, 0.0
      %228 = vst.msk [vmem:[#allocation2 + $0xe0] sm:$0xff] %vm198, 0.0
      %229 = vst.msk [vmem:[#allocation2 + $0xe8] sm:$0x3] %vm201, 0.0
      %230 = vst.msk [vmem:[#allocation2 + $0xf0] sm:$0xff] %vm198, 0.0
      %231 = vst.msk [vmem:[#allocation2 + $0xf8] sm:$0xff] %vm198, 0.0
      %232 = vst.msk [vmem:[#allocation2 + $0x100] sm:$0x3] %vm201, 0.0
      %233 = vst.msk [vmem:[#allocation2 + $0x108] sm:$0xff] %vm198, 0.0
      %234 = vst.msk [vmem:[#allocation2 + $0x110] sm:$0xff] %vm198, 0.0
      %235 = vst.msk [vmem:[#allocation2 + $0x118] sm:$0x3] %vm201, 0.0
      %236 = vst.msk [vmem:[#allocation2 + $0x120] sm:$0xff] %vm198, 0.0
      %237 = vst.msk [vmem:[#allocation2 + $0x128] sm:$0xff] %vm198, 0.0
      %238 = vst.msk [vmem:[#allocation2 + $0x130] sm:$0x3] %vm201, 0.0
      %239 = vst.msk [vmem:[#allocation2 + $0x138] sm:$0xff] %vm198, 0.0
      %240 = vst.msk [vmem:[#allocation2 + $0x140] sm:$0xff] %vm198, 0.0
      %241 = vst.msk [vmem:[#allocation2 + $0x148] sm:$0x3] %vm201, 0.0
      %242 = vst.msk [vmem:[#allocation2 + $0x150] sm:$0xff] %vm198, 0.0
      %243 = vst.msk [vmem:[#allocation2 + $0x158] sm:$0xff] %vm198, 0.0
      %244 = vst.msk [vmem:[#allocation2 + $0x160] sm:$0x3] %vm201, 0.0
      %245 = vst.msk [vmem:[#allocation2 + $0x168] sm:$0xff] %vm198, 0.0
      %246 = vst.msk [vmem:[#allocation2 + $0x170] sm:$0xff] %vm198, 0.0
      %247 = vst.msk [vmem:[#allocation2 + $0x178] sm:$0x3] %vm201, 0.0
      %248 = vst.msk [vmem:[#allocation2 + $0x180] sm:$0xff] %vm198, 0.0
      %249 = vst.msk [vmem:[#allocation2 + $0x188] sm:$0xff] %vm198, 0.0
      %250 = vst.msk [vmem:[#allocation2 + $0x190] sm:$0x3] %vm201, 0.0
      %251 = vst.msk [vmem:[#allocation2 + $0x198] sm:$0xff] %vm198, 0.0
      %252 = vst.msk [vmem:[#allocation2 + $0x1a0] sm:$0xff] %vm198, 0.0
      %253 = vst.msk [vmem:[#allocation2 + $0x1a8] sm:$0x3] %vm201, 0.0
      %vm254 = vcmask 64512
      %255 = vst.msk [vmem:[#allocation3] sm:$0xff] %vm254, 0.0
      %256 = vst.msk [vmem:[#allocation3 + $0x8] sm:$0xff] %vm254, 0.0
      %vm257 = vcmask 58368
      %258 = vst.msk [vmem:[#allocation3 + $0x10] sm:$0x3] %vm257, 0.0
      %259 = vst.msk [vmem:[#allocation3 + $0x18] sm:$0xff] %vm254, 0.0
      %260 = vst.msk [vmem:[#allocation3 + $0x20] sm:$0xff] %vm254, 0.0
      %261 = vst.msk [vmem:[#allocation3 + $0x28] sm:$0x3] %vm257, 0.0
      %262 = vst.msk [vmem:[#allocation3 + $0x30] sm:$0xff] %vm254, 0.0
      %263 = vst.msk [vmem:[#allocation3 + $0x38] sm:$0xff] %vm254, 0.0
      %264 = vst.msk [vmem:[#allocation3 + $0x40] sm:$0x3] %vm257, 0.0
      %265 = vst.msk [vmem:[#allocation3 + $0x48] sm:$0xff] %vm254, 0.0
      %266 = vst.msk [vmem:[#allocation3 + $0x50] sm:$0xff] %vm254, 0.0
      %267 = vst.msk [vmem:[#allocation3 + $0x58] sm:$0x3] %vm257, 0.0
      %268 = vst.msk [vmem:[#allocation3 + $0x60] sm:$0xff] %vm254, 0.0
      %269 = vst.msk [vmem:[#allocation3 + $0x68] sm:$0xff] %vm254, 0.0
      %270 = vst.msk [vmem:[#allocation3 + $0x70] sm:$0x3] %vm257, 0.0
      %271 = vst.msk [vmem:[#allocation3 + $0x78] sm:$0xff] %vm254, 0.0
      %272 = vst.msk [vmem:[#allocation3 + $0x80] sm:$0xff] %vm254, 0.0
      %273 = vst.msk [vmem:[#allocation3 + $0x88] sm:$0x3] %vm257, 0.0
      %274 = vst.msk [vmem:[#allocation3 + $0x90] sm:$0xff] %vm254, 0.0
      %275 = vst.msk [vmem:[#allocation3 + $0x98] sm:$0xff] %vm254, 0.0
      %276 = vst.msk [vmem:[#allocation3 + $0xa0] sm:$0x3] %vm257, 0.0
      %277 = vst.msk [vmem:[#allocation3 + $0xa8] sm:$0xff] %vm254, 0.0
      %278 = vst.msk [vmem:[#allocation3 + $0xb0] sm:$0xff] %vm254, 0.0
      %279 = vst.msk [vmem:[#allocation3 + $0xb8] sm:$0x3] %vm257, 0.0
      %280 = vst.msk [vmem:[#allocation3 + $0xc0] sm:$0xff] %vm254, 0.0
      %281 = vst.msk [vmem:[#allocation3 + $0xc8] sm:$0xff] %vm254, 0.0
      %282 = vst.msk [vmem:[#allocation3 + $0xd0] sm:$0x3] %vm257, 0.0
      %283 = vst.msk [vmem:[#allocation3 + $0xd8] sm:$0xff] %vm254, 0.0
      %284 = vst.msk [vmem:[#allocation3 + $0xe0] sm:$0xff] %vm254, 0.0
      %285 = vst.msk [vmem:[#allocation3 + $0xe8] sm:$0x3] %vm257, 0.0
      %286 = vst.msk [vmem:[#allocation3 + $0xf0] sm:$0xff] %vm254, 0.0
      %287 = vst.msk [vmem:[#allocation3 + $0xf8] sm:$0xff] %vm254, 0.0
      %288 = vst.msk [vmem:[#allocation3 + $0x100] sm:$0x3] %vm257, 0.0
      %289 = vst.msk [vmem:[#allocation3 + $0x108] sm:$0xff] %vm254, 0.0
      %290 = vst.msk [vmem:[#allocation3 + $0x110] sm:$0xff] %vm254, 0.0
      %291 = vst.msk [vmem:[#allocation3 + $0x118] sm:$0x3] %vm257, 0.0
      %292 = vst.msk [vmem:[#allocation3 + $0x120] sm:$0xff] %vm254, 0.0
      %293 = vst.msk [vmem:[#allocation3 + $0x128] sm:$0xff] %vm254, 0.0
      %294 = vst.msk [vmem:[#allocation3 + $0x130] sm:$0x3] %vm257, 0.0
      %295 = vst.msk [vmem:[#allocation3 + $0x138] sm:$0xff] %vm254, 0.0
      %296 = vst.msk [vmem:[#allocation3 + $0x140] sm:$0xff] %vm254, 0.0
      %297 = vst.msk [vmem:[#allocation3 + $0x148] sm:$0x3] %vm257, 0.0
      %298 = vst.msk [vmem:[#allocation3 + $0x150] sm:$0xff] %vm254, 0.0
      %299 = vst.msk [vmem:[#allocation3 + $0x158] sm:$0xff] %vm254, 0.0
      %300 = vst.msk [vmem:[#allocation3 + $0x160] sm:$0x3] %vm257, 0.0
      %301 = vst.msk [vmem:[#allocation3 + $0x168] sm:$0xff] %vm254, 0.0
      %302 = vst.msk [vmem:[#allocation3 + $0x170] sm:$0xff] %vm254, 0.0
      %303 = vst.msk [vmem:[#allocation3 + $0x178] sm:$0x3] %vm257, 0.0
      %304 = vst.msk [vmem:[#allocation3 + $0x180] sm:$0xff] %vm254, 0.0
      %305 = vst.msk [vmem:[#allocation3 + $0x188] sm:$0xff] %vm254, 0.0
      %306 = vst.msk [vmem:[#allocation3 + $0x190] sm:$0x3] %vm257, 0.0
      %307 = vst.msk [vmem:[#allocation3 + $0x198] sm:$0xff] %vm254, 0.0
      %308 = vst.msk [vmem:[#allocation3 + $0x1a0] sm:$0xff] %vm254, 0.0
      %309 = vst.msk [vmem:[#allocation3 + $0x1a8] sm:$0x3] %vm257, 0.0
      %v310 = vld [vmem:[%s192] sm:$0xff]
      %v311 = vld [vmem:[%s192 + $0x8] sm:$0xff]
      %v312 = vld [vmem:[%s192 + $0x10] sm:$0xff]
      %v313 = vld [vmem:[%s192 + $0x18] sm:$0xff]
      %v314 = vld [vmem:[%s192 + $0x20] sm:$0xff]
      %v315 = vld [vmem:[%s192 + $0x28] sm:$0xff]
      %v316 = vld [vmem:[%s192 + $0x30] sm:$0xff]
      %v317 = vld [vmem:[%s192 + $0x38] sm:$0xff]
      %v318 = vld [vmem:[%s192 + $0x40] sm:$0xff]
      %v319 = vld [vmem:[%s192 + $0x48] sm:$0xff]
      %v320 = vld [vmem:[%s192 + $0x50] sm:$0xff]
      %v321 = vld [vmem:[%s192 + $0x58] sm:$0xff]
      %v322 = vld [vmem:[%s192 + $0x60] sm:$0xff]
      %v323 = vld [vmem:[%s192 + $0x68] sm:$0xff]
      %v324 = vld [vmem:[%s192 + $0x70] sm:$0xff]
      %v325 = vld [vmem:[%s192 + $0x78] sm:$0xff]
      %v326 = vld [vmem:[%s192 + $0x80] sm:$0xff]
      %v327 = vld [vmem:[%s192 + $0x88] sm:$0xff]
      %v328 = vld [vmem:[%s192 + $0x90] sm:$0xff]
      %v329 = vld [vmem:[%s192 + $0x98] sm:$0xff]
      %v330 = vld [vmem:[%s192 + $0xa0] sm:$0xff]
      %v331 = vld [vmem:[%s192 + $0xa8] sm:$0xff]
      %v332 = vld [vmem:[%s192 + $0xb0] sm:$0xff]
      %v333 = vld [vmem:[%s192 + $0xb8] sm:$0xff]
      %v334 = vld [vmem:[%s192 + $0xc0] sm:$0xff]
      %v335 = vld [vmem:[%s192 + $0xc8] sm:$0xff]
      %v336 = vld [vmem:[%s192 + $0xd0] sm:$0xff]
      %v337 = vld [vmem:[%s192 + $0xd8] sm:$0xff]
      %v338 = vld [vmem:[%s192 + $0xe0] sm:$0xff]
      %v339 = vld [vmem:[%s192 + $0xe8] sm:$0xff]
      %v340 = vld [vmem:[%s192 + $0xf0] sm:$0xff]
      %v341 = vld [vmem:[%s192 + $0xf8] sm:$0xff]
      %s342 = scalar_lea.vmem [#allocation2], 24
      %343 = vst.msk [vmem:[%s342 + $0x1] sm:$0xff] %vm198, %v310
      %344 = vst.msk [vmem:[%s342 + $0x9] sm:$0xff] %vm198, %v311
      %345 = vst.msk [vmem:[%s342 + $0x19] sm:$0xff] %vm198, %v312
      %346 = vst.msk [vmem:[%s342 + $0x21] sm:$0xff] %vm198, %v313
      %347 = vst.msk [vmem:[%s342 + $0x31] sm:$0xff] %vm198, %v314
      %348 = vst.msk [vmem:[%s342 + $0x39] sm:$0xff] %vm198, %v315
      %349 = vst.msk [vmem:[%s342 + $0x49] sm:$0xff] %vm198, %v316
      %350 = vst.msk [vmem:[%s342 + $0x51] sm:$0xff] %vm198, %v317
      %351 = vst.msk [vmem:[%s342 + $0x61] sm:$0xff] %vm198, %v318
      %352 = vst.msk [vmem:[%s342 + $0x69] sm:$0xff] %vm198, %v319
      %353 = vst.msk [vmem:[%s342 + $0x79] sm:$0xff] %vm198, %v320
      %354 = vst.msk [vmem:[%s342 + $0x81] sm:$0xff] %vm198, %v321
      %355 = vst.msk [vmem:[%s342 + $0x91] sm:$0xff] %vm198, %v322
      %356 = vst.msk [vmem:[%s342 + $0x99] sm:$0xff] %vm198, %v323
      %357 = vst.msk [vmem:[%s342 + $0xa9] sm:$0xff] %vm198, %v324
      %358 = vst.msk [vmem:[%s342 + $0xb1] sm:$0xff] %vm198, %v325
      %359 = vst.msk [vmem:[%s342 + $0xc1] sm:$0xff] %vm198, %v326
      %360 = vst.msk [vmem:[%s342 + $0xc9] sm:$0xff] %vm198, %v327
      %361 = vst.msk [vmem:[%s342 + $0xd9] sm:$0xff] %vm198, %v328
      %362 = vst.msk [vmem:[%s342 + $0xe1] sm:$0xff] %vm198, %v329
      %363 = vst.msk [vmem:[%s342 + $0xf1] sm:$0xff] %vm198, %v330
      %364 = vst.msk [vmem:[%s342 + $0xf9] sm:$0xff] %vm198, %v331
      %365 = vst.msk [vmem:[%s342 + $0x109] sm:$0xff] %vm198, %v332
      %366 = vst.msk [vmem:[%s342 + $0x111] sm:$0xff] %vm198, %v333
      %367 = vst.msk [vmem:[%s342 + $0x121] sm:$0xff] %vm198, %v334
      %368 = vst.msk [vmem:[%s342 + $0x129] sm:$0xff] %vm198, %v335
      %369 = vst.msk [vmem:[%s342 + $0x139] sm:$0xff] %vm198, %v336
      %370 = vst.msk [vmem:[%s342 + $0x141] sm:$0xff] %vm198, %v337
      %371 = vst.msk [vmem:[%s342 + $0x151] sm:$0xff] %vm198, %v338
      %372 = vst.msk [vmem:[%s342 + $0x159] sm:$0xff] %vm198, %v339
      %373 = vst.msk [vmem:[%s342 + $0x169] sm:$0xff] %vm198, %v340
      %374 = vst.msk [vmem:[%s342 + $0x171] sm:$0xff] %vm198, %v341
      %v375 = vld [vmem:[#allocation2] sm:$0xff]
      %v376 = vld [vmem:[#allocation2 + $0x8] sm:$0xff]
      %v377 = vld [vmem:[#allocation2 + $0x18] sm:$0xff]
      %v378 = vld [vmem:[#allocation2 + $0x20] sm:$0xff]
      %v379 = vld [vmem:[#allocation2 + $0x30] sm:$0xff]
      %v380 = vld [vmem:[#allocation2 + $0x38] sm:$0xff]
      %v381 = vld [vmem:[#allocation2 + $0x48] sm:$0xff]
      %v382 = vld [vmem:[#allocation2 + $0x50] sm:$0xff]
      %v383 = vld [vmem:[#allocation2 + $0x60] sm:$0xff]
      %v384 = vld [vmem:[#allocation2 + $0x68] sm:$0xff]
      %v385 = vld [vmem:[#allocation2 + $0x78] sm:$0xff]
      %v386 = vld [vmem:[#allocation2 + $0x80] sm:$0xff]
      %v387 = vld [vmem:[#allocation2 + $0x90] sm:$0xff]
      %v388 = vld [vmem:[#allocation2 + $0x98] sm:$0xff]
      %v389 = vld [vmem:[#allocation2 + $0xa8] sm:$0xff]
      %v390 = vld [vmem:[#allocation2 + $0xb0] sm:$0xff]
      %v391 = vld [vmem:[#allocation2 + $0xc0] sm:$0xff]
      %v392 = vld [vmem:[#allocation2 + $0xc8] sm:$0xff]
      %v393 = vld [vmem:[#allocation2 + $0xd8] sm:$0xff]
      %v394 = vld [vmem:[#allocation2 + $0xe0] sm:$0xff]
      %v395 = vld [vmem:[#allocation2 + $0xf0] sm:$0xff]
      %v396 = vld [vmem:[#allocation2 + $0xf8] sm:$0xff]
      %v397 = vld [vmem:[#allocation2 + $0x108] sm:$0xff]
      %v398 = vld [vmem:[#allocation2 + $0x110] sm:$0xff]
      %v399 = vld [vmem:[#allocation2 + $0x120] sm:$0xff]
      %v400 = vld [vmem:[#allocation2 + $0x128] sm:$0xff]
      %v401 = vld [vmem:[#allocation2 + $0x138] sm:$0xff]
      %v402 = vld [vmem:[#allocation2 + $0x140] sm:$0xff]
      %v403 = vld [vmem:[#allocation2 + $0x150] sm:$0xff]
      %v404 = vld [vmem:[#allocation2 + $0x158] sm:$0xff]
      %v405 = vld [vmem:[#allocation2 + $0x168] sm:$0xff]
      %v406 = vld [vmem:[#allocation2 + $0x170] sm:$0xff]
      %v407 = vld [vmem:[#allocation2 + $0x1] sm:$0xff]
      %v408 = vld [vmem:[#allocation2 + $0x9] sm:$0xff]
      %v409 = vld [vmem:[#allocation2 + $0x19] sm:$0xff]
      %v410 = vld [vmem:[#allocation2 + $0x21] sm:$0xff]
      %v411 = vld [vmem:[#allocation2 + $0x31] sm:$0xff]
      %v412 = vld [vmem:[#allocation2 + $0x39] sm:$0xff]
      %v413 = vld [vmem:[#allocation2 + $0x49] sm:$0xff]
      %v414 = vld [vmem:[#allocation2 + $0x51] sm:$0xff]
      %v415 = vld [vmem:[#allocation2 + $0x61] sm:$0xff]
      %v416 = vld [vmem:[#allocation2 + $0x69] sm:$0xff]
      %v417 = vld [vmem:[#allocation2 + $0x79] sm:$0xff]
      %v418 = vld [vmem:[#allocation2 + $0x81] sm:$0xff]
      %v419 = vld [vmem:[#allocation2 + $0x91] sm:$0xff]
      %v420 = vld [vmem:[#allocation2 + $0x99] sm:$0xff]
      %v421 = vld [vmem:[#allocation2 + $0xa9] sm:$0xff]
      %v422 = vld [vmem:[#allocation2 + $0xb1] sm:$0xff]
      %v423 = vld [vmem:[#allocation2 + $0xc1] sm:$0xff]
      %v424 = vld [vmem:[#allocation2 + $0xc9] sm:$0xff]
      %v425 = vld [vmem:[#allocation2 + $0xd9] sm:$0xff]
      %v426 = vld [vmem:[#allocation2 + $0xe1] sm:$0xff]
      %v427 = vld [vmem:[#allocation2 + $0xf1] sm:$0xff]
      %v428 = vld [vmem:[#allocation2 + $0xf9] sm:$0xff]
      %v429 = vld [vmem:[#allocation2 + $0x109] sm:$0xff]
      %v430 = vld [vmem:[#allocation2 + $0x111] sm:$0xff]
      %v431 = vld [vmem:[#allocation2 + $0x121] sm:$0xff]
      %v432 = vld [vmem:[#allocation2 + $0x129] sm:$0xff]
      %v433 = vld [vmem:[#allocation2 + $0x139] sm:$0xff]
      %v434 = vld [vmem:[#allocation2 + $0x141] sm:$0xff]
      %v435 = vld [vmem:[#allocation2 + $0x151] sm:$0xff]
      %v436 = vld [vmem:[#allocation2 + $0x159] sm:$0xff]
      %v437 = vld [vmem:[#allocation2 + $0x169] sm:$0xff]
      %v438 = vld [vmem:[#allocation2 + $0x171] sm:$0xff]
      %v439 = vld [vmem:[#allocation2 + $0x2] sm:$0xff]
      %v440 = vld [vmem:[#allocation2 + $0xa] sm:$0xff]
      %v441 = vld [vmem:[#allocation2 + $0x1a] sm:$0xff]
      %v442 = vld [vmem:[#allocation2 + $0x22] sm:$0xff]
      %v443 = vld [vmem:[#allocation2 + $0x32] sm:$0xff]
      %v444 = vld [vmem:[#allocation2 + $0x3a] sm:$0xff]
      %v445 = vld [vmem:[#allocation2 + $0x4a] sm:$0xff]
      %v446 = vld [vmem:[#allocation2 + $0x52] sm:$0xff]
      %v447 = vld [vmem:[#allocation2 + $0x62] sm:$0xff]
      %v448 = vld [vmem:[#allocation2 + $0x6a] sm:$0xff]
      %v449 = vld [vmem:[#allocation2 + $0x7a] sm:$0xff]
      %v450 = vld [vmem:[#allocation2 + $0x82] sm:$0xff]
      %v451 = vld [vmem:[#allocation2 + $0x92] sm:$0xff]
      %v452 = vld [vmem:[#allocation2 + $0x9a] sm:$0xff]
      %v453 = vld [vmem:[#allocation2 + $0xaa] sm:$0xff]
      %v454 = vld [vmem:[#allocation2 + $0xb2] sm:$0xff]
      %v455 = vld [vmem:[#allocation2 + $0xc2] sm:$0xff]
      %v456 = vld [vmem:[#allocation2 + $0xca] sm:$0xff]
      %v457 = vld [vmem:[#allocation2 + $0xda] sm:$0xff]
      %v458 = vld [vmem:[#allocation2 + $0xe2] sm:$0xff]
      %v459 = vld [vmem:[#allocation2 + $0xf2] sm:$0xff]
      %v460 = vld [vmem:[#allocation2 + $0xfa] sm:$0xff]
      %v461 = vld [vmem:[#allocation2 + $0x10a] sm:$0xff]
      %v462 = vld [vmem:[#allocation2 + $0x112] sm:$0xff]
      %v463 = vld [vmem:[#allocation2 + $0x122] sm:$0xff]
      %v464 = vld [vmem:[#allocation2 + $0x12a] sm:$0xff]
      %v465 = vld [vmem:[#allocation2 + $0x13a] sm:$0xff]
      %v466 = vld [vmem:[#allocation2 + $0x142] sm:$0xff]
      %v467 = vld [vmem:[#allocation2 + $0x152] sm:$0xff]
      %v468 = vld [vmem:[#allocation2 + $0x15a] sm:$0xff]
      %v469 = vld [vmem:[#allocation2 + $0x16a] sm:$0xff]
      %v470 = vld [vmem:[#allocation2 + $0x172] sm:$0xff]
      %v471 = vld [vmem:[%s342] sm:$0xff]
      %v472 = vld [vmem:[%s342 + $0x8] sm:$0xff]
      %v473 = vld [vmem:[%s342 + $0x18] sm:$0xff]
      %v474 = vld [vmem:[%s342 + $0x20] sm:$0xff]
      %v475 = vld [vmem:[%s342 + $0x30] sm:$0xff]
      %v476 = vld [vmem:[%s342 + $0x38] sm:$0xff]
      %v477 = vld [vmem:[%s342 + $0x48] sm:$0xff]
      %v478 = vld [vmem:[%s342 + $0x50] sm:$0xff]
      %v479 = vld [vmem:[%s342 + $0x60] sm:$0xff]
      %v480 = vld [vmem:[%s342 + $0x68] sm:$0xff]
      %v481 = vld [vmem:[%s342 + $0x78] sm:$0xff]
      %v482 = vld [vmem:[%s342 + $0x80] sm:$0xff]
      %v483 = vld [vmem:[%s342 + $0x90] sm:$0xff]
      %v484 = vld [vmem:[%s342 + $0x98] sm:$0xff]
      %v485 = vld [vmem:[%s342 + $0xa8] sm:$0xff]
      %v486 = vld [vmem:[%s342 + $0xb0] sm:$0xff]
      %v487 = vld [vmem:[%s342 + $0xc0] sm:$0xff]
      %v488 = vld [vmem:[%s342 + $0xc8] sm:$0xff]
      %v489 = vld [vmem:[%s342 + $0xd8] sm:$0xff]
      %v490 = vld [vmem:[%s342 + $0xe0] sm:$0xff]
      %v491 = vld [vmem:[%s342 + $0xf0] sm:$0xff]
      %v492 = vld [vmem:[%s342 + $0xf8] sm:$0xff]
      %v493 = vld [vmem:[%s342 + $0x108] sm:$0xff]
      %v494 = vld [vmem:[%s342 + $0x110] sm:$0xff]
      %v495 = vld [vmem:[%s342 + $0x120] sm:$0xff]
      %v496 = vld [vmem:[%s342 + $0x128] sm:$0xff]
      %v497 = vld [vmem:[%s342 + $0x138] sm:$0xff]
      %v498 = vld [vmem:[%s342 + $0x140] sm:$0xff]
      %v499 = vld [vmem:[%s342 + $0x150] sm:$0xff]
      %v500 = vld [vmem:[%s342 + $0x158] sm:$0xff]
      %v501 = vld [vmem:[%s342 + $0x168] sm:$0xff]
      %v502 = vld [vmem:[%s342 + $0x170] sm:$0xff]
      %v503 = vld [vmem:[%s342 + $0x1] sm:$0xff]
      %v504 = vld [vmem:[%s342 + $0x9] sm:$0xff]
      %v505 = vld [vmem:[%s342 + $0x19] sm:$0xff]
      %v506 = vld [vmem:[%s342 + $0x21] sm:$0xff]
      %v507 = vld [vmem:[%s342 + $0x31] sm:$0xff]
      %v508 = vld [vmem:[%s342 + $0x39] sm:$0xff]
      %v509 = vld [vmem:[%s342 + $0x49] sm:$0xff]
      %v510 = vld [vmem:[%s342 + $0x51] sm:$0xff]
      %v511 = vld [vmem:[%s342 + $0x61] sm:$0xff]
      %v512 = vld [vmem:[%s342 + $0x69] sm:$0xff]
      %v513 = vld [vmem:[%s342 + $0x79] sm:$0xff]
      %v514 = vld [vmem:[%s342 + $0x81] sm:$0xff]
      %v515 = vld [vmem:[%s342 + $0x91] sm:$0xff]
      %v516 = vld [vmem:[%s342 + $0x99] sm:$0xff]
      %v517 = vld [vmem:[%s342 + $0xa9] sm:$0xff]
      %v518 = vld [vmem:[%s342 + $0xb1] sm:$0xff]
      %v519 = vld [vmem:[%s342 + $0xc1] sm:$0xff]
      %v520 = vld [vmem:[%s342 + $0xc9] sm:$0xff]
      %v521 = vld [vmem:[%s342 + $0xd9] sm:$0xff]
      %v522 = vld [vmem:[%s342 + $0xe1] sm:$0xff]
      %v523 = vld [vmem:[%s342 + $0xf1] sm:$0xff]
      %v524 = vld [vmem:[%s342 + $0xf9] sm:$0xff]
      %v525 = vld [vmem:[%s342 + $0x109] sm:$0xff]
      %v526 = vld [vmem:[%s342 + $0x111] sm:$0xff]
      %v527 = vld [vmem:[%s342 + $0x121] sm:$0xff]
      %v528 = vld [vmem:[%s342 + $0x129] sm:$0xff]
      %v529 = vld [vmem:[%s342 + $0x139] sm:$0xff]
      %v530 = vld [vmem:[%s342 + $0x141] sm:$0xff]
      %v531 = vld [vmem:[%s342 + $0x151] sm:$0xff]
      %v532 = vld [vmem:[%s342 + $0x159] sm:$0xff]
      %v533 = vld [vmem:[%s342 + $0x169] sm:$0xff]
      %v534 = vld [vmem:[%s342 + $0x171] sm:$0xff]
      %v535 = vld [vmem:[%s342 + $0x2] sm:$0xff]
      %v536 = vld [vmem:[%s342 + $0xa] sm:$0xff]
      %v537 = vld [vmem:[%s342 + $0x1a] sm:$0xff]
      %v538 = vld [vmem:[%s342 + $0x22] sm:$0xff]
      %v539 = vld [vmem:[%s342 + $0x32] sm:$0xff]
      %v540 = vld [vmem:[%s342 + $0x3a] sm:$0xff]
      %v541 = vld [vmem:[%s342 + $0x4a] sm:$0xff]
      %v542 = vld [vmem:[%s342 + $0x52] sm:$0xff]
      %v543 = vld [vmem:[%s342 + $0x62] sm:$0xff]
      %v544 = vld [vmem:[%s342 + $0x6a] sm:$0xff]
      %v545 = vld [vmem:[%s342 + $0x7a] sm:$0xff]
      %v546 = vld [vmem:[%s342 + $0x82] sm:$0xff]
      %v547 = vld [vmem:[%s342 + $0x92] sm:$0xff]
      %v548 = vld [vmem:[%s342 + $0x9a] sm:$0xff]
      %v549 = vld [vmem:[%s342 + $0xaa] sm:$0xff]
      %v550 = vld [vmem:[%s342 + $0xb2] sm:$0xff]
      %v551 = vld [vmem:[%s342 + $0xc2] sm:$0xff]
      %v552 = vld [vmem:[%s342 + $0xca] sm:$0xff]
      %v553 = vld [vmem:[%s342 + $0xda] sm:$0xff]
      %v554 = vld [vmem:[%s342 + $0xe2] sm:$0xff]
      %v555 = vld [vmem:[%s342 + $0xf2] sm:$0xff]
      %v556 = vld [vmem:[%s342 + $0xfa] sm:$0xff]
      %v557 = vld [vmem:[%s342 + $0x10a] sm:$0xff]
      %v558 = vld [vmem:[%s342 + $0x112] sm:$0xff]
      %v559 = vld [vmem:[%s342 + $0x122] sm:$0xff]
      %v560 = vld [vmem:[%s342 + $0x12a] sm:$0xff]
      %v561 = vld [vmem:[%s342 + $0x13a] sm:$0xff]
      %v562 = vld [vmem:[%s342 + $0x142] sm:$0xff]
      %v563 = vld [vmem:[%s342 + $0x152] sm:$0xff]
      %v564 = vld [vmem:[%s342 + $0x15a] sm:$0xff]
      %v565 = vld [vmem:[%s342 + $0x16a] sm:$0xff]
      %v566 = vld [vmem:[%s342 + $0x172] sm:$0xff]
      %s567 = scalar_lea.vmem [#allocation2], 48
      %v568 = vld [vmem:[%s567] sm:$0xff]
      %v569 = vld [vmem:[%s567 + $0x8] sm:$0xff]
      %v570 = vld [vmem:[%s567 + $0x18] sm:$0xff]
      %v571 = vld [vmem:[%s567 + $0x20] sm:$0xff]
      %v572 = vld [vmem:[%s567 + $0x30] sm:$0xff]
      %v573 = vld [vmem:[%s567 + $0x38] sm:$0xff]
      %v574 = vld [vmem:[%s567 + $0x48] sm:$0xff]
      %v575 = vld [vmem:[%s567 + $0x50] sm:$0xff]
      %v576 = vld [vmem:[%s567 + $0x60] sm:$0xff]
      %v577 = vld [vmem:[%s567 + $0x68] sm:$0xff]
      %v578 = vld [vmem:[%s567 + $0x78] sm:$0xff]
      %v579 = vld [vmem:[%s567 + $0x80] sm:$0xff]
      %v580 = vld [vmem:[%s567 + $0x90] sm:$0xff]
      %v581 = vld [vmem:[%s567 + $0x98] sm:$0xff]
      %v582 = vld [vmem:[%s567 + $0xa8] sm:$0xff]
      %v583 = vld [vmem:[%s567 + $0xb0] sm:$0xff]
      %v584 = vld [vmem:[%s567 + $0xc0] sm:$0xff]
      %v585 = vld [vmem:[%s567 + $0xc8] sm:$0xff]
      %v586 = vld [vmem:[%s567 + $0xd8] sm:$0xff]
      %v587 = vld [vmem:[%s567 + $0xe0] sm:$0xff]
      %v588 = vld [vmem:[%s567 + $0xf0] sm:$0xff]
      %v589 = vld [vmem:[%s567 + $0xf8] sm:$0xff]
      %v590 = vld [vmem:[%s567 + $0x108] sm:$0xff]
      %v591 = vld [vmem:[%s567 + $0x110] sm:$0xff]
      %v592 = vld [vmem:[%s567 + $0x120] sm:$0xff]
      %v593 = vld [vmem:[%s567 + $0x128] sm:$0xff]
      %v594 = vld [vmem:[%s567 + $0x138] sm:$0xff]
      %v595 = vld [vmem:[%s567 + $0x140] sm:$0xff]
      %v596 = vld [vmem:[%s567 + $0x150] sm:$0xff]
      %v597 = vld [vmem:[%s567 + $0x158] sm:$0xff]
      %v598 = vld [vmem:[%s567 + $0x168] sm:$0xff]
      %v599 = vld [vmem:[%s567 + $0x170] sm:$0xff]
      %v600 = vld [vmem:[%s567 + $0x1] sm:$0xff]
      %v601 = vld [vmem:[%s567 + $0x9] sm:$0xff]
      %v602 = vld [vmem:[%s567 + $0x19] sm:$0xff]
      %v603 = vld [vmem:[%s567 + $0x21] sm:$0xff]
      %v604 = vld [vmem:[%s567 + $0x31] sm:$0xff]
      %v605 = vld [vmem:[%s567 + $0x39] sm:$0xff]
      %v606 = vld [vmem:[%s567 + $0x49] sm:$0xff]
      %v607 = vld [vmem:[%s567 + $0x51] sm:$0xff]
      %v608 = vld [vmem:[%s567 + $0x61] sm:$0xff]
      %v609 = vld [vmem:[%s567 + $0x69] sm:$0xff]
      %v610 = vld [vmem:[%s567 + $0x79] sm:$0xff]
      %v611 = vld [vmem:[%s567 + $0x81] sm:$0xff]
      %v612 = vld [vmem:[%s567 + $0x91] sm:$0xff]
      %v613 = vld [vmem:[%s567 + $0x99] sm:$0xff]
      %v614 = vld [vmem:[%s567 + $0xa9] sm:$0xff]
      %v615 = vld [vmem:[%s567 + $0xb1] sm:$0xff]
      %v616 = vld [vmem:[%s567 + $0xc1] sm:$0xff]
      %v617 = vld [vmem:[%s567 + $0xc9] sm:$0xff]
      %v618 = vld [vmem:[%s567 + $0xd9] sm:$0xff]
      %v619 = vld [vmem:[%s567 + $0xe1] sm:$0xff]
      %v620 = vld [vmem:[%s567 + $0xf1] sm:$0xff]
      %v621 = vld [vmem:[%s567 + $0xf9] sm:$0xff]
      %v622 = vld [vmem:[%s567 + $0x109] sm:$0xff]
      %v623 = vld [vmem:[%s567 + $0x111] sm:$0xff]
      %v624 = vld [vmem:[%s567 + $0x121] sm:$0xff]
      %v625 = vld [vmem:[%s567 + $0x129] sm:$0xff]
      %v626 = vld [vmem:[%s567 + $0x139] sm:$0xff]
      %v627 = vld [vmem:[%s567 + $0x141] sm:$0xff]
      %v628 = vld [vmem:[%s567 + $0x151] sm:$0xff]
      %v629 = vld [vmem:[%s567 + $0x159] sm:$0xff]
      %v630 = vld [vmem:[%s567 + $0x169] sm:$0xff]
      %v631 = vld [vmem:[%s567 + $0x171] sm:$0xff]
      %v632 = vld [vmem:[%s567 + $0x2] sm:$0xff]
      %v633 = vld [vmem:[%s567 + $0xa] sm:$0xff]
      %v634 = vld [vmem:[%s567 + $0x1a] sm:$0xff]
      %v635 = vld [vmem:[%s567 + $0x22] sm:$0xff]
      %v636 = vld [vmem:[%s567 + $0x32] sm:$0xff]
      %v637 = vld [vmem:[%s567 + $0x3a] sm:$0xff]
      %v638 = vld [vmem:[%s567 + $0x4a] sm:$0xff]
      %v639 = vld [vmem:[%s567 + $0x52] sm:$0xff]
      %v640 = vld [vmem:[%s567 + $0x62] sm:$0xff]
      %v641 = vld [vmem:[%s567 + $0x6a] sm:$0xff]
      %v642 = vld [vmem:[%s567 + $0x7a] sm:$0xff]
      %v643 = vld [vmem:[%s567 + $0x82] sm:$0xff]
      %v644 = vld [vmem:[%s567 + $0x92] sm:$0xff]
      %v645 = vld [vmem:[%s567 + $0x9a] sm:$0xff]
      %v646 = vld [vmem:[%s567 + $0xaa] sm:$0xff]
      %v647 = vld [vmem:[%s567 + $0xb2] sm:$0xff]
      %v648 = vld [vmem:[%s567 + $0xc2] sm:$0xff]
      %v649 = vld [vmem:[%s567 + $0xca] sm:$0xff]
      %v650 = vld [vmem:[%s567 + $0xda] sm:$0xff]
      %v651 = vld [vmem:[%s567 + $0xe2] sm:$0xff]
      %v652 = vld [vmem:[%s567 + $0xf2] sm:$0xff]
      %v653 = vld [vmem:[%s567 + $0xfa] sm:$0xff]
      %v654 = vld [vmem:[%s567 + $0x10a] sm:$0xff]
      %v655 = vld [vmem:[%s567 + $0x112] sm:$0xff]
      %v656 = vld [vmem:[%s567 + $0x122] sm:$0xff]
      %v657 = vld [vmem:[%s567 + $0x12a] sm:$0xff]
      %v658 = vld [vmem:[%s567 + $0x13a] sm:$0xff]
      %v659 = vld [vmem:[%s567 + $0x142] sm:$0xff]
      %v660 = vld [vmem:[%s567 + $0x152] sm:$0xff]
      %v661 = vld [vmem:[%s567 + $0x15a] sm:$0xff]
      %v662 = vld [vmem:[%s567 + $0x16a] sm:$0xff]
      %v663 = vld [vmem:[%s567 + $0x172] sm:$0xff]
      %696 = vrot.lane.b32.xlu0 %v407, 12
      %v697 = vpop.permute.xlu0 %696
      %698 = vrot.lane.b32.xlu0 %v408, 12
      %v699 = vpop.permute.xlu0 %698
      %700 = vrot.lane.b32.xlu0 %v409, 12
      %v701 = vpop.permute.xlu0 %700
      %702 = vrot.lane.b32.xlu0 %v410, 12
      %v703 = vpop.permute.xlu0 %702
      %704 = vrot.lane.b32.xlu0 %v411, 12
      %v705 = vpop.permute.xlu0 %704
      %706 = vrot.lane.b32.xlu0 %v412, 12
      %v707 = vpop.permute.xlu0 %706
      %708 = vrot.lane.b32.xlu0 %v413, 12
      %v709 = vpop.permute.xlu0 %708
      %710 = vrot.lane.b32.xlu0 %v414, 12
      %v711 = vpop.permute.xlu0 %710
      %712 = vrot.lane.b32.xlu0 %v415, 12
      %v713 = vpop.permute.xlu0 %712
      %714 = vrot.lane.b32.xlu0 %v416, 12
      %v715 = vpop.permute.xlu0 %714
      %716 = vrot.lane.b32.xlu0 %v417, 12
      %v717 = vpop.permute.xlu0 %716
      %718 = vrot.lane.b32.xlu0 %v418, 12
      %v719 = vpop.permute.xlu0 %718
      %720 = vrot.lane.b32.xlu0 %v419, 12
      %v721 = vpop.permute.xlu0 %720
      %722 = vrot.lane.b32.xlu0 %v420, 12
      %v723 = vpop.permute.xlu0 %722
      %724 = vrot.lane.b32.xlu0 %v421, 12
      %v725 = vpop.permute.xlu0 %724
      %726 = vrot.lane.b32.xlu0 %v422, 12
      %v727 = vpop.permute.xlu0 %726
      %728 = vrot.lane.b32.xlu0 %v423, 12
      %v729 = vpop.permute.xlu0 %728
      %730 = vrot.lane.b32.xlu0 %v424, 12
      %v731 = vpop.permute.xlu0 %730
      %732 = vrot.lane.b32.xlu0 %v425, 12
      %v733 = vpop.permute.xlu0 %732
      %734 = vrot.lane.b32.xlu0 %v426, 12
      %v735 = vpop.permute.xlu0 %734
      %736 = vrot.lane.b32.xlu0 %v427, 12
      %v737 = vpop.permute.xlu0 %736
      %738 = vrot.lane.b32.xlu0 %v428, 12
      %v739 = vpop.permute.xlu0 %738
      %740 = vrot.lane.b32.xlu0 %v429, 12
      %v741 = vpop.permute.xlu0 %740
      %742 = vrot.lane.b32.xlu0 %v430, 12
      %v743 = vpop.permute.xlu0 %742
      %744 = vrot.lane.b32.xlu0 %v431, 12
      %v745 = vpop.permute.xlu0 %744
      %746 = vrot.lane.b32.xlu0 %v432, 12
      %v747 = vpop.permute.xlu0 %746
      %748 = vrot.lane.b32.xlu0 %v433, 12
      %v749 = vpop.permute.xlu0 %748
      %750 = vrot.lane.b32.xlu0 %v434, 12
      %v751 = vpop.permute.xlu0 %750
      %752 = vrot.lane.b32.xlu0 %v435, 12
      %v753 = vpop.permute.xlu0 %752
      %754 = vrot.lane.b32.xlu0 %v436, 12
      %v755 = vpop.permute.xlu0 %754
      %756 = vrot.lane.b32.xlu0 %v437, 12
      %v757 = vpop.permute.xlu0 %756
      %758 = vrot.lane.b32.xlu0 %v438, 12
      %v759 = vpop.permute.xlu0 %758
      %824 = vrot.lane.b32.xlu0 %v439, 24
      %v825 = vpop.permute.xlu0 %824
      %826 = vrot.lane.b32.xlu0 %v440, 24
      %v827 = vpop.permute.xlu0 %826
      %828 = vrot.lane.b32.xlu0 %v441, 24
      %v829 = vpop.permute.xlu0 %828
      %830 = vrot.lane.b32.xlu0 %v442, 24
      %v831 = vpop.permute.xlu0 %830
      %832 = vrot.lane.b32.xlu0 %v443, 24
      %v833 = vpop.permute.xlu0 %832
      %834 = vrot.lane.b32.xlu0 %v444, 24
      %v835 = vpop.permute.xlu0 %834
      %836 = vrot.lane.b32.xlu0 %v445, 24
      %v837 = vpop.permute.xlu0 %836
      %838 = vrot.lane.b32.xlu0 %v446, 24
      %v839 = vpop.permute.xlu0 %838
      %840 = vrot.lane.b32.xlu0 %v447, 24
      %v841 = vpop.permute.xlu0 %840
      %842 = vrot.lane.b32.xlu0 %v448, 24
      %v843 = vpop.permute.xlu0 %842
      %844 = vrot.lane.b32.xlu0 %v449, 24
      %v845 = vpop.permute.xlu0 %844
      %846 = vrot.lane.b32.xlu0 %v450, 24
      %v847 = vpop.permute.xlu0 %846
      %848 = vrot.lane.b32.xlu0 %v451, 24
      %v849 = vpop.permute.xlu0 %848
      %850 = vrot.lane.b32.xlu0 %v452, 24
      %v851 = vpop.permute.xlu0 %850
      %852 = vrot.lane.b32.xlu0 %v453, 24
      %v853 = vpop.permute.xlu0 %852
      %854 = vrot.lane.b32.xlu0 %v454, 24
      %v855 = vpop.permute.xlu0 %854
      %856 = vrot.lane.b32.xlu0 %v455, 24
      %v857 = vpop.permute.xlu0 %856
      %858 = vrot.lane.b32.xlu0 %v456, 24
      %v859 = vpop.permute.xlu0 %858
      %860 = vrot.lane.b32.xlu0 %v457, 24
      %v861 = vpop.permute.xlu0 %860
      %862 = vrot.lane.b32.xlu0 %v458, 24
      %v863 = vpop.permute.xlu0 %862
      %864 = vrot.lane.b32.xlu0 %v459, 24
      %v865 = vpop.permute.xlu0 %864
      %866 = vrot.lane.b32.xlu0 %v460, 24
      %v867 = vpop.permute.xlu0 %866
      %868 = vrot.lane.b32.xlu0 %v461, 24
      %v869 = vpop.permute.xlu0 %868
      %870 = vrot.lane.b32.xlu0 %v462, 24
      %v871 = vpop.permute.xlu0 %870
      %872 = vrot.lane.b32.xlu0 %v463, 24
      %v873 = vpop.permute.xlu0 %872
      %874 = vrot.lane.b32.xlu0 %v464, 24
      %v875 = vpop.permute.xlu0 %874
      %876 = vrot.lane.b32.xlu0 %v465, 24
      %v877 = vpop.permute.xlu0 %876
      %878 = vrot.lane.b32.xlu0 %v466, 24
      %v879 = vpop.permute.xlu0 %878
      %880 = vrot.lane.b32.xlu0 %v467, 24
      %v881 = vpop.permute.xlu0 %880
      %882 = vrot.lane.b32.xlu0 %v468, 24
      %v883 = vpop.permute.xlu0 %882
      %884 = vrot.lane.b32.xlu0 %v469, 24
      %v885 = vpop.permute.xlu0 %884
      %886 = vrot.lane.b32.xlu0 %v470, 24
      %v887 = vpop.permute.xlu0 %886
      %952 = vrot.lane.b32.xlu0 %v471, 36
      %v953 = vpop.permute.xlu0 %952
      %954 = vrot.lane.b32.xlu0 %v472, 36
      %v955 = vpop.permute.xlu0 %954
      %956 = vrot.lane.b32.xlu0 %v473, 36
      %v957 = vpop.permute.xlu0 %956
      %958 = vrot.lane.b32.xlu0 %v474, 36
      %v959 = vpop.permute.xlu0 %958
      %960 = vrot.lane.b32.xlu0 %v475, 36
      %v961 = vpop.permute.xlu0 %960
      %962 = vrot.lane.b32.xlu0 %v476, 36
      %v963 = vpop.permute.xlu0 %962
      %964 = vrot.lane.b32.xlu0 %v477, 36
      %v965 = vpop.permute.xlu0 %964
      %966 = vrot.lane.b32.xlu0 %v478, 36
      %v967 = vpop.permute.xlu0 %966
      %968 = vrot.lane.b32.xlu0 %v479, 36
      %v969 = vpop.permute.xlu0 %968
      %970 = vrot.lane.b32.xlu0 %v480, 36
      %v971 = vpop.permute.xlu0 %970
      %972 = vrot.lane.b32.xlu0 %v481, 36
      %v973 = vpop.permute.xlu0 %972
      %974 = vrot.lane.b32.xlu0 %v482, 36
      %v975 = vpop.permute.xlu0 %974
      %976 = vrot.lane.b32.xlu0 %v483, 36
      %v977 = vpop.permute.xlu0 %976
      %978 = vrot.lane.b32.xlu0 %v484, 36
      %v979 = vpop.permute.xlu0 %978
      %980 = vrot.lane.b32.xlu0 %v485, 36
      %v981 = vpop.permute.xlu0 %980
      %982 = vrot.lane.b32.xlu0 %v486, 36
      %v983 = vpop.permute.xlu0 %982
      %984 = vrot.lane.b32.xlu0 %v487, 36
      %v985 = vpop.permute.xlu0 %984
      %986 = vrot.lane.b32.xlu0 %v488, 36
      %v987 = vpop.permute.xlu0 %986
      %988 = vrot.lane.b32.xlu0 %v489, 36
      %v989 = vpop.permute.xlu0 %988
      %990 = vrot.lane.b32.xlu0 %v490, 36
      %v991 = vpop.permute.xlu0 %990
      %992 = vrot.lane.b32.xlu0 %v491, 36
      %v993 = vpop.permute.xlu0 %992
      %994 = vrot.lane.b32.xlu0 %v492, 36
      %v995 = vpop.permute.xlu0 %994
      %996 = vrot.lane.b32.xlu0 %v493, 36
      %v997 = vpop.permute.xlu0 %996
      %998 = vrot.lane.b32.xlu0 %v494, 36
      %v999 = vpop.permute.xlu0 %998
      %1000 = vrot.lane.b32.xlu0 %v495, 36
      %v1001 = vpop.permute.xlu0 %1000
      %1002 = vrot.lane.b32.xlu0 %v496, 36
      %v1003 = vpop.permute.xlu0 %1002
      %1004 = vrot.lane.b32.xlu0 %v497, 36
      %v1005 = vpop.permute.xlu0 %1004
      %1006 = vrot.lane.b32.xlu0 %v498, 36
      %v1007 = vpop.permute.xlu0 %1006
      %1008 = vrot.lane.b32.xlu0 %v499, 36
      %v1009 = vpop.permute.xlu0 %1008
      %1010 = vrot.lane.b32.xlu0 %v500, 36
      %v1011 = vpop.permute.xlu0 %1010
      %1012 = vrot.lane.b32.xlu0 %v501, 36
      %v1013 = vpop.permute.xlu0 %1012
      %1014 = vrot.lane.b32.xlu0 %v502, 36
      %v1015 = vpop.permute.xlu0 %1014
      %1080 = vrot.lane.b32.xlu0 %v503, 48
      %v1081 = vpop.permute.xlu0 %1080
      %1082 = vrot.lane.b32.xlu0 %v504, 48
      %v1083 = vpop.permute.xlu0 %1082
      %1084 = vrot.lane.b32.xlu0 %v505, 48
      %v1085 = vpop.permute.xlu0 %1084
      %1086 = vrot.lane.b32.xlu0 %v506, 48
      %v1087 = vpop.permute.xlu0 %1086
      %1088 = vrot.lane.b32.xlu0 %v507, 48
      %v1089 = vpop.permute.xlu0 %1088
      %1090 = vrot.lane.b32.xlu0 %v508, 48
      %v1091 = vpop.permute.xlu0 %1090
      %1092 = vrot.lane.b32.xlu0 %v509, 48
      %v1093 = vpop.permute.xlu0 %1092
      %1094 = vrot.lane.b32.xlu0 %v510, 48
      %v1095 = vpop.permute.xlu0 %1094
      %1096 = vrot.lane.b32.xlu0 %v511, 48
      %v1097 = vpop.permute.xlu0 %1096
      %1098 = vrot.lane.b32.xlu0 %v512, 48
      %v1099 = vpop.permute.xlu0 %1098
      %1100 = vrot.lane.b32.xlu0 %v513, 48
      %v1101 = vpop.permute.xlu0 %1100
      %1102 = vrot.lane.b32.xlu0 %v514, 48
      %v1103 = vpop.permute.xlu0 %1102
      %1104 = vrot.lane.b32.xlu0 %v515, 48
      %v1105 = vpop.permute.xlu0 %1104
      %1106 = vrot.lane.b32.xlu0 %v516, 48
      %v1107 = vpop.permute.xlu0 %1106
      %1108 = vrot.lane.b32.xlu0 %v517, 48
      %v1109 = vpop.permute.xlu0 %1108
      %1110 = vrot.lane.b32.xlu0 %v518, 48
      %v1111 = vpop.permute.xlu0 %1110
      %1112 = vrot.lane.b32.xlu0 %v519, 48
      %v1113 = vpop.permute.xlu0 %1112
      %1114 = vrot.lane.b32.xlu0 %v520, 48
      %v1115 = vpop.permute.xlu0 %1114
      %1116 = vrot.lane.b32.xlu0 %v521, 48
      %v1117 = vpop.permute.xlu0 %1116
      %1118 = vrot.lane.b32.xlu0 %v522, 48
      %v1119 = vpop.permute.xlu0 %1118
      %1120 = vrot.lane.b32.xlu0 %v523, 48
      %v1121 = vpop.permute.xlu0 %1120
      %1122 = vrot.lane.b32.xlu0 %v524, 48
      %v1123 = vpop.permute.xlu0 %1122
      %1124 = vrot.lane.b32.xlu0 %v525, 48
      %v1125 = vpop.permute.xlu0 %1124
      %1126 = vrot.lane.b32.xlu0 %v526, 48
      %v1127 = vpop.permute.xlu0 %1126
      %1128 = vrot.lane.b32.xlu0 %v527, 48
      %v1129 = vpop.permute.xlu0 %1128
      %1130 = vrot.lane.b32.xlu0 %v528, 48
      %v1131 = vpop.permute.xlu0 %1130
      %1132 = vrot.lane.b32.xlu0 %v529, 48
      %v1133 = vpop.permute.xlu0 %1132
      %1134 = vrot.lane.b32.xlu0 %v530, 48
      %v1135 = vpop.permute.xlu0 %1134
      %1136 = vrot.lane.b32.xlu0 %v531, 48
      %v1137 = vpop.permute.xlu0 %1136
      %1138 = vrot.lane.b32.xlu0 %v532, 48
      %v1139 = vpop.permute.xlu0 %1138
      %1140 = vrot.lane.b32.xlu0 %v533, 48
      %v1141 = vpop.permute.xlu0 %1140
      %1142 = vrot.lane.b32.xlu0 %v534, 48
      %v1143 = vpop.permute.xlu0 %1142
      %1208 = vrot.lane.b32.xlu0 %v535, 60
      %v1209 = vpop.permute.xlu0 %1208
      %1210 = vrot.lane.b32.xlu0 %v536, 60
      %v1211 = vpop.permute.xlu0 %1210
      %1212 = vrot.lane.b32.xlu0 %v537, 60
      %v1213 = vpop.permute.xlu0 %1212
      %1214 = vrot.lane.b32.xlu0 %v538, 60
      %v1215 = vpop.permute.xlu0 %1214
      %1216 = vrot.lane.b32.xlu0 %v539, 60
      %v1217 = vpop.permute.xlu0 %1216
      %1218 = vrot.lane.b32.xlu0 %v540, 60
      %v1219 = vpop.permute.xlu0 %1218
      %1220 = vrot.lane.b32.xlu0 %v541, 60
      %v1221 = vpop.permute.xlu0 %1220
      %1222 = vrot.lane.b32.xlu0 %v542, 60
      %v1223 = vpop.permute.xlu0 %1222
      %1224 = vrot.lane.b32.xlu0 %v543, 60
      %v1225 = vpop.permute.xlu0 %1224
      %1226 = vrot.lane.b32.xlu0 %v544, 60
      %v1227 = vpop.permute.xlu0 %1226
      %1228 = vrot.lane.b32.xlu0 %v545, 60
      %v1229 = vpop.permute.xlu0 %1228
      %1230 = vrot.lane.b32.xlu0 %v546, 60
      %v1231 = vpop.permute.xlu0 %1230
      %1232 = vrot.lane.b32.xlu0 %v547, 60
      %v1233 = vpop.permute.xlu0 %1232
      %1234 = vrot.lane.b32.xlu0 %v548, 60
      %v1235 = vpop.permute.xlu0 %1234
      %1236 = vrot.lane.b32.xlu0 %v549, 60
      %v1237 = vpop.permute.xlu0 %1236
      %1238 = vrot.lane.b32.xlu0 %v550, 60
      %v1239 = vpop.permute.xlu0 %1238
      %1240 = vrot.lane.b32.xlu0 %v551, 60
      %v1241 = vpop.permute.xlu0 %1240
      %1242 = vrot.lane.b32.xlu0 %v552, 60
      %v1243 = vpop.permute.xlu0 %1242
      %1244 = vrot.lane.b32.xlu0 %v553, 60
      %v1245 = vpop.permute.xlu0 %1244
      %1246 = vrot.lane.b32.xlu0 %v554, 60
      %v1247 = vpop.permute.xlu0 %1246
      %1248 = vrot.lane.b32.xlu0 %v555, 60
      %v1249 = vpop.permute.xlu0 %1248
      %1250 = vrot.lane.b32.xlu0 %v556, 60
      %v1251 = vpop.permute.xlu0 %1250
      %1252 = vrot.lane.b32.xlu0 %v557, 60
      %v1253 = vpop.permute.xlu0 %1252
      %1254 = vrot.lane.b32.xlu0 %v558, 60
      %v1255 = vpop.permute.xlu0 %1254
      %1256 = vrot.lane.b32.xlu0 %v559, 60
      %v1257 = vpop.permute.xlu0 %1256
      %1258 = vrot.lane.b32.xlu0 %v560, 60
      %v1259 = vpop.permute.xlu0 %1258
      %1260 = vrot.lane.b32.xlu0 %v561, 60
      %v1261 = vpop.permute.xlu0 %1260
      %1262 = vrot.lane.b32.xlu0 %v562, 60
      %v1263 = vpop.permute.xlu0 %1262
      %1264 = vrot.lane.b32.xlu0 %v563, 60
      %v1265 = vpop.permute.xlu0 %1264
      %1266 = vrot.lane.b32.xlu0 %v564, 60
      %v1267 = vpop.permute.xlu0 %1266
      %1268 = vrot.lane.b32.xlu0 %v565, 60
      %v1269 = vpop.permute.xlu0 %1268
      %1270 = vrot.lane.b32.xlu0 %v566, 60
      %v1271 = vpop.permute.xlu0 %1270
      %1336 = vrot.lane.b32.xlu0 %v568, 72
      %v1337 = vpop.permute.xlu0 %1336
      %1338 = vrot.lane.b32.xlu0 %v569, 72
      %v1339 = vpop.permute.xlu0 %1338
      %1340 = vrot.lane.b32.xlu0 %v570, 72
      %v1341 = vpop.permute.xlu0 %1340
      %1342 = vrot.lane.b32.xlu0 %v571, 72
      %v1343 = vpop.permute.xlu0 %1342
      %1344 = vrot.lane.b32.xlu0 %v572, 72
      %v1345 = vpop.permute.xlu0 %1344
      %1346 = vrot.lane.b32.xlu0 %v573, 72
      %v1347 = vpop.permute.xlu0 %1346
      %1348 = vrot.lane.b32.xlu0 %v574, 72
      %v1349 = vpop.permute.xlu0 %1348
      %1350 = vrot.lane.b32.xlu0 %v575, 72
      %v1351 = vpop.permute.xlu0 %1350
      %1352 = vrot.lane.b32.xlu0 %v576, 72
      %v1353 = vpop.permute.xlu0 %1352
      %1354 = vrot.lane.b32.xlu0 %v577, 72
      %v1355 = vpop.permute.xlu0 %1354
      %1356 = vrot.lane.b32.xlu0 %v578, 72
      %v1357 = vpop.permute.xlu0 %1356
      %1358 = vrot.lane.b32.xlu0 %v579, 72
      %v1359 = vpop.permute.xlu0 %1358
      %1360 = vrot.lane.b32.xlu0 %v580, 72
      %v1361 = vpop.permute.xlu0 %1360
      %1362 = vrot.lane.b32.xlu0 %v581, 72
      %v1363 = vpop.permute.xlu0 %1362
      %1364 = vrot.lane.b32.xlu0 %v582, 72
      %v1365 = vpop.permute.xlu0 %1364
      %1366 = vrot.lane.b32.xlu0 %v583, 72
      %v1367 = vpop.permute.xlu0 %1366
      %1368 = vrot.lane.b32.xlu0 %v584, 72
      %v1369 = vpop.permute.xlu0 %1368
      %1370 = vrot.lane.b32.xlu0 %v585, 72
      %v1371 = vpop.permute.xlu0 %1370
      %1372 = vrot.lane.b32.xlu0 %v586, 72
      %v1373 = vpop.permute.xlu0 %1372
      %1374 = vrot.lane.b32.xlu0 %v587, 72
      %v1375 = vpop.permute.xlu0 %1374
      %1376 = vrot.lane.b32.xlu0 %v588, 72
      %v1377 = vpop.permute.xlu0 %1376
      %1378 = vrot.lane.b32.xlu0 %v589, 72
      %v1379 = vpop.permute.xlu0 %1378
      %1380 = vrot.lane.b32.xlu0 %v590, 72
      %v1381 = vpop.permute.xlu0 %1380
      %1382 = vrot.lane.b32.xlu0 %v591, 72
      %v1383 = vpop.permute.xlu0 %1382
      %1384 = vrot.lane.b32.xlu0 %v592, 72
      %v1385 = vpop.permute.xlu0 %1384
      %1386 = vrot.lane.b32.xlu0 %v593, 72
      %v1387 = vpop.permute.xlu0 %1386
      %1388 = vrot.lane.b32.xlu0 %v594, 72
      %v1389 = vpop.permute.xlu0 %1388
      %1390 = vrot.lane.b32.xlu0 %v595, 72
      %v1391 = vpop.permute.xlu0 %1390
      %1392 = vrot.lane.b32.xlu0 %v596, 72
      %v1393 = vpop.permute.xlu0 %1392
      %1394 = vrot.lane.b32.xlu0 %v597, 72
      %v1395 = vpop.permute.xlu0 %1394
      %1396 = vrot.lane.b32.xlu0 %v598, 72
      %v1397 = vpop.permute.xlu0 %1396
      %1398 = vrot.lane.b32.xlu0 %v599, 72
      %v1399 = vpop.permute.xlu0 %1398
      %1464 = vrot.lane.b32.xlu0 %v600, 84
      %v1465 = vpop.permute.xlu0 %1464
      %1466 = vrot.lane.b32.xlu0 %v601, 84
      %v1467 = vpop.permute.xlu0 %1466
      %1468 = vrot.lane.b32.xlu0 %v602, 84
      %v1469 = vpop.permute.xlu0 %1468
      %1470 = vrot.lane.b32.xlu0 %v603, 84
      %v1471 = vpop.permute.xlu0 %1470
      %1472 = vrot.lane.b32.xlu0 %v604, 84
      %v1473 = vpop.permute.xlu0 %1472
      %1474 = vrot.lane.b32.xlu0 %v605, 84
      %v1475 = vpop.permute.xlu0 %1474
      %1476 = vrot.lane.b32.xlu0 %v606, 84
      %v1477 = vpop.permute.xlu0 %1476
      %1478 = vrot.lane.b32.xlu0 %v607, 84
      %v1479 = vpop.permute.xlu0 %1478
      %1480 = vrot.lane.b32.xlu0 %v608, 84
      %v1481 = vpop.permute.xlu0 %1480
      %1482 = vrot.lane.b32.xlu0 %v609, 84
      %v1483 = vpop.permute.xlu0 %1482
      %1484 = vrot.lane.b32.xlu0 %v610, 84
      %v1485 = vpop.permute.xlu0 %1484
      %1486 = vrot.lane.b32.xlu0 %v611, 84
      %v1487 = vpop.permute.xlu0 %1486
      %1488 = vrot.lane.b32.xlu0 %v612, 84
      %v1489 = vpop.permute.xlu0 %1488
      %1490 = vrot.lane.b32.xlu0 %v613, 84
      %v1491 = vpop.permute.xlu0 %1490
      %1492 = vrot.lane.b32.xlu0 %v614, 84
      %v1493 = vpop.permute.xlu0 %1492
      %1494 = vrot.lane.b32.xlu0 %v615, 84
      %v1495 = vpop.permute.xlu0 %1494
      %1496 = vrot.lane.b32.xlu0 %v616, 84
      %v1497 = vpop.permute.xlu0 %1496
      %1498 = vrot.lane.b32.xlu0 %v617, 84
      %v1499 = vpop.permute.xlu0 %1498
      %1500 = vrot.lane.b32.xlu0 %v618, 84
      %v1501 = vpop.permute.xlu0 %1500
      %1502 = vrot.lane.b32.xlu0 %v619, 84
      %v1503 = vpop.permute.xlu0 %1502
      %1504 = vrot.lane.b32.xlu0 %v620, 84
      %v1505 = vpop.permute.xlu0 %1504
      %1506 = vrot.lane.b32.xlu0 %v621, 84
      %v1507 = vpop.permute.xlu0 %1506
      %1508 = vrot.lane.b32.xlu0 %v622, 84
      %v1509 = vpop.permute.xlu0 %1508
      %1510 = vrot.lane.b32.xlu0 %v623, 84
      %v1511 = vpop.permute.xlu0 %1510
      %1512 = vrot.lane.b32.xlu0 %v624, 84
      %v1513 = vpop.permute.xlu0 %1512
      %1514 = vrot.lane.b32.xlu0 %v625, 84
      %v1515 = vpop.permute.xlu0 %1514
      %1516 = vrot.lane.b32.xlu0 %v626, 84
      %v1517 = vpop.permute.xlu0 %1516
      %1518 = vrot.lane.b32.xlu0 %v627, 84
      %v1519 = vpop.permute.xlu0 %1518
      %1520 = vrot.lane.b32.xlu0 %v628, 84
      %v1521 = vpop.permute.xlu0 %1520
      %1522 = vrot.lane.b32.xlu0 %v629, 84
      %v1523 = vpop.permute.xlu0 %1522
      %1524 = vrot.lane.b32.xlu0 %v630, 84
      %v1525 = vpop.permute.xlu0 %1524
      %1526 = vrot.lane.b32.xlu0 %v631, 84
      %v1527 = vpop.permute.xlu0 %1526
      %1592 = vrot.lane.b32.xlu0 %v632, 96
      %v1593 = vpop.permute.xlu0 %1592
      %1594 = vrot.lane.b32.xlu0 %v633, 96
      %v1595 = vpop.permute.xlu0 %1594
      %1596 = vrot.lane.b32.xlu0 %v634, 96
      %v1597 = vpop.permute.xlu0 %1596
      %1598 = vrot.lane.b32.xlu0 %v635, 96
      %v1599 = vpop.permute.xlu0 %1598
      %1600 = vrot.lane.b32.xlu0 %v636, 96
      %v1601 = vpop.permute.xlu0 %1600
      %1602 = vrot.lane.b32.xlu0 %v637, 96
      %v1603 = vpop.permute.xlu0 %1602
      %1604 = vrot.lane.b32.xlu0 %v638, 96
      %v1605 = vpop.permute.xlu0 %1604
      %1606 = vrot.lane.b32.xlu0 %v639, 96
      %v1607 = vpop.permute.xlu0 %1606
      %1608 = vrot.lane.b32.xlu0 %v640, 96
      %v1609 = vpop.permute.xlu0 %1608
      %1610 = vrot.lane.b32.xlu0 %v641, 96
      %v1611 = vpop.permute.xlu0 %1610
      %1612 = vrot.lane.b32.xlu0 %v642, 96
      %v1613 = vpop.permute.xlu0 %1612
      %1614 = vrot.lane.b32.xlu0 %v643, 96
      %v1615 = vpop.permute.xlu0 %1614
      %1616 = vrot.lane.b32.xlu0 %v644, 96
      %v1617 = vpop.permute.xlu0 %1616
      %1618 = vrot.lane.b32.xlu0 %v645, 96
      %v1619 = vpop.permute.xlu0 %1618
      %1620 = vrot.lane.b32.xlu0 %v646, 96
      %v1621 = vpop.permute.xlu0 %1620
      %1622 = vrot.lane.b32.xlu0 %v647, 96
      %v1623 = vpop.permute.xlu0 %1622
      %1624 = vrot.lane.b32.xlu0 %v648, 96
      %v1625 = vpop.permute.xlu0 %1624
      %1626 = vrot.lane.b32.xlu0 %v649, 96
      %v1627 = vpop.permute.xlu0 %1626
      %1628 = vrot.lane.b32.xlu0 %v650, 96
      %v1629 = vpop.permute.xlu0 %1628
      %1630 = vrot.lane.b32.xlu0 %v651, 96
      %v1631 = vpop.permute.xlu0 %1630
      %1632 = vrot.lane.b32.xlu0 %v652, 96
      %v1633 = vpop.permute.xlu0 %1632
      %1634 = vrot.lane.b32.xlu0 %v653, 96
      %v1635 = vpop.permute.xlu0 %1634
      %1636 = vrot.lane.b32.xlu0 %v654, 96
      %v1637 = vpop.permute.xlu0 %1636
      %1638 = vrot.lane.b32.xlu0 %v655, 96
      %v1639 = vpop.permute.xlu0 %1638
      %1640 = vrot.lane.b32.xlu0 %v656, 96
      %v1641 = vpop.permute.xlu0 %1640
      %1642 = vrot.lane.b32.xlu0 %v657, 96
      %v1643 = vpop.permute.xlu0 %1642
      %1644 = vrot.lane.b32.xlu0 %v658, 96
      %v1645 = vpop.permute.xlu0 %1644
      %1646 = vrot.lane.b32.xlu0 %v659, 96
      %v1647 = vpop.permute.xlu0 %1646
      %1648 = vrot.lane.b32.xlu0 %v660, 96
      %v1649 = vpop.permute.xlu0 %1648
      %1650 = vrot.lane.b32.xlu0 %v661, 96
      %v1651 = vpop.permute.xlu0 %1650
      %1652 = vrot.lane.b32.xlu0 %v662, 96
      %v1653 = vpop.permute.xlu0 %1652
      %1654 = vrot.lane.b32.xlu0 %v663, 96
      %v1655 = vpop.permute.xlu0 %1654
      %v1688 = vsel %vm198, %v375, %v697
      %v1689 = vsel %vm198, %v376, %v699
      %v1690 = vsel %vm198, %v377, %v701
      %v1691 = vsel %vm198, %v378, %v703
      %v1692 = vsel %vm198, %v379, %v705
      %v1693 = vsel %vm198, %v380, %v707
      %v1694 = vsel %vm198, %v381, %v709
      %v1695 = vsel %vm198, %v382, %v711
      %v1696 = vsel %vm198, %v383, %v713
      %v1697 = vsel %vm198, %v384, %v715
      %v1698 = vsel %vm198, %v385, %v717
      %v1699 = vsel %vm198, %v386, %v719
      %v1700 = vsel %vm198, %v387, %v721
      %v1701 = vsel %vm198, %v388, %v723
      %v1702 = vsel %vm198, %v389, %v725
      %v1703 = vsel %vm198, %v390, %v727
      %v1704 = vsel %vm198, %v391, %v729
      %v1705 = vsel %vm198, %v392, %v731
      %v1706 = vsel %vm198, %v393, %v733
      %v1707 = vsel %vm198, %v394, %v735
      %v1708 = vsel %vm198, %v395, %v737
      %v1709 = vsel %vm198, %v396, %v739
      %v1710 = vsel %vm198, %v397, %v741
      %v1711 = vsel %vm198, %v398, %v743
      %v1712 = vsel %vm198, %v399, %v745
      %v1713 = vsel %vm198, %v400, %v747
      %v1714 = vsel %vm198, %v401, %v749
      %v1715 = vsel %vm198, %v402, %v751
      %v1716 = vsel %vm198, %v403, %v753
      %v1717 = vsel %vm198, %v404, %v755
      %v1718 = vsel %vm198, %v405, %v757
      %v1719 = vsel %vm198, %v406, %v759
      %vm1720 = vcmask 195584
      %v1721 = vsel %vm1720, %v1688, %v825
      %v1722 = vsel %vm1720, %v1689, %v827
      %v1723 = vsel %vm1720, %v1690, %v829
      %v1724 = vsel %vm1720, %v1691, %v831
      %v1725 = vsel %vm1720, %v1692, %v833
      %v1726 = vsel %vm1720, %v1693, %v835
      %v1727 = vsel %vm1720, %v1694, %v837
      %v1728 = vsel %vm1720, %v1695, %v839
      %v1729 = vsel %vm1720, %v1696, %v841
      %v1730 = vsel %vm1720, %v1697, %v843
      %v1731 = vsel %vm1720, %v1698, %v845
      %v1732 = vsel %vm1720, %v1699, %v847
      %v1733 = vsel %vm1720, %v1700, %v849
      %v1734 = vsel %vm1720, %v1701, %v851
      %v1735 = vsel %vm1720, %v1702, %v853
      %v1736 = vsel %vm1720, %v1703, %v855
      %v1737 = vsel %vm1720, %v1704, %v857
      %v1738 = vsel %vm1720, %v1705, %v859
      %v1739 = vsel %vm1720, %v1706, %v861
      %v1740 = vsel %vm1720, %v1707, %v863
      %v1741 = vsel %vm1720, %v1708, %v865
      %v1742 = vsel %vm1720, %v1709, %v867
      %v1743 = vsel %vm1720, %v1710, %v869
      %v1744 = vsel %vm1720, %v1711, %v871
      %v1745 = vsel %vm1720, %v1712, %v873
      %v1746 = vsel %vm1720, %v1713, %v875
      %v1747 = vsel %vm1720, %v1714, %v877
      %v1748 = vsel %vm1720, %v1715, %v879
      %v1749 = vsel %vm1720, %v1716, %v881
      %v1750 = vsel %vm1720, %v1717, %v883
      %v1751 = vsel %vm1720, %v1718, %v885
      %v1752 = vsel %vm1720, %v1719, %v887
      %vm1753 = vcmask 293888
      %v1754 = vsel %vm1753, %v1721, %v953
      %v1755 = vsel %vm1753, %v1722, %v955
      %v1756 = vsel %vm1753, %v1723, %v957
      %v1757 = vsel %vm1753, %v1724, %v959
      %v1758 = vsel %vm1753, %v1725, %v961
      %v1759 = vsel %vm1753, %v1726, %v963
      %v1760 = vsel %vm1753, %v1727, %v965
      %v1761 = vsel %vm1753, %v1728, %v967
      %v1762 = vsel %vm1753, %v1729, %v969
      %v1763 = vsel %vm1753, %v1730, %v971
      %v1764 = vsel %vm1753, %v1731, %v973
      %v1765 = vsel %vm1753, %v1732, %v975
      %v1766 = vsel %vm1753, %v1733, %v977
      %v1767 = vsel %vm1753, %v1734, %v979
      %v1768 = vsel %vm1753, %v1735, %v981
      %v1769 = vsel %vm1753, %v1736, %v983
      %v1770 = vsel %vm1753, %v1737, %v985
      %v1771 = vsel %vm1753, %v1738, %v987
      %v1772 = vsel %vm1753, %v1739, %v989
      %v1773 = vsel %vm1753, %v1740, %v991
      %v1774 = vsel %vm1753, %v1741, %v993
      %v1775 = vsel %vm1753, %v1742, %v995
      %v1776 = vsel %vm1753, %v1743, %v997
      %v1777 = vsel %vm1753, %v1744, %v999
      %v1778 = vsel %vm1753, %v1745, %v1001
      %v1779 = vsel %vm1753, %v1746, %v1003
      %v1780 = vsel %vm1753, %v1747, %v1005
      %v1781 = vsel %vm1753, %v1748, %v1007
      %v1782 = vsel %vm1753, %v1749, %v1009
      %v1783 = vsel %vm1753, %v1750, %v1011
      %v1784 = vsel %vm1753, %v1751, %v1013
      %v1785 = vsel %vm1753, %v1752, %v1015
      %vm1786 = vcmask 392192
      %v1787 = vsel %vm1786, %v1754, %v1081
      %v1788 = vsel %vm1786, %v1755, %v1083
      %v1789 = vsel %vm1786, %v1756, %v1085
      %v1790 = vsel %vm1786, %v1757, %v1087
      %v1791 = vsel %vm1786, %v1758, %v1089
      %v1792 = vsel %vm1786, %v1759, %v1091
      %v1793 = vsel %vm1786, %v1760, %v1093
      %v1794 = vsel %vm1786, %v1761, %v1095
      %v1795 = vsel %vm1786, %v1762, %v1097
      %v1796 = vsel %vm1786, %v1763, %v1099
      %v1797 = vsel %vm1786, %v1764, %v1101
      %v1798 = vsel %vm1786, %v1765, %v1103
      %v1799 = vsel %vm1786, %v1766, %v1105
      %v1800 = vsel %vm1786, %v1767, %v1107
      %v1801 = vsel %vm1786, %v1768, %v1109
      %v1802 = vsel %vm1786, %v1769, %v1111
      %v1803 = vsel %vm1786, %v1770, %v1113
      %v1804 = vsel %vm1786, %v1771, %v1115
      %v1805 = vsel %vm1786, %v1772, %v1117
      %v1806 = vsel %vm1786, %v1773, %v1119
      %v1807 = vsel %vm1786, %v1774, %v1121
      %v1808 = vsel %vm1786, %v1775, %v1123
      %v1809 = vsel %vm1786, %v1776, %v1125
      %v1810 = vsel %vm1786, %v1777, %v1127
      %v1811 = vsel %vm1786, %v1778, %v1129
      %v1812 = vsel %vm1786, %v1779, %v1131
      %v1813 = vsel %vm1786, %v1780, %v1133
      %v1814 = vsel %vm1786, %v1781, %v1135
      %v1815 = vsel %vm1786, %v1782, %v1137
      %v1816 = vsel %vm1786, %v1783, %v1139
      %v1817 = vsel %vm1786, %v1784, %v1141
      %v1818 = vsel %vm1786, %v1785, %v1143
      %vm1819 = vcmask 490496
      %v1820 = vsel %vm1819, %v1787, %v1209
      %v1821 = vsel %vm1819, %v1788, %v1211
      %v1822 = vsel %vm1819, %v1789, %v1213
      %v1823 = vsel %vm1819, %v1790, %v1215
      %v1824 = vsel %vm1819, %v1791, %v1217
      %v1825 = vsel %vm1819, %v1792, %v1219
      %v1826 = vsel %vm1819, %v1793, %v1221
      %v1827 = vsel %vm1819, %v1794, %v1223
      %v1828 = vsel %vm1819, %v1795, %v1225
      %v1829 = vsel %vm1819, %v1796, %v1227
      %v1830 = vsel %vm1819, %v1797, %v1229
      %v1831 = vsel %vm1819, %v1798, %v1231
      %v1832 = vsel %vm1819, %v1799, %v1233
      %v1833 = vsel %vm1819, %v1800, %v1235
      %v1834 = vsel %vm1819, %v1801, %v1237
      %v1835 = vsel %vm1819, %v1802, %v1239
      %v1836 = vsel %vm1819, %v1803, %v1241
      %v1837 = vsel %vm1819, %v1804, %v1243
      %v1838 = vsel %vm1819, %v1805, %v1245
      %v1839 = vsel %vm1819, %v1806, %v1247
      %v1840 = vsel %vm1819, %v1807, %v1249
      %v1841 = vsel %vm1819, %v1808, %v1251
      %v1842 = vsel %vm1819, %v1809, %v1253
      %v1843 = vsel %vm1819, %v1810, %v1255
      %v1844 = vsel %vm1819, %v1811, %v1257
      %v1845 = vsel %vm1819, %v1812, %v1259
      %v1846 = vsel %vm1819, %v1813, %v1261
      %v1847 = vsel %vm1819, %v1814, %v1263
      %v1848 = vsel %vm1819, %v1815, %v1265
      %v1849 = vsel %vm1819, %v1816, %v1267
      %v1850 = vsel %vm1819, %v1817, %v1269
      %v1851 = vsel %vm1819, %v1818, %v1271
      %vm1852 = vcmask 588800
      %v1853 = vsel %vm1852, %v1820, %v1337
      %v1854 = vsel %vm1852, %v1821, %v1339
      %v1855 = vsel %vm1852, %v1822, %v1341
      %v1856 = vsel %vm1852, %v1823, %v1343
      %v1857 = vsel %vm1852, %v1824, %v1345
      %v1858 = vsel %vm1852, %v1825, %v1347
      %v1859 = vsel %vm1852, %v1826, %v1349
      %v1860 = vsel %vm1852, %v1827, %v1351
      %v1861 = vsel %vm1852, %v1828, %v1353
      %v1862 = vsel %vm1852, %v1829, %v1355
      %v1863 = vsel %vm1852, %v1830, %v1357
      %v1864 = vsel %vm1852, %v1831, %v1359
      %v1865 = vsel %vm1852, %v1832, %v1361
      %v1866 = vsel %vm1852, %v1833, %v1363
      %v1867 = vsel %vm1852, %v1834, %v1365
      %v1868 = vsel %vm1852, %v1835, %v1367
      %v1869 = vsel %vm1852, %v1836, %v1369
      %v1870 = vsel %vm1852, %v1837, %v1371
      %v1871 = vsel %vm1852, %v1838, %v1373
      %v1872 = vsel %vm1852, %v1839, %v1375
      %v1873 = vsel %vm1852, %v1840, %v1377
      %v1874 = vsel %vm1852, %v1841, %v1379
      %v1875 = vsel %vm1852, %v1842, %v1381
      %v1876 = vsel %vm1852, %v1843, %v1383
      %v1877 = vsel %vm1852, %v1844, %v1385
      %v1878 = vsel %vm1852, %v1845, %v1387
      %v1879 = vsel %vm1852, %v1846, %v1389
      %v1880 = vsel %vm1852, %v1847, %v1391
      %v1881 = vsel %vm1852, %v1848, %v1393
      %v1882 = vsel %vm1852, %v1849, %v1395
      %v1883 = vsel %vm1852, %v1850, %v1397
      %v1884 = vsel %vm1852, %v1851, %v1399
      %vm1885 = vcmask 687104
      %v1886 = vsel %vm1885, %v1853, %v1465
      %v1887 = vsel %vm1885, %v1854, %v1467
      %v1888 = vsel %vm1885, %v1855, %v1469
      %v1889 = vsel %vm1885, %v1856, %v1471
      %v1890 = vsel %vm1885, %v1857, %v1473
      %v1891 = vsel %vm1885, %v1858, %v1475
      %v1892 = vsel %vm1885, %v1859, %v1477
      %v1893 = vsel %vm1885, %v1860, %v1479
      %v1894 = vsel %vm1885, %v1861, %v1481
      %v1895 = vsel %vm1885, %v1862, %v1483
      %v1896 = vsel %vm1885, %v1863, %v1485
      %v1897 = vsel %vm1885, %v1864, %v1487
      %v1898 = vsel %vm1885, %v1865, %v1489
      %v1899 = vsel %vm1885, %v1866, %v1491
      %v1900 = vsel %vm1885, %v1867, %v1493
      %v1901 = vsel %vm1885, %v1868, %v1495
      %v1902 = vsel %vm1885, %v1869, %v1497
      %v1903 = vsel %vm1885, %v1870, %v1499
      %v1904 = vsel %vm1885, %v1871, %v1501
      %v1905 = vsel %vm1885, %v1872, %v1503
      %v1906 = vsel %vm1885, %v1873, %v1505
      %v1907 = vsel %vm1885, %v1874, %v1507
      %v1908 = vsel %vm1885, %v1875, %v1509
      %v1909 = vsel %vm1885, %v1876, %v1511
      %v1910 = vsel %vm1885, %v1877, %v1513
      %v1911 = vsel %vm1885, %v1878, %v1515
      %v1912 = vsel %vm1885, %v1879, %v1517
      %v1913 = vsel %vm1885, %v1880, %v1519
      %v1914 = vsel %vm1885, %v1881, %v1521
      %v1915 = vsel %vm1885, %v1882, %v1523
      %v1916 = vsel %vm1885, %v1883, %v1525
      %v1917 = vsel %vm1885, %v1884, %v1527
      %vm1918 = vcmask 785408
      %v1919 = vsel %vm1918, %v1886, %v1593
      %v1920 = vsel %vm1918, %v1887, %v1595
      %v1921 = vsel %vm1918, %v1888, %v1597
      %v1922 = vsel %vm1918, %v1889, %v1599
      %v1923 = vsel %vm1918, %v1890, %v1601
      %v1924 = vsel %vm1918, %v1891, %v1603
      %v1925 = vsel %vm1918, %v1892, %v1605
      %v1926 = vsel %vm1918, %v1893, %v1607
      %v1927 = vsel %vm1918, %v1894, %v1609
      %v1928 = vsel %vm1918, %v1895, %v1611
      %v1929 = vsel %vm1918, %v1896, %v1613
      %v1930 = vsel %vm1918, %v1897, %v1615
      %v1931 = vsel %vm1918, %v1898, %v1617
      %v1932 = vsel %vm1918, %v1899, %v1619
      %v1933 = vsel %vm1918, %v1900, %v1621
      %v1934 = vsel %vm1918, %v1901, %v1623
      %v1935 = vsel %vm1918, %v1902, %v1625
      %v1936 = vsel %vm1918, %v1903, %v1627
      %v1937 = vsel %vm1918, %v1904, %v1629
      %v1938 = vsel %vm1918, %v1905, %v1631
      %v1939 = vsel %vm1918, %v1906, %v1633
      %v1940 = vsel %vm1918, %v1907, %v1635
      %v1941 = vsel %vm1918, %v1908, %v1637
      %v1942 = vsel %vm1918, %v1909, %v1639
      %v1943 = vsel %vm1918, %v1910, %v1641
      %v1944 = vsel %vm1918, %v1911, %v1643
      %v1945 = vsel %vm1918, %v1912, %v1645
      %v1946 = vsel %vm1918, %v1913, %v1647
      %v1947 = vsel %vm1918, %v1914, %v1649
      %v1948 = vsel %vm1918, %v1915, %v1651
      %v1949 = vsel %vm1918, %v1916, %v1653
      %v1950 = vsel %vm1918, %v1917, %v1655
      %v1951 = vld [vmem:[%s1] sm:$0xff]
      %v1952 = vld [vmem:[%s1 + $0x8] sm:$0xff]
      %v1953 = vld [vmem:[%s1 + $0x10] sm:$0xff]
      %v1954 = vld [vmem:[%s1 + $0x18] sm:$0xff]
      %v1955 = vld [vmem:[%s1 + $0x20] sm:$0xff]
      %v1956 = vld [vmem:[%s1 + $0x28] sm:$0xff]
      %v1957 = vld [vmem:[%s1 + $0x30] sm:$0xff]
      %v1958 = vld [vmem:[%s1 + $0x38] sm:$0xff]
      %v1959 = vld [vmem:[%s1 + $0x40] sm:$0xff]
      %v1960 = vld [vmem:[%s1 + $0x48] sm:$0xff]
      %v1961 = vld [vmem:[%s1 + $0x50] sm:$0xff]
      %v1962 = vld [vmem:[%s1 + $0x58] sm:$0xff]
      %v1963 = vld [vmem:[%s1 + $0x60] sm:$0xff]
      %v1964 = vld [vmem:[%s1 + $0x68] sm:$0xf]
      %vm1965 = vcmask 883712
      %v1967 = vsel %vm1965, %v1919, 0
      %v1970 = vsel %vm1965, %v1920, 0
      %v1973 = vsel %vm1965, %v1921, 0
      %v1976 = vsel %vm1965, %v1922, 0
      %v1979 = vsel %vm1965, %v1923, 0
      %v1982 = vsel %vm1965, %v1924, 0
      %v1985 = vsel %vm1965, %v1925, 0
      %v1988 = vsel %vm1965, %v1926, 0
      %v1991 = vsel %vm1965, %v1927, 0
      %v1994 = vsel %vm1965, %v1928, 0
      %v1997 = vsel %vm1965, %v1929, 0
      %v2000 = vsel %vm1965, %v1930, 0
      %v2003 = vsel %vm1965, %v1931, 0
      %v2006 = vsel %vm1965, %v1932, 0
      %v2009 = vsel %vm1965, %v1933, 0
      %v2012 = vsel %vm1965, %v1934, 0
      %v2015 = vsel %vm1965, %v1935, 0
      %v2018 = vsel %vm1965, %v1936, 0
      %v2021 = vsel %vm1965, %v1937, 0
      %v2024 = vsel %vm1965, %v1938, 0
      %v2027 = vsel %vm1965, %v1939, 0
      %v2030 = vsel %vm1965, %v1940, 0
      %v2033 = vsel %vm1965, %v1941, 0
      %v2036 = vsel %vm1965, %v1942, 0
      %v2039 = vsel %vm1965, %v1943, 0
      %v2042 = vsel %vm1965, %v1944, 0
      %v2045 = vsel %vm1965, %v1945, 0
      %v2048 = vsel %vm1965, %v1946, 0
      %v2051 = vsel %vm1965, %v1947, 0
      %v2054 = vsel %vm1965, %v1948, 0
      %v2057 = vsel %vm1965, %v1949, 0
      %v2060 = vsel %vm1965, %v1950, 0
      %vm2062 = vcmask 1043456
      %v2064 = vsel %vm2062, %v1964, 0
      %2066 = vmatprep.subr.mxu0 0.0
      %2067 = vmatpush1.msra.mxu0 %v1951
      %2068 = vmatprep.subr.mxu0 0.0
      %2069 = vmatpush1.msra.mxu0 %v1952
      %2070 = vmatprep.subr.mxu0 0.0
      %2071 = vmatpush1.msra.mxu0 %v1953
      %2072 = vmatprep.subr.mxu0 0.0
      %2073 = vmatpush1.msra.mxu0 %v1954
      %2074 = vmatprep.subr.mxu0 0.0
      %2075 = vmatpush1.msra.mxu0 %v1955
      %2076 = vmatprep.subr.mxu0 0.0
      %2077 = vmatpush1.msra.mxu0 %v1956
      %2078 = vmatprep.subr.mxu0 0.0
      %2079 = vmatpush1.msra.mxu0 %v1957
      %2080 = vmatprep.subr.mxu0 0.0
      %2081 = vmatpush1.msra.mxu0 %v1958
      %2082 = vmatprep.subr.mxu0 0.0
      %2083 = vmatpush1.msra.mxu0 %v1959
      %2084 = vmatprep.subr.mxu0 0.0
      %2085 = vmatpush1.msra.mxu0 %v1960
      %2086 = vmatprep.subr.mxu0 0.0
      %2087 = vmatpush1.msra.mxu0 %v1961
      %2088 = vmatprep.subr.mxu0 0.0
      %2089 = vmatpush1.msra.mxu0 %v1962
      %2090 = vmatprep.subr.mxu0 0.0
      %2091 = vmatpush1.msra.mxu0 %v1963
      %2092 = vmatprep.subr.mxu0 0.0
      %2093 = vmatpush1.msra.mxu0 %v2064
      %2094 = vmatprep.subr.mxu0 0.0
      %2095 = vmatpush1.msra.mxu0 0.0
      %2096 = vmatprep.subr.mxu0 0.0
      %2097 = vmatpush1.msra.mxu0 0.0
      %2098 = vmatprep.subr.mxu0 0.0
      %2099 = vmatpush1.msra.mxu0 0.0
      %2100 = vmatprep.subr.mxu0 0.0
      %2101 = vmatpush1.msra.mxu0 0.0
      %2102 = vmatprep.subr.mxu0 0.0
      %2103 = vmatpush1.msra.mxu0 0.0
      %2104 = vmatprep.subr.mxu0 0.0
      %2105 = vmatpush1.msra.mxu0 0.0
      %2106 = vmatprep.subr.mxu0 0.0
      %2107 = vmatpush1.msra.mxu0 0.0
      %2108 = vmatprep.subr.mxu0 0.0
      %2109 = vmatpush1.msra.mxu0 0.0
      %2110 = vmatprep.subr.mxu0 0.0
      %2111 = vmatpush1.msra.mxu0 0.0
      %2112 = vmatprep.subr.mxu0 0.0
      %2113 = vmatpush1.msra.mxu0 0.0
      %2114 = vmatprep.subr.mxu0 0.0
      %2115 = vmatpush1.msra.mxu0 0.0
      %2116 = vmatprep.subr.mxu0 0.0
      %2117 = vmatpush1.msra.mxu0 0.0
      %2118 = vmatprep.subr.mxu0 0.0
      %2119 = vmatpush1.msra.mxu0 0.0
      %2120 = vmatprep.subr.mxu0 0.0
      %2121 = vmatpush1.msra.mxu0 0.0
      %2122 = vmatprep.subr.mxu0 0.0
      %2123 = vmatpush1.msra.mxu0 0.0
      %2124 = vmatprep.subr.mxu0 0.0
      %2125 = vmatpush1.msra.mxu0 0.0
      %2126 = vmatprep.subr.mxu0 0.0
      %2127 = vmatpush1.msra.mxu0 0.0
      %2128 = vmatprep.subr.mxu0 0.0
      %2129 = vmatpush1.msra.mxu0 0.0
      %2130 = vmatprep.mubr.f32.mxu0 0.0
      %2131 = vmatmul.mubr.f32.gmra.mrb[0].mxu0 %v1967
      %v2132 = vpop.f32.mrb[0].mxu0
      %v2133 = vadd.f32 0.0, %v2132
      %v2134 = vpop.f32.mrb[0].mxu0
      %2135 = vmatprep.mubr.f32.mxu0 0.0
      %2136 = vmatmul.mubr.f32.gmra.mrb[0].mxu0 %v1970
      %v2137 = vpop.f32.mrb[0].mxu0
      %v2138 = vadd.f32 0.0, %v2137
      %v2139 = vpop.f32.mrb[0].mxu0
      %2140 = vmatprep.mubr.f32.mxu0 0.0
      %2141 = vmatmul.mubr.f32.gmra.mrb[0].mxu0 %v1973
      %v2142 = vpop.f32.mrb[0].mxu0
      %v2143 = vadd.f32 0.0, %v2142
      %v2144 = vpop.f32.mrb[0].mxu0
      %2145 = vmatprep.mubr.f32.mxu0 0.0
      %2146 = vmatmul.mubr.f32.gmra.mrb[0].mxu0 %v1976
      %v2147 = vpop.f32.mrb[0].mxu0
      %v2148 = vadd.f32 0.0, %v2147
      %v2149 = vpop.f32.mrb[0].mxu0
      %2150 = vmatprep.mubr.f32.mxu0 0.0
      %2151 = vmatmul.mubr.f32.gmra.mrb[0].mxu0 %v1979
      %v2152 = vpop.f32.mrb[0].mxu0
      %v2153 = vadd.f32 0.0, %v2152
      %v2154 = vpop.f32.mrb[0].mxu0
      %2155 = vmatprep.mubr.f32.mxu0 0.0
      %2156 = vmatmul.mubr.f32.gmra.mrb[0].mxu0 %v1982
      %v2157 = vpop.f32.mrb[0].mxu0
      %v2158 = vadd.f32 0.0, %v2157
      %v2159 = vpop.f32.mrb[0].mxu0
      %2160 = vmatprep.mubr.f32.mxu0 0.0
      %2161 = vmatmul.mubr.f32.gmra.mrb[0].mxu0 %v1985
      %v2162 = vpop.f32.mrb[0].mxu0
      %v2163 = vadd.f32 0.0, %v2162
      %v2164 = vpop.f32.mrb[0].mxu0
      %2165 = vmatprep.mubr.f32.mxu0 0.0
      %2166 = vmatmul.mubr.f32.gmra.mrb[0].mxu0 %v1988
      %v2167 = vpop.f32.mrb[0].mxu0
      %v2168 = vadd.f32 0.0, %v2167
      %v2169 = vpop.f32.mrb[0].mxu0
      %2170 = vmatprep.mubr.f32.mxu0 0.0
      %2171 = vmatmul.mubr.f32.gmra.mrb[0].mxu0 %v1991
      %v2172 = vpop.f32.mrb[0].mxu0
      %v2173 = vadd.f32 0.0, %v2172
      %v2174 = vpop.f32.mrb[0].mxu0
      %2175 = vmatprep.mubr.f32.mxu0 0.0
      %2176 = vmatmul.mubr.f32.gmra.mrb[0].mxu0 %v1994
      %v2177 = vpop.f32.mrb[0].mxu0
      %v2178 = vadd.f32 0.0, %v2177
      %v2179 = vpop.f32.mrb[0].mxu0
      %2180 = vmatprep.mubr.f32.mxu0 0.0
      %2181 = vmatmul.mubr.f32.gmra.mrb[0].mxu0 %v1997
      %v2182 = vpop.f32.mrb[0].mxu0
      %v2183 = vadd.f32 0.0, %v2182
      %v2184 = vpop.f32.mrb[0].mxu0
      %2185 = vmatprep.mubr.f32.mxu0 0.0
      %2186 = vmatmul.mubr.f32.gmra.mrb[0].mxu0 %v2000
      %v2187 = vpop.f32.mrb[0].mxu0
      %v2188 = vadd.f32 0.0, %v2187
      %v2189 = vpop.f32.mrb[0].mxu0
      %2190 = vmatprep.mubr.f32.mxu0 0.0
      %2191 = vmatmul.mubr.f32.gmra.mrb[0].mxu0 %v2003
      %v2192 = vpop.f32.mrb[0].mxu0
      %v2193 = vadd.f32 0.0, %v2192
      %v2194 = vpop.f32.mrb[0].mxu0
      %2195 = vmatprep.mubr.f32.mxu0 0.0
      %2196 = vmatmul.mubr.f32.gmra.mrb[0].mxu0 %v2006
      %v2197 = vpop.f32.mrb[0].mxu0
      %v2198 = vadd.f32 0.0, %v2197
      %v2199 = vpop.f32.mrb[0].mxu0
      %2200 = vmatprep.mubr.f32.mxu0 0.0
      %2201 = vmatmul.mubr.f32.gmra.mrb[0].mxu0 %v2009
      %v2202 = vpop.f32.mrb[0].mxu0
      %v2203 = vadd.f32 0.0, %v2202
      %v2204 = vpop.f32.mrb[0].mxu0
      %2205 = vmatprep.mubr.f32.mxu0 0.0
      %2206 = vmatmul.mubr.f32.gmra.mrb[0].mxu0 %v2012
      %v2207 = vpop.f32.mrb[0].mxu0
      %v2208 = vadd.f32 0.0, %v2207
      %v2209 = vpop.f32.mrb[0].mxu0
      %2210 = vmatprep.mubr.f32.mxu0 0.0
      %2211 = vmatmul.mubr.f32.gmra.mrb[0].mxu0 %v2015
      %v2212 = vpop.f32.mrb[0].mxu0
      %v2213 = vadd.f32 0.0, %v2212
      %v2214 = vpop.f32.mrb[0].mxu0
      %2215 = vmatprep.mubr.f32.mxu0 0.0
      %2216 = vmatmul.mubr.f32.gmra.mrb[0].mxu0 %v2018
      %v2217 = vpop.f32.mrb[0].mxu0
      %v2218 = vadd.f32 0.0, %v2217
      %v2219 = vpop.f32.mrb[0].mxu0
      %2220 = vmatprep.mubr.f32.mxu0 0.0
      %2221 = vmatmul.mubr.f32.gmra.mrb[0].mxu0 %v2021
      %v2222 = vpop.f32.mrb[0].mxu0
      %v2223 = vadd.f32 0.0, %v2222
      %v2224 = vpop.f32.mrb[0].mxu0
      %2225 = vmatprep.mubr.f32.mxu0 0.0
      %2226 = vmatmul.mubr.f32.gmra.mrb[0].mxu0 %v2024
      %v2227 = vpop.f32.mrb[0].mxu0
      %v2228 = vadd.f32 0.0, %v2227
      %v2229 = vpop.f32.mrb[0].mxu0
      %2230 = vmatprep.mubr.f32.mxu0 0.0
      %2231 = vmatmul.mubr.f32.gmra.mrb[0].mxu0 %v2027
      %v2232 = vpop.f32.mrb[0].mxu0
      %v2233 = vadd.f32 0.0, %v2232
      %v2234 = vpop.f32.mrb[0].mxu0
      %2235 = vmatprep.mubr.f32.mxu0 0.0
      %2236 = vmatmul.mubr.f32.gmra.mrb[0].mxu0 %v2030
      %v2237 = vpop.f32.mrb[0].mxu0
      %v2238 = vadd.f32 0.0, %v2237
      %v2239 = vpop.f32.mrb[0].mxu0
      %2240 = vmatprep.mubr.f32.mxu0 0.0
      %2241 = vmatmul.mubr.f32.gmra.mrb[0].mxu0 %v2033
      %v2242 = vpop.f32.mrb[0].mxu0
      %v2243 = vadd.f32 0.0, %v2242
      %v2244 = vpop.f32.mrb[0].mxu0
      %2245 = vmatprep.mubr.f32.mxu0 0.0
      %2246 = vmatmul.mubr.f32.gmra.mrb[0].mxu0 %v2036
      %v2247 = vpop.f32.mrb[0].mxu0
      %v2248 = vadd.f32 0.0, %v2247
      %v2249 = vpop.f32.mrb[0].mxu0
      %2250 = vmatprep.mubr.f32.mxu0 0.0
      %2251 = vmatmul.mubr.f32.gmra.mrb[0].mxu0 %v2039
      %v2252 = vpop.f32.mrb[0].mxu0
      %v2253 = vadd.f32 0.0, %v2252
      %v2254 = vpop.f32.mrb[0].mxu0
      %2255 = vmatprep.mubr.f32.mxu0 0.0
      %2256 = vmatmul.mubr.f32.gmra.mrb[0].mxu0 %v2042
      %v2257 = vpop.f32.mrb[0].mxu0
      %v2258 = vadd.f32 0.0, %v2257
      %v2259 = vpop.f32.mrb[0].mxu0
      %2260 = vmatprep.mubr.f32.mxu0 0.0
      %2261 = vmatmul.mubr.f32.gmra.mrb[0].mxu0 %v2045
      %v2262 = vpop.f32.mrb[0].mxu0
      %v2263 = vadd.f32 0.0, %v2262
      %v2264 = vpop.f32.mrb[0].mxu0
      %2265 = vmatprep.mubr.f32.mxu0 0.0
      %2266 = vmatmul.mubr.f32.gmra.mrb[0].mxu0 %v2048
      %v2267 = vpop.f32.mrb[0].mxu0
      %v2268 = vadd.f32 0.0, %v2267
      %v2269 = vpop.f32.mrb[0].mxu0
      %2270 = vmatprep.mubr.f32.mxu0 0.0
      %2271 = vmatmul.mubr.f32.gmra.mrb[0].mxu0 %v2051
      %v2272 = vpop.f32.mrb[0].mxu0
      %v2273 = vadd.f32 0.0, %v2272
      %v2274 = vpop.f32.mrb[0].mxu0
      %2275 = vmatprep.mubr.f32.mxu0 0.0
      %2276 = vmatmul.mubr.f32.gmra.mrb[0].mxu0 %v2054
      %v2277 = vpop.f32.mrb[0].mxu0
      %v2278 = vadd.f32 0.0, %v2277
      %v2279 = vpop.f32.mrb[0].mxu0
      %2280 = vmatprep.mubr.f32.mxu0 0.0
      %2281 = vmatmul.mubr.f32.gmra.mrb[0].mxu0 %v2057
      %v2282 = vpop.f32.mrb[0].mxu0
      %v2283 = vadd.f32 0.0, %v2282
      %v2284 = vpop.f32.mrb[0].mxu0
      %2285 = vmatprep.mubr.f32.mxu0 0.0
      %2286 = vmatmul.mubr.f32.gmra.mrb[0].mxu0 %v2060
      %v2287 = vpop.f32.mrb[0].mxu0
      %v2288 = vadd.f32 0.0, %v2287
      %v2289 = vpop.f32.mrb[0].mxu0
      %2290 = vdwg.mxu0
      %v2291 = vmax.f32 %v2133, 0.0
      %v2292 = vmax.f32 %v2138, 0.0
      %v2293 = vmax.f32 %v2143, 0.0
      %v2294 = vmax.f32 %v2148, 0.0
      %v2295 = vmax.f32 %v2153, 0.0
      %v2296 = vmax.f32 %v2158, 0.0
      %v2297 = vmax.f32 %v2163, 0.0
      %v2298 = vmax.f32 %v2168, 0.0
      %v2299 = vmax.f32 %v2173, 0.0
      %v2300 = vmax.f32 %v2178, 0.0
      %v2301 = vmax.f32 %v2183, 0.0
      %v2302 = vmax.f32 %v2188, 0.0
      %v2303 = vmax.f32 %v2193, 0.0
      %v2304 = vmax.f32 %v2198, 0.0
      %v2305 = vmax.f32 %v2203, 0.0
      %v2306 = vmax.f32 %v2208, 0.0
      %v2307 = vmax.f32 %v2213, 0.0
      %v2308 = vmax.f32 %v2218, 0.0
      %v2309 = vmax.f32 %v2223, 0.0
      %v2310 = vmax.f32 %v2228, 0.0
      %v2311 = vmax.f32 %v2233, 0.0
      %v2312 = vmax.f32 %v2238, 0.0
      %v2313 = vmax.f32 %v2243, 0.0
      %v2314 = vmax.f32 %v2248, 0.0
      %v2315 = vmax.f32 %v2253, 0.0
      %v2316 = vmax.f32 %v2258, 0.0
      %v2317 = vmax.f32 %v2263, 0.0
      %v2318 = vmax.f32 %v2268, 0.0
      %v2319 = vmax.f32 %v2273, 0.0
      %v2320 = vmax.f32 %v2278, 0.0
      %v2321 = vmax.f32 %v2283, 0.0
      %v2322 = vmax.f32 %v2288, 0.0
      %s2323 = scalar_lea.vmem [#allocation3], 24
      %2324 = vst.msk [vmem:[%s2323 + $0x1] sm:$0xff] %vm254, %v2291
      %2325 = vst.msk [vmem:[%s2323 + $0x9] sm:$0xff] %vm254, %v2292
      %2326 = vst.msk [vmem:[%s2323 + $0x19] sm:$0xff] %vm254, %v2293
      %2327 = vst.msk [vmem:[%s2323 + $0x21] sm:$0xff] %vm254, %v2294
      %2328 = vst.msk [vmem:[%s2323 + $0x31] sm:$0xff] %vm254, %v2295
      %2329 = vst.msk [vmem:[%s2323 + $0x39] sm:$0xff] %vm254, %v2296
      %2330 = vst.msk [vmem:[%s2323 + $0x49] sm:$0xff] %vm254, %v2297
      %2331 = vst.msk [vmem:[%s2323 + $0x51] sm:$0xff] %vm254, %v2298
      %2332 = vst.msk [vmem:[%s2323 + $0x61] sm:$0xff] %vm254, %v2299
      %2333 = vst.msk [vmem:[%s2323 + $0x69] sm:$0xff] %vm254, %v2300
      %2334 = vst.msk [vmem:[%s2323 + $0x79] sm:$0xff] %vm254, %v2301
      %2335 = vst.msk [vmem:[%s2323 + $0x81] sm:$0xff] %vm254, %v2302
      %2336 = vst.msk [vmem:[%s2323 + $0x91] sm:$0xff] %vm254, %v2303
      %2337 = vst.msk [vmem:[%s2323 + $0x99] sm:$0xff] %vm254, %v2304
      %2338 = vst.msk [vmem:[%s2323 + $0xa9] sm:$0xff] %vm254, %v2305
      %2339 = vst.msk [vmem:[%s2323 + $0xb1] sm:$0xff] %vm254, %v2306
      %2340 = vst.msk [vmem:[%s2323 + $0xc1] sm:$0xff] %vm254, %v2307
      %2341 = vst.msk [vmem:[%s2323 + $0xc9] sm:$0xff] %vm254, %v2308
      %2342 = vst.msk [vmem:[%s2323 + $0xd9] sm:$0xff] %vm254, %v2309
      %2343 = vst.msk [vmem:[%s2323 + $0xe1] sm:$0xff] %vm254, %v2310
      %2344 = vst.msk [vmem:[%s2323 + $0xf1] sm:$0xff] %vm254, %v2311
      %2345 = vst.msk [vmem:[%s2323 + $0xf9] sm:$0xff] %vm254, %v2312
      %2346 = vst.msk [vmem:[%s2323 + $0x109] sm:$0xff] %vm254, %v2313
      %2347 = vst.msk [vmem:[%s2323 + $0x111] sm:$0xff] %vm254, %v2314
      %2348 = vst.msk [vmem:[%s2323 + $0x121] sm:$0xff] %vm254, %v2315
      %2349 = vst.msk [vmem:[%s2323 + $0x129] sm:$0xff] %vm254, %v2316
      %2350 = vst.msk [vmem:[%s2323 + $0x139] sm:$0xff] %vm254, %v2317
      %2351 = vst.msk [vmem:[%s2323 + $0x141] sm:$0xff] %vm254, %v2318
      %2352 = vst.msk [vmem:[%s2323 + $0x151] sm:$0xff] %vm254, %v2319
      %2353 = vst.msk [vmem:[%s2323 + $0x159] sm:$0xff] %vm254, %v2320
      %2354 = vst.msk [vmem:[%s2323 + $0x169] sm:$0xff] %vm254, %v2321
      %2355 = vst.msk [vmem:[%s2323 + $0x171] sm:$0xff] %vm254, %v2322
      %v2356 = vld [vmem:[#allocation3] sm:$0xff]
      %v2357 = vld [vmem:[#allocation3 + $0x8] sm:$0xff]
      %v2358 = vld [vmem:[#allocation3 + $0x18] sm:$0xff]
      %v2359 = vld [vmem:[#allocation3 + $0x20] sm:$0xff]
      %v2360 = vld [vmem:[#allocation3 + $0x30] sm:$0xff]
      %v2361 = vld [vmem:[#allocation3 + $0x38] sm:$0xff]
      %v2362 = vld [vmem:[#allocation3 + $0x48] sm:$0xff]
      %v2363 = vld [vmem:[#allocation3 + $0x50] sm:$0xff]
      %v2364 = vld [vmem:[#allocation3 + $0x60] sm:$0xff]
      %v2365 = vld [vmem:[#allocation3 + $0x68] sm:$0xff]
      %v2366 = vld [vmem:[#allocation3 + $0x78] sm:$0xff]
      %v2367 = vld [vmem:[#allocation3 + $0x80] sm:$0xff]
      %v2368 = vld [vmem:[#allocation3 + $0x90] sm:$0xff]
      %v2369 = vld [vmem:[#allocation3 + $0x98] sm:$0xff]
      %v2370 = vld [vmem:[#allocation3 + $0xa8] sm:$0xff]
      %v2371 = vld [vmem:[#allocation3 + $0xb0] sm:$0xff]
      %v2372 = vld [vmem:[#allocation3 + $0xc0] sm:$0xff]
      %v2373 = vld [vmem:[#allocation3 + $0xc8] sm:$0xff]
      %v2374 = vld [vmem:[#allocation3 + $0xd8] sm:$0xff]
      %v2375 = vld [vmem:[#allocation3 + $0xe0] sm:$0xff]
      %v2376 = vld [vmem:[#allocation3 + $0xf0] sm:$0xff]
      %v2377 = vld [vmem:[#allocation3 + $0xf8] sm:$0xff]
      %v2378 = vld [vmem:[#allocation3 + $0x108] sm:$0xff]
      %v2379 = vld [vmem:[#allocation3 + $0x110] sm:$0xff]
      %v2380 = vld [vmem:[#allocation3 + $0x120] sm:$0xff]
      %v2381 = vld [vmem:[#allocation3 + $0x128] sm:$0xff]
      %v2382 = vld [vmem:[#allocation3 + $0x138] sm:$0xff]
      %v2383 = vld [vmem:[#allocation3 + $0x140] sm:$0xff]
      %v2384 = vld [vmem:[#allocation3 + $0x150] sm:$0xff]
      %v2385 = vld [vmem:[#allocation3 + $0x158] sm:$0xff]
      %v2386 = vld [vmem:[#allocation3 + $0x168] sm:$0xff]
      %v2387 = vld [vmem:[#allocation3 + $0x170] sm:$0xff]
      %v2388 = vld [vmem:[#allocation3 + $0x1] sm:$0xff]
      %v2389 = vld [vmem:[#allocation3 + $0x9] sm:$0xff]
      %v2390 = vld [vmem:[#allocation3 + $0x19] sm:$0xff]
      %v2391 = vld [vmem:[#allocation3 + $0x21] sm:$0xff]
      %v2392 = vld [vmem:[#allocation3 + $0x31] sm:$0xff]
      %v2393 = vld [vmem:[#allocation3 + $0x39] sm:$0xff]
      %v2394 = vld [vmem:[#allocation3 + $0x49] sm:$0xff]
      %v2395 = vld [vmem:[#allocation3 + $0x51] sm:$0xff]
      %v2396 = vld [vmem:[#allocation3 + $0x61] sm:$0xff]
      %v2397 = vld [vmem:[#allocation3 + $0x69] sm:$0xff]
      %v2398 = vld [vmem:[#allocation3 + $0x79] sm:$0xff]
      %v2399 = vld [vmem:[#allocation3 + $0x81] sm:$0xff]
      %v2400 = vld [vmem:[#allocation3 + $0x91] sm:$0xff]
      %v2401 = vld [vmem:[#allocation3 + $0x99] sm:$0xff]
      %v2402 = vld [vmem:[#allocation3 + $0xa9] sm:$0xff]
      %v2403 = vld [vmem:[#allocation3 + $0xb1] sm:$0xff]
      %v2404 = vld [vmem:[#allocation3 + $0xc1] sm:$0xff]
      %v2405 = vld [vmem:[#allocation3 + $0xc9] sm:$0xff]
      %v2406 = vld [vmem:[#allocation3 + $0xd9] sm:$0xff]
      %v2407 = vld [vmem:[#allocation3 + $0xe1] sm:$0xff]
      %v2408 = vld [vmem:[#allocation3 + $0xf1] sm:$0xff]
      %v2409 = vld [vmem:[#allocation3 + $0xf9] sm:$0xff]
      %v2410 = vld [vmem:[#allocation3 + $0x109] sm:$0xff]
      %v2411 = vld [vmem:[#allocation3 + $0x111] sm:$0xff]
      %v2412 = vld [vmem:[#allocation3 + $0x121] sm:$0xff]
      %v2413 = vld [vmem:[#allocation3 + $0x129] sm:$0xff]
      %v2414 = vld [vmem:[#allocation3 + $0x139] sm:$0xff]
      %v2415 = vld [vmem:[#allocation3 + $0x141] sm:$0xff]
      %v2416 = vld [vmem:[#allocation3 + $0x151] sm:$0xff]
      %v2417 = vld [vmem:[#allocation3 + $0x159] sm:$0xff]
      %v2418 = vld [vmem:[#allocation3 + $0x169] sm:$0xff]
      %v2419 = vld [vmem:[#allocation3 + $0x171] sm:$0xff]
      %v2420 = vld [vmem:[#allocation3 + $0x2] sm:$0xff]
      %v2421 = vld [vmem:[#allocation3 + $0xa] sm:$0xff]
      %v2422 = vld [vmem:[#allocation3 + $0x1a] sm:$0xff]
      %v2423 = vld [vmem:[#allocation3 + $0x22] sm:$0xff]
      %v2424 = vld [vmem:[#allocation3 + $0x32] sm:$0xff]
      %v2425 = vld [vmem:[#allocation3 + $0x3a] sm:$0xff]
      %v2426 = vld [vmem:[#allocation3 + $0x4a] sm:$0xff]
      %v2427 = vld [vmem:[#allocation3 + $0x52] sm:$0xff]
      %v2428 = vld [vmem:[#allocation3 + $0x62] sm:$0xff]
      %v2429 = vld [vmem:[#allocation3 + $0x6a] sm:$0xff]
      %v2430 = vld [vmem:[#allocation3 + $0x7a] sm:$0xff]
      %v2431 = vld [vmem:[#allocation3 + $0x82] sm:$0xff]
      %v2432 = vld [vmem:[#allocation3 + $0x92] sm:$0xff]
      %v2433 = vld [vmem:[#allocation3 + $0x9a] sm:$0xff]
      %v2434 = vld [vmem:[#allocation3 + $0xaa] sm:$0xff]
      %v2435 = vld [vmem:[#allocation3 + $0xb2] sm:$0xff]
      %v2436 = vld [vmem:[#allocation3 + $0xc2] sm:$0xff]
      %v2437 = vld [vmem:[#allocation3 + $0xca] sm:$0xff]
      %v2438 = vld [vmem:[#allocation3 + $0xda] sm:$0xff]
      %v2439 = vld [vmem:[#allocation3 + $0xe2] sm:$0xff]
      %v2440 = vld [vmem:[#allocation3 + $0xf2] sm:$0xff]
      %v2441 = vld [vmem:[#allocation3 + $0xfa] sm:$0xff]
      %v2442 = vld [vmem:[#allocation3 + $0x10a] sm:$0xff]
      %v2443 = vld [vmem:[#allocation3 + $0x112] sm:$0xff]
      %v2444 = vld [vmem:[#allocation3 + $0x122] sm:$0xff]
      %v2445 = vld [vmem:[#allocation3 + $0x12a] sm:$0xff]
      %v2446 = vld [vmem:[#allocation3 + $0x13a] sm:$0xff]
      %v2447 = vld [vmem:[#allocation3 + $0x142] sm:$0xff]
      %v2448 = vld [vmem:[#allocation3 + $0x152] sm:$0xff]
      %v2449 = vld [vmem:[#allocation3 + $0x15a] sm:$0xff]
      %v2450 = vld [vmem:[#allocation3 + $0x16a] sm:$0xff]
      %v2451 = vld [vmem:[#allocation3 + $0x172] sm:$0xff]
      %v2452 = vld [vmem:[%s2323] sm:$0xff]
      %v2453 = vld [vmem:[%s2323 + $0x8] sm:$0xff]
      %v2454 = vld [vmem:[%s2323 + $0x18] sm:$0xff]
      %v2455 = vld [vmem:[%s2323 + $0x20] sm:$0xff]
      %v2456 = vld [vmem:[%s2323 + $0x30] sm:$0xff]
      %v2457 = vld [vmem:[%s2323 + $0x38] sm:$0xff]
      %v2458 = vld [vmem:[%s2323 + $0x48] sm:$0xff]
      %v2459 = vld [vmem:[%s2323 + $0x50] sm:$0xff]
      %v2460 = vld [vmem:[%s2323 + $0x60] sm:$0xff]
      %v2461 = vld [vmem:[%s2323 + $0x68] sm:$0xff]
      %v2462 = vld [vmem:[%s2323 + $0x78] sm:$0xff]
      %v2463 = vld [vmem:[%s2323 + $0x80] sm:$0xff]
      %v2464 = vld [vmem:[%s2323 + $0x90] sm:$0xff]
      %v2465 = vld [vmem:[%s2323 + $0x98] sm:$0xff]
      %v2466 = vld [vmem:[%s2323 + $0xa8] sm:$0xff]
      %v2467 = vld [vmem:[%s2323 + $0xb0] sm:$0xff]
      %v2468 = vld [vmem:[%s2323 + $0xc0] sm:$0xff]
      %v2469 = vld [vmem:[%s2323 + $0xc8] sm:$0xff]
      %v2470 = vld [vmem:[%s2323 + $0xd8] sm:$0xff]
      %v2471 = vld [vmem:[%s2323 + $0xe0] sm:$0xff]
      %v2472 = vld [vmem:[%s2323 + $0xf0] sm:$0xff]
      %v2473 = vld [vmem:[%s2323 + $0xf8] sm:$0xff]
      %v2474 = vld [vmem:[%s2323 + $0x108] sm:$0xff]
      %v2475 = vld [vmem:[%s2323 + $0x110] sm:$0xff]
      %v2476 = vld [vmem:[%s2323 + $0x120] sm:$0xff]
      %v2477 = vld [vmem:[%s2323 + $0x128] sm:$0xff]
      %v2478 = vld [vmem:[%s2323 + $0x138] sm:$0xff]
      %v2479 = vld [vmem:[%s2323 + $0x140] sm:$0xff]
      %v2480 = vld [vmem:[%s2323 + $0x150] sm:$0xff]
      %v2481 = vld [vmem:[%s2323 + $0x158] sm:$0xff]
      %v2482 = vld [vmem:[%s2323 + $0x168] sm:$0xff]
      %v2483 = vld [vmem:[%s2323 + $0x170] sm:$0xff]
      %v2484 = vld [vmem:[%s2323 + $0x1] sm:$0xff]
      %v2485 = vld [vmem:[%s2323 + $0x9] sm:$0xff]
      %v2486 = vld [vmem:[%s2323 + $0x19] sm:$0xff]
      %v2487 = vld [vmem:[%s2323 + $0x21] sm:$0xff]
      %v2488 = vld [vmem:[%s2323 + $0x31] sm:$0xff]
      %v2489 = vld [vmem:[%s2323 + $0x39] sm:$0xff]
      %v2490 = vld [vmem:[%s2323 + $0x49] sm:$0xff]
      %v2491 = vld [vmem:[%s2323 + $0x51] sm:$0xff]
      %v2492 = vld [vmem:[%s2323 + $0x61] sm:$0xff]
      %v2493 = vld [vmem:[%s2323 + $0x69] sm:$0xff]
      %v2494 = vld [vmem:[%s2323 + $0x79] sm:$0xff]
      %v2495 = vld [vmem:[%s2323 + $0x81] sm:$0xff]
      %v2496 = vld [vmem:[%s2323 + $0x91] sm:$0xff]
      %v2497 = vld [vmem:[%s2323 + $0x99] sm:$0xff]
      %v2498 = vld [vmem:[%s2323 + $0xa9] sm:$0xff]
      %v2499 = vld [vmem:[%s2323 + $0xb1] sm:$0xff]
      %v2500 = vld [vmem:[%s2323 + $0xc1] sm:$0xff]
      %v2501 = vld [vmem:[%s2323 + $0xc9] sm:$0xff]
      %v2502 = vld [vmem:[%s2323 + $0xd9] sm:$0xff]
      %v2503 = vld [vmem:[%s2323 + $0xe1] sm:$0xff]
      %v2504 = vld [vmem:[%s2323 + $0xf1] sm:$0xff]
      %v2505 = vld [vmem:[%s2323 + $0xf9] sm:$0xff]
      %v2506 = vld [vmem:[%s2323 + $0x109] sm:$0xff]
      %v2507 = vld [vmem:[%s2323 + $0x111] sm:$0xff]
      %v2508 = vld [vmem:[%s2323 + $0x121] sm:$0xff]
      %v2509 = vld [vmem:[%s2323 + $0x129] sm:$0xff]
      %v2510 = vld [vmem:[%s2323 + $0x139] sm:$0xff]
      %v2511 = vld [vmem:[%s2323 + $0x141] sm:$0xff]
      %v2512 = vld [vmem:[%s2323 + $0x151] sm:$0xff]
      %v2513 = vld [vmem:[%s2323 + $0x159] sm:$0xff]
      %v2514 = vld [vmem:[%s2323 + $0x169] sm:$0xff]
      %v2515 = vld [vmem:[%s2323 + $0x171] sm:$0xff]
      %v2516 = vld [vmem:[%s2323 + $0x2] sm:$0xff]
      %v2517 = vld [vmem:[%s2323 + $0xa] sm:$0xff]
      %v2518 = vld [vmem:[%s2323 + $0x1a] sm:$0xff]
      %v2519 = vld [vmem:[%s2323 + $0x22] sm:$0xff]
      %v2520 = vld [vmem:[%s2323 + $0x32] sm:$0xff]
      %v2521 = vld [vmem:[%s2323 + $0x3a] sm:$0xff]
      %v2522 = vld [vmem:[%s2323 + $0x4a] sm:$0xff]
      %v2523 = vld [vmem:[%s2323 + $0x52] sm:$0xff]
      %v2524 = vld [vmem:[%s2323 + $0x62] sm:$0xff]
      %v2525 = vld [vmem:[%s2323 + $0x6a] sm:$0xff]
      %v2526 = vld [vmem:[%s2323 + $0x7a] sm:$0xff]
      %v2527 = vld [vmem:[%s2323 + $0x82] sm:$0xff]
      %v2528 = vld [vmem:[%s2323 + $0x92] sm:$0xff]
      %v2529 = vld [vmem:[%s2323 + $0x9a] sm:$0xff]
      %v2530 = vld [vmem:[%s2323 + $0xaa] sm:$0xff]
      %v2531 = vld [vmem:[%s2323 + $0xb2] sm:$0xff]
      %v2532 = vld [vmem:[%s2323 + $0xc2] sm:$0xff]
      %v2533 = vld [vmem:[%s2323 + $0xca] sm:$0xff]
      %v2534 = vld [vmem:[%s2323 + $0xda] sm:$0xff]
      %v2535 = vld [vmem:[%s2323 + $0xe2] sm:$0xff]
      %v2536 = vld [vmem:[%s2323 + $0xf2] sm:$0xff]
      %v2537 = vld [vmem:[%s2323 + $0xfa] sm:$0xff]
      %v2538 = vld [vmem:[%s2323 + $0x10a] sm:$0xff]
      %v2539 = vld [vmem:[%s2323 + $0x112] sm:$0xff]
      %v2540 = vld [vmem:[%s2323 + $0x122] sm:$0xff]
      %v2541 = vld [vmem:[%s2323 + $0x12a] sm:$0xff]
      %v2542 = vld [vmem:[%s2323 + $0x13a] sm:$0xff]
      %v2543 = vld [vmem:[%s2323 + $0x142] sm:$0xff]
      %v2544 = vld [vmem:[%s2323 + $0x152] sm:$0xff]
      %v2545 = vld [vmem:[%s2323 + $0x15a] sm:$0xff]
      %v2546 = vld [vmem:[%s2323 + $0x16a] sm:$0xff]
      %v2547 = vld [vmem:[%s2323 + $0x172] sm:$0xff]
      %s2548 = scalar_lea.vmem [#allocation3], 48
      %v2549 = vld [vmem:[%s2548] sm:$0xff]
      %v2550 = vld [vmem:[%s2548 + $0x8] sm:$0xff]
      %v2551 = vld [vmem:[%s2548 + $0x18] sm:$0xff]
      %v2552 = vld [vmem:[%s2548 + $0x20] sm:$0xff]
      %v2553 = vld [vmem:[%s2548 + $0x30] sm:$0xff]
      %v2554 = vld [vmem:[%s2548 + $0x38] sm:$0xff]
      %v2555 = vld [vmem:[%s2548 + $0x48] sm:$0xff]
      %v2556 = vld [vmem:[%s2548 + $0x50] sm:$0xff]
      %v2557 = vld [vmem:[%s2548 + $0x60] sm:$0xff]
      %v2558 = vld [vmem:[%s2548 + $0x68] sm:$0xff]
      %v2559 = vld [vmem:[%s2548 + $0x78] sm:$0xff]
      %v2560 = vld [vmem:[%s2548 + $0x80] sm:$0xff]
      %v2561 = vld [vmem:[%s2548 + $0x90] sm:$0xff]
      %v2562 = vld [vmem:[%s2548 + $0x98] sm:$0xff]
      %v2563 = vld [vmem:[%s2548 + $0xa8] sm:$0xff]
      %v2564 = vld [vmem:[%s2548 + $0xb0] sm:$0xff]
      %v2565 = vld [vmem:[%s2548 + $0xc0] sm:$0xff]
      %v2566 = vld [vmem:[%s2548 + $0xc8] sm:$0xff]
      %v2567 = vld [vmem:[%s2548 + $0xd8] sm:$0xff]
      %v2568 = vld [vmem:[%s2548 + $0xe0] sm:$0xff]
      %v2569 = vld [vmem:[%s2548 + $0xf0] sm:$0xff]
      %v2570 = vld [vmem:[%s2548 + $0xf8] sm:$0xff]
      %v2571 = vld [vmem:[%s2548 + $0x108] sm:$0xff]
      %v2572 = vld [vmem:[%s2548 + $0x110] sm:$0xff]
      %v2573 = vld [vmem:[%s2548 + $0x120] sm:$0xff]
      %v2574 = vld [vmem:[%s2548 + $0x128] sm:$0xff]
      %v2575 = vld [vmem:[%s2548 + $0x138] sm:$0xff]
      %v2576 = vld [vmem:[%s2548 + $0x140] sm:$0xff]
      %v2577 = vld [vmem:[%s2548 + $0x150] sm:$0xff]
      %v2578 = vld [vmem:[%s2548 + $0x158] sm:$0xff]
      %v2579 = vld [vmem:[%s2548 + $0x168] sm:$0xff]
      %v2580 = vld [vmem:[%s2548 + $0x170] sm:$0xff]
      %v2581 = vld [vmem:[%s2548 + $0x1] sm:$0xff]
      %v2582 = vld [vmem:[%s2548 + $0x9] sm:$0xff]
      %v2583 = vld [vmem:[%s2548 + $0x19] sm:$0xff]
      %v2584 = vld [vmem:[%s2548 + $0x21] sm:$0xff]
      %v2585 = vld [vmem:[%s2548 + $0x31] sm:$0xff]
      %v2586 = vld [vmem:[%s2548 + $0x39] sm:$0xff]
      %v2587 = vld [vmem:[%s2548 + $0x49] sm:$0xff]
      %v2588 = vld [vmem:[%s2548 + $0x51] sm:$0xff]
      %v2589 = vld [vmem:[%s2548 + $0x61] sm:$0xff]
      %v2590 = vld [vmem:[%s2548 + $0x69] sm:$0xff]
      %v2591 = vld [vmem:[%s2548 + $0x79] sm:$0xff]
      %v2592 = vld [vmem:[%s2548 + $0x81] sm:$0xff]
      %v2593 = vld [vmem:[%s2548 + $0x91] sm:$0xff]
      %v2594 = vld [vmem:[%s2548 + $0x99] sm:$0xff]
      %v2595 = vld [vmem:[%s2548 + $0xa9] sm:$0xff]
      %v2596 = vld [vmem:[%s2548 + $0xb1] sm:$0xff]
      %v2597 = vld [vmem:[%s2548 + $0xc1] sm:$0xff]
      %v2598 = vld [vmem:[%s2548 + $0xc9] sm:$0xff]
      %v2599 = vld [vmem:[%s2548 + $0xd9] sm:$0xff]
      %v2600 = vld [vmem:[%s2548 + $0xe1] sm:$0xff]
      %v2601 = vld [vmem:[%s2548 + $0xf1] sm:$0xff]
      %v2602 = vld [vmem:[%s2548 + $0xf9] sm:$0xff]
      %v2603 = vld [vmem:[%s2548 + $0x109] sm:$0xff]
      %v2604 = vld [vmem:[%s2548 + $0x111] sm:$0xff]
      %v2605 = vld [vmem:[%s2548 + $0x121] sm:$0xff]
      %v2606 = vld [vmem:[%s2548 + $0x129] sm:$0xff]
      %v2607 = vld [vmem:[%s2548 + $0x139] sm:$0xff]
      %v2608 = vld [vmem:[%s2548 + $0x141] sm:$0xff]
      %v2609 = vld [vmem:[%s2548 + $0x151] sm:$0xff]
      %v2610 = vld [vmem:[%s2548 + $0x159] sm:$0xff]
      %v2611 = vld [vmem:[%s2548 + $0x169] sm:$0xff]
      %v2612 = vld [vmem:[%s2548 + $0x171] sm:$0xff]
      %v2613 = vld [vmem:[%s2548 + $0x2] sm:$0xff]
      %v2614 = vld [vmem:[%s2548 + $0xa] sm:$0xff]
      %v2615 = vld [vmem:[%s2548 + $0x1a] sm:$0xff]
      %v2616 = vld [vmem:[%s2548 + $0x22] sm:$0xff]
      %v2617 = vld [vmem:[%s2548 + $0x32] sm:$0xff]
      %v2618 = vld [vmem:[%s2548 + $0x3a] sm:$0xff]
      %v2619 = vld [vmem:[%s2548 + $0x4a] sm:$0xff]
      %v2620 = vld [vmem:[%s2548 + $0x52] sm:$0xff]
      %v2621 = vld [vmem:[%s2548 + $0x62] sm:$0xff]
      %v2622 = vld [vmem:[%s2548 + $0x6a] sm:$0xff]
      %v2623 = vld [vmem:[%s2548 + $0x7a] sm:$0xff]
      %v2624 = vld [vmem:[%s2548 + $0x82] sm:$0xff]
      %v2625 = vld [vmem:[%s2548 + $0x92] sm:$0xff]
      %v2626 = vld [vmem:[%s2548 + $0x9a] sm:$0xff]
      %v2627 = vld [vmem:[%s2548 + $0xaa] sm:$0xff]
      %v2628 = vld [vmem:[%s2548 + $0xb2] sm:$0xff]
      %v2629 = vld [vmem:[%s2548 + $0xc2] sm:$0xff]
      %v2630 = vld [vmem:[%s2548 + $0xca] sm:$0xff]
      %v2631 = vld [vmem:[%s2548 + $0xda] sm:$0xff]
      %v2632 = vld [vmem:[%s2548 + $0xe2] sm:$0xff]
      %v2633 = vld [vmem:[%s2548 + $0xf2] sm:$0xff]
      %v2634 = vld [vmem:[%s2548 + $0xfa] sm:$0xff]
      %v2635 = vld [vmem:[%s2548 + $0x10a] sm:$0xff]
      %v2636 = vld [vmem:[%s2548 + $0x112] sm:$0xff]
      %v2637 = vld [vmem:[%s2548 + $0x122] sm:$0xff]
      %v2638 = vld [vmem:[%s2548 + $0x12a] sm:$0xff]
      %v2639 = vld [vmem:[%s2548 + $0x13a] sm:$0xff]
      %v2640 = vld [vmem:[%s2548 + $0x142] sm:$0xff]
      %v2641 = vld [vmem:[%s2548 + $0x152] sm:$0xff]
      %v2642 = vld [vmem:[%s2548 + $0x15a] sm:$0xff]
      %v2643 = vld [vmem:[%s2548 + $0x16a] sm:$0xff]
      %v2644 = vld [vmem:[%s2548 + $0x172] sm:$0xff]
      %2677 = vrot.lane.b32.xlu0 %v2388, 8
      %v2678 = vpop.permute.xlu0 %2677
      %2679 = vrot.lane.b32.xlu0 %v2389, 8
      %v2680 = vpop.permute.xlu0 %2679
      %2681 = vrot.lane.b32.xlu0 %v2390, 8
      %v2682 = vpop.permute.xlu0 %2681
      %2683 = vrot.lane.b32.xlu0 %v2391, 8
      %v2684 = vpop.permute.xlu0 %2683
      %2685 = vrot.lane.b32.xlu0 %v2392, 8
      %v2686 = vpop.permute.xlu0 %2685
      %2687 = vrot.lane.b32.xlu0 %v2393, 8
      %v2688 = vpop.permute.xlu0 %2687
      %2689 = vrot.lane.b32.xlu0 %v2394, 8
      %v2690 = vpop.permute.xlu0 %2689
      %2691 = vrot.lane.b32.xlu0 %v2395, 8
      %v2692 = vpop.permute.xlu0 %2691
      %2693 = vrot.lane.b32.xlu0 %v2396, 8
      %v2694 = vpop.permute.xlu0 %2693
      %2695 = vrot.lane.b32.xlu0 %v2397, 8
      %v2696 = vpop.permute.xlu0 %2695
      %2697 = vrot.lane.b32.xlu0 %v2398, 8
      %v2698 = vpop.permute.xlu0 %2697
      %2699 = vrot.lane.b32.xlu0 %v2399, 8
      %v2700 = vpop.permute.xlu0 %2699
      %2701 = vrot.lane.b32.xlu0 %v2400, 8
      %v2702 = vpop.permute.xlu0 %2701
      %2703 = vrot.lane.b32.xlu0 %v2401, 8
      %v2704 = vpop.permute.xlu0 %2703
      %2705 = vrot.lane.b32.xlu0 %v2402, 8
      %v2706 = vpop.permute.xlu0 %2705
      %2707 = vrot.lane.b32.xlu0 %v2403, 8
      %v2708 = vpop.permute.xlu0 %2707
      %2709 = vrot.lane.b32.xlu0 %v2404, 8
      %v2710 = vpop.permute.xlu0 %2709
      %2711 = vrot.lane.b32.xlu0 %v2405, 8
      %v2712 = vpop.permute.xlu0 %2711
      %2713 = vrot.lane.b32.xlu0 %v2406, 8
      %v2714 = vpop.permute.xlu0 %2713
      %2715 = vrot.lane.b32.xlu0 %v2407, 8
      %v2716 = vpop.permute.xlu0 %2715
      %2717 = vrot.lane.b32.xlu0 %v2408, 8
      %v2718 = vpop.permute.xlu0 %2717
      %2719 = vrot.lane.b32.xlu0 %v2409, 8
      %v2720 = vpop.permute.xlu0 %2719
      %2721 = vrot.lane.b32.xlu0 %v2410, 8
      %v2722 = vpop.permute.xlu0 %2721
      %2723 = vrot.lane.b32.xlu0 %v2411, 8
      %v2724 = vpop.permute.xlu0 %2723
      %2725 = vrot.lane.b32.xlu0 %v2412, 8
      %v2726 = vpop.permute.xlu0 %2725
      %2727 = vrot.lane.b32.xlu0 %v2413, 8
      %v2728 = vpop.permute.xlu0 %2727
      %2729 = vrot.lane.b32.xlu0 %v2414, 8
      %v2730 = vpop.permute.xlu0 %2729
      %2731 = vrot.lane.b32.xlu0 %v2415, 8
      %v2732 = vpop.permute.xlu0 %2731
      %2733 = vrot.lane.b32.xlu0 %v2416, 8
      %v2734 = vpop.permute.xlu0 %2733
      %2735 = vrot.lane.b32.xlu0 %v2417, 8
      %v2736 = vpop.permute.xlu0 %2735
      %2737 = vrot.lane.b32.xlu0 %v2418, 8
      %v2738 = vpop.permute.xlu0 %2737
      %2739 = vrot.lane.b32.xlu0 %v2419, 8
      %v2740 = vpop.permute.xlu0 %2739
      %2805 = vrot.lane.b32.xlu0 %v2420, 16
      %v2806 = vpop.permute.xlu0 %2805
      %2807 = vrot.lane.b32.xlu0 %v2421, 16
      %v2808 = vpop.permute.xlu0 %2807
      %2809 = vrot.lane.b32.xlu0 %v2422, 16
      %v2810 = vpop.permute.xlu0 %2809
      %2811 = vrot.lane.b32.xlu0 %v2423, 16
      %v2812 = vpop.permute.xlu0 %2811
      %2813 = vrot.lane.b32.xlu0 %v2424, 16
      %v2814 = vpop.permute.xlu0 %2813
      %2815 = vrot.lane.b32.xlu0 %v2425, 16
      %v2816 = vpop.permute.xlu0 %2815
      %2817 = vrot.lane.b32.xlu0 %v2426, 16
      %v2818 = vpop.permute.xlu0 %2817
      %2819 = vrot.lane.b32.xlu0 %v2427, 16
      %v2820 = vpop.permute.xlu0 %2819
      %2821 = vrot.lane.b32.xlu0 %v2428, 16
      %v2822 = vpop.permute.xlu0 %2821
      %2823 = vrot.lane.b32.xlu0 %v2429, 16
      %v2824 = vpop.permute.xlu0 %2823
      %2825 = vrot.lane.b32.xlu0 %v2430, 16
      %v2826 = vpop.permute.xlu0 %2825
      %2827 = vrot.lane.b32.xlu0 %v2431, 16
      %v2828 = vpop.permute.xlu0 %2827
      %2829 = vrot.lane.b32.xlu0 %v2432, 16
      %v2830 = vpop.permute.xlu0 %2829
      %2831 = vrot.lane.b32.xlu0 %v2433, 16
      %v2832 = vpop.permute.xlu0 %2831
      %2833 = vrot.lane.b32.xlu0 %v2434, 16
      %v2834 = vpop.permute.xlu0 %2833
      %2835 = vrot.lane.b32.xlu0 %v2435, 16
      %v2836 = vpop.permute.xlu0 %2835
      %2837 = vrot.lane.b32.xlu0 %v2436, 16
      %v2838 = vpop.permute.xlu0 %2837
      %2839 = vrot.lane.b32.xlu0 %v2437, 16
      %v2840 = vpop.permute.xlu0 %2839
      %2841 = vrot.lane.b32.xlu0 %v2438, 16
      %v2842 = vpop.permute.xlu0 %2841
      %2843 = vrot.lane.b32.xlu0 %v2439, 16
      %v2844 = vpop.permute.xlu0 %2843
      %2845 = vrot.lane.b32.xlu0 %v2440, 16
      %v2846 = vpop.permute.xlu0 %2845
      %2847 = vrot.lane.b32.xlu0 %v2441, 16
      %v2848 = vpop.permute.xlu0 %2847
      %2849 = vrot.lane.b32.xlu0 %v2442, 16
      %v2850 = vpop.permute.xlu0 %2849
      %2851 = vrot.lane.b32.xlu0 %v2443, 16
      %v2852 = vpop.permute.xlu0 %2851
      %2853 = vrot.lane.b32.xlu0 %v2444, 16
      %v2854 = vpop.permute.xlu0 %2853
      %2855 = vrot.lane.b32.xlu0 %v2445, 16
      %v2856 = vpop.permute.xlu0 %2855
      %2857 = vrot.lane.b32.xlu0 %v2446, 16
      %v2858 = vpop.permute.xlu0 %2857
      %2859 = vrot.lane.b32.xlu0 %v2447, 16
      %v2860 = vpop.permute.xlu0 %2859
      %2861 = vrot.lane.b32.xlu0 %v2448, 16
      %v2862 = vpop.permute.xlu0 %2861
      %2863 = vrot.lane.b32.xlu0 %v2449, 16
      %v2864 = vpop.permute.xlu0 %2863
      %2865 = vrot.lane.b32.xlu0 %v2450, 16
      %v2866 = vpop.permute.xlu0 %2865
      %2867 = vrot.lane.b32.xlu0 %v2451, 16
      %v2868 = vpop.permute.xlu0 %2867
      %2933 = vrot.lane.b32.xlu0 %v2452, 24
      %v2934 = vpop.permute.xlu0 %2933
      %2935 = vrot.lane.b32.xlu0 %v2453, 24
      %v2936 = vpop.permute.xlu0 %2935
      %2937 = vrot.lane.b32.xlu0 %v2454, 24
      %v2938 = vpop.permute.xlu0 %2937
      %2939 = vrot.lane.b32.xlu0 %v2455, 24
      %v2940 = vpop.permute.xlu0 %2939
      %2941 = vrot.lane.b32.xlu0 %v2456, 24
      %v2942 = vpop.permute.xlu0 %2941
      %2943 = vrot.lane.b32.xlu0 %v2457, 24
      %v2944 = vpop.permute.xlu0 %2943
      %2945 = vrot.lane.b32.xlu0 %v2458, 24
      %v2946 = vpop.permute.xlu0 %2945
      %2947 = vrot.lane.b32.xlu0 %v2459, 24
      %v2948 = vpop.permute.xlu0 %2947
      %2949 = vrot.lane.b32.xlu0 %v2460, 24
      %v2950 = vpop.permute.xlu0 %2949
      %2951 = vrot.lane.b32.xlu0 %v2461, 24
      %v2952 = vpop.permute.xlu0 %2951
      %2953 = vrot.lane.b32.xlu0 %v2462, 24
      %v2954 = vpop.permute.xlu0 %2953
      %2955 = vrot.lane.b32.xlu0 %v2463, 24
      %v2956 = vpop.permute.xlu0 %2955
      %2957 = vrot.lane.b32.xlu0 %v2464, 24
      %v2958 = vpop.permute.xlu0 %2957
      %2959 = vrot.lane.b32.xlu0 %v2465, 24
      %v2960 = vpop.permute.xlu0 %2959
      %2961 = vrot.lane.b32.xlu0 %v2466, 24
      %v2962 = vpop.permute.xlu0 %2961
      %2963 = vrot.lane.b32.xlu0 %v2467, 24
      %v2964 = vpop.permute.xlu0 %2963
      %2965 = vrot.lane.b32.xlu0 %v2468, 24
      %v2966 = vpop.permute.xlu0 %2965
      %2967 = vrot.lane.b32.xlu0 %v2469, 24
      %v2968 = vpop.permute.xlu0 %2967
      %2969 = vrot.lane.b32.xlu0 %v2470, 24
      %v2970 = vpop.permute.xlu0 %2969
      %2971 = vrot.lane.b32.xlu0 %v2471, 24
      %v2972 = vpop.permute.xlu0 %2971
      %2973 = vrot.lane.b32.xlu0 %v2472, 24
      %v2974 = vpop.permute.xlu0 %2973
      %2975 = vrot.lane.b32.xlu0 %v2473, 24
      %v2976 = vpop.permute.xlu0 %2975
      %2977 = vrot.lane.b32.xlu0 %v2474, 24
      %v2978 = vpop.permute.xlu0 %2977
      %2979 = vrot.lane.b32.xlu0 %v2475, 24
      %v2980 = vpop.permute.xlu0 %2979
      %2981 = vrot.lane.b32.xlu0 %v2476, 24
      %v2982 = vpop.permute.xlu0 %2981
      %2983 = vrot.lane.b32.xlu0 %v2477, 24
      %v2984 = vpop.permute.xlu0 %2983
      %2985 = vrot.lane.b32.xlu0 %v2478, 24
      %v2986 = vpop.permute.xlu0 %2985
      %2987 = vrot.lane.b32.xlu0 %v2479, 24
      %v2988 = vpop.permute.xlu0 %2987
      %2989 = vrot.lane.b32.xlu0 %v2480, 24
      %v2990 = vpop.permute.xlu0 %2989
      %2991 = vrot.lane.b32.xlu0 %v2481, 24
      %v2992 = vpop.permute.xlu0 %2991
      %2993 = vrot.lane.b32.xlu0 %v2482, 24
      %v2994 = vpop.permute.xlu0 %2993
      %2995 = vrot.lane.b32.xlu0 %v2483, 24
      %v2996 = vpop.permute.xlu0 %2995
      %3061 = vrot.lane.b32.xlu0 %v2484, 32
      %v3062 = vpop.permute.xlu0 %3061
      %3063 = vrot.lane.b32.xlu0 %v2485, 32
      %v3064 = vpop.permute.xlu0 %3063
      %3065 = vrot.lane.b32.xlu0 %v2486, 32
      %v3066 = vpop.permute.xlu0 %3065
      %3067 = vrot.lane.b32.xlu0 %v2487, 32
      %v3068 = vpop.permute.xlu0 %3067
      %3069 = vrot.lane.b32.xlu0 %v2488, 32
      %v3070 = vpop.permute.xlu0 %3069
      %3071 = vrot.lane.b32.xlu0 %v2489, 32
      %v3072 = vpop.permute.xlu0 %3071
      %3073 = vrot.lane.b32.xlu0 %v2490, 32
      %v3074 = vpop.permute.xlu0 %3073
      %3075 = vrot.lane.b32.xlu0 %v2491, 32
      %v3076 = vpop.permute.xlu0 %3075
      %3077 = vrot.lane.b32.xlu0 %v2492, 32
      %v3078 = vpop.permute.xlu0 %3077
      %3079 = vrot.lane.b32.xlu0 %v2493, 32
      %v3080 = vpop.permute.xlu0 %3079
      %3081 = vrot.lane.b32.xlu0 %v2494, 32
      %v3082 = vpop.permute.xlu0 %3081
      %3083 = vrot.lane.b32.xlu0 %v2495, 32
      %v3084 = vpop.permute.xlu0 %3083
      %3085 = vrot.lane.b32.xlu0 %v2496, 32
      %v3086 = vpop.permute.xlu0 %3085
      %3087 = vrot.lane.b32.xlu0 %v2497, 32
      %v3088 = vpop.permute.xlu0 %3087
      %3089 = vrot.lane.b32.xlu0 %v2498, 32
      %v3090 = vpop.permute.xlu0 %3089
      %3091 = vrot.lane.b32.xlu0 %v2499, 32
      %v3092 = vpop.permute.xlu0 %3091
      %3093 = vrot.lane.b32.xlu0 %v2500, 32
      %v3094 = vpop.permute.xlu0 %3093
      %3095 = vrot.lane.b32.xlu0 %v2501, 32
      %v3096 = vpop.permute.xlu0 %3095
      %3097 = vrot.lane.b32.xlu0 %v2502, 32
      %v3098 = vpop.permute.xlu0 %3097
      %3099 = vrot.lane.b32.xlu0 %v2503, 32
      %v3100 = vpop.permute.xlu0 %3099
      %3101 = vrot.lane.b32.xlu0 %v2504, 32
      %v3102 = vpop.permute.xlu0 %3101
      %3103 = vrot.lane.b32.xlu0 %v2505, 32
      %v3104 = vpop.permute.xlu0 %3103
      %3105 = vrot.lane.b32.xlu0 %v2506, 32
      %v3106 = vpop.permute.xlu0 %3105
      %3107 = vrot.lane.b32.xlu0 %v2507, 32
      %v3108 = vpop.permute.xlu0 %3107
      %3109 = vrot.lane.b32.xlu0 %v2508, 32
      %v3110 = vpop.permute.xlu0 %3109
      %3111 = vrot.lane.b32.xlu0 %v2509, 32
      %v3112 = vpop.permute.xlu0 %3111
      %3113 = vrot.lane.b32.xlu0 %v2510, 32
      %v3114 = vpop.permute.xlu0 %3113
      %3115 = vrot.lane.b32.xlu0 %v2511, 32
      %v3116 = vpop.permute.xlu0 %3115
      %3117 = vrot.lane.b32.xlu0 %v2512, 32
      %v3118 = vpop.permute.xlu0 %3117
      %3119 = vrot.lane.b32.xlu0 %v2513, 32
      %v3120 = vpop.permute.xlu0 %3119
      %3121 = vrot.lane.b32.xlu0 %v2514, 32
      %v3122 = vpop.permute.xlu0 %3121
      %3123 = vrot.lane.b32.xlu0 %v2515, 32
      %v3124 = vpop.permute.xlu0 %3123
      %3189 = vrot.lane.b32.xlu0 %v2516, 40
      %v3190 = vpop.permute.xlu0 %3189
      %3191 = vrot.lane.b32.xlu0 %v2517, 40
      %v3192 = vpop.permute.xlu0 %3191
      %3193 = vrot.lane.b32.xlu0 %v2518, 40
      %v3194 = vpop.permute.xlu0 %3193
      %3195 = vrot.lane.b32.xlu0 %v2519, 40
      %v3196 = vpop.permute.xlu0 %3195
      %3197 = vrot.lane.b32.xlu0 %v2520, 40
      %v3198 = vpop.permute.xlu0 %3197
      %3199 = vrot.lane.b32.xlu0 %v2521, 40
      %v3200 = vpop.permute.xlu0 %3199
      %3201 = vrot.lane.b32.xlu0 %v2522, 40
      %v3202 = vpop.permute.xlu0 %3201
      %3203 = vrot.lane.b32.xlu0 %v2523, 40
      %v3204 = vpop.permute.xlu0 %3203
      %3205 = vrot.lane.b32.xlu0 %v2524, 40
      %v3206 = vpop.permute.xlu0 %3205
      %3207 = vrot.lane.b32.xlu0 %v2525, 40
      %v3208 = vpop.permute.xlu0 %3207
      %3209 = vrot.lane.b32.xlu0 %v2526, 40
      %v3210 = vpop.permute.xlu0 %3209
      %3211 = vrot.lane.b32.xlu0 %v2527, 40
      %v3212 = vpop.permute.xlu0 %3211
      %3213 = vrot.lane.b32.xlu0 %v2528, 40
      %v3214 = vpop.permute.xlu0 %3213
      %3215 = vrot.lane.b32.xlu0 %v2529, 40
      %v3216 = vpop.permute.xlu0 %3215
      %3217 = vrot.lane.b32.xlu0 %v2530, 40
      %v3218 = vpop.permute.xlu0 %3217
      %3219 = vrot.lane.b32.xlu0 %v2531, 40
      %v3220 = vpop.permute.xlu0 %3219
      %3221 = vrot.lane.b32.xlu0 %v2532, 40
      %v3222 = vpop.permute.xlu0 %3221
      %3223 = vrot.lane.b32.xlu0 %v2533, 40
      %v3224 = vpop.permute.xlu0 %3223
      %3225 = vrot.lane.b32.xlu0 %v2534, 40
      %v3226 = vpop.permute.xlu0 %3225
      %3227 = vrot.lane.b32.xlu0 %v2535, 40
      %v3228 = vpop.permute.xlu0 %3227
      %3229 = vrot.lane.b32.xlu0 %v2536, 40
      %v3230 = vpop.permute.xlu0 %3229
      %3231 = vrot.lane.b32.xlu0 %v2537, 40
      %v3232 = vpop.permute.xlu0 %3231
      %3233 = vrot.lane.b32.xlu0 %v2538, 40
      %v3234 = vpop.permute.xlu0 %3233
      %3235 = vrot.lane.b32.xlu0 %v2539, 40
      %v3236 = vpop.permute.xlu0 %3235
      %3237 = vrot.lane.b32.xlu0 %v2540, 40
      %v3238 = vpop.permute.xlu0 %3237
      %3239 = vrot.lane.b32.xlu0 %v2541, 40
      %v3240 = vpop.permute.xlu0 %3239
      %3241 = vrot.lane.b32.xlu0 %v2542, 40
      %v3242 = vpop.permute.xlu0 %3241
      %3243 = vrot.lane.b32.xlu0 %v2543, 40
      %v3244 = vpop.permute.xlu0 %3243
      %3245 = vrot.lane.b32.xlu0 %v2544, 40
      %v3246 = vpop.permute.xlu0 %3245
      %3247 = vrot.lane.b32.xlu0 %v2545, 40
      %v3248 = vpop.permute.xlu0 %3247
      %3249 = vrot.lane.b32.xlu0 %v2546, 40
      %v3250 = vpop.permute.xlu0 %3249
      %3251 = vrot.lane.b32.xlu0 %v2547, 40
      %v3252 = vpop.permute.xlu0 %3251
      %3317 = vrot.lane.b32.xlu0 %v2549, 48
      %v3318 = vpop.permute.xlu0 %3317
      %3319 = vrot.lane.b32.xlu0 %v2550, 48
      %v3320 = vpop.permute.xlu0 %3319
      %3321 = vrot.lane.b32.xlu0 %v2551, 48
      %v3322 = vpop.permute.xlu0 %3321
      %3323 = vrot.lane.b32.xlu0 %v2552, 48
      %v3324 = vpop.permute.xlu0 %3323
      %3325 = vrot.lane.b32.xlu0 %v2553, 48
      %v3326 = vpop.permute.xlu0 %3325
      %3327 = vrot.lane.b32.xlu0 %v2554, 48
      %v3328 = vpop.permute.xlu0 %3327
      %3329 = vrot.lane.b32.xlu0 %v2555, 48
      %v3330 = vpop.permute.xlu0 %3329
      %3331 = vrot.lane.b32.xlu0 %v2556, 48
      %v3332 = vpop.permute.xlu0 %3331
      %3333 = vrot.lane.b32.xlu0 %v2557, 48
      %v3334 = vpop.permute.xlu0 %3333
      %3335 = vrot.lane.b32.xlu0 %v2558, 48
      %v3336 = vpop.permute.xlu0 %3335
      %3337 = vrot.lane.b32.xlu0 %v2559, 48
      %v3338 = vpop.permute.xlu0 %3337
      %3339 = vrot.lane.b32.xlu0 %v2560, 48
      %v3340 = vpop.permute.xlu0 %3339
      %3341 = vrot.lane.b32.xlu0 %v2561, 48
      %v3342 = vpop.permute.xlu0 %3341
      %3343 = vrot.lane.b32.xlu0 %v2562, 48
      %v3344 = vpop.permute.xlu0 %3343
      %3345 = vrot.lane.b32.xlu0 %v2563, 48
      %v3346 = vpop.permute.xlu0 %3345
      %3347 = vrot.lane.b32.xlu0 %v2564, 48
      %v3348 = vpop.permute.xlu0 %3347
      %3349 = vrot.lane.b32.xlu0 %v2565, 48
      %v3350 = vpop.permute.xlu0 %3349
      %3351 = vrot.lane.b32.xlu0 %v2566, 48
      %v3352 = vpop.permute.xlu0 %3351
      %3353 = vrot.lane.b32.xlu0 %v2567, 48
      %v3354 = vpop.permute.xlu0 %3353
      %3355 = vrot.lane.b32.xlu0 %v2568, 48
      %v3356 = vpop.permute.xlu0 %3355
      %3357 = vrot.lane.b32.xlu0 %v2569, 48
      %v3358 = vpop.permute.xlu0 %3357
      %3359 = vrot.lane.b32.xlu0 %v2570, 48
      %v3360 = vpop.permute.xlu0 %3359
      %3361 = vrot.lane.b32.xlu0 %v2571, 48
      %v3362 = vpop.permute.xlu0 %3361
      %3363 = vrot.lane.b32.xlu0 %v2572, 48
      %v3364 = vpop.permute.xlu0 %3363
      %3365 = vrot.lane.b32.xlu0 %v2573, 48
      %v3366 = vpop.permute.xlu0 %3365
      %3367 = vrot.lane.b32.xlu0 %v2574, 48
      %v3368 = vpop.permute.xlu0 %3367
      %3369 = vrot.lane.b32.xlu0 %v2575, 48
      %v3370 = vpop.permute.xlu0 %3369
      %3371 = vrot.lane.b32.xlu0 %v2576, 48
      %v3372 = vpop.permute.xlu0 %3371
      %3373 = vrot.lane.b32.xlu0 %v2577, 48
      %v3374 = vpop.permute.xlu0 %3373
      %3375 = vrot.lane.b32.xlu0 %v2578, 48
      %v3376 = vpop.permute.xlu0 %3375
      %3377 = vrot.lane.b32.xlu0 %v2579, 48
      %v3378 = vpop.permute.xlu0 %3377
      %3379 = vrot.lane.b32.xlu0 %v2580, 48
      %v3380 = vpop.permute.xlu0 %3379
      %3445 = vrot.lane.b32.xlu0 %v2581, 56
      %v3446 = vpop.permute.xlu0 %3445
      %3447 = vrot.lane.b32.xlu0 %v2582, 56
      %v3448 = vpop.permute.xlu0 %3447
      %3449 = vrot.lane.b32.xlu0 %v2583, 56
      %v3450 = vpop.permute.xlu0 %3449
      %3451 = vrot.lane.b32.xlu0 %v2584, 56
      %v3452 = vpop.permute.xlu0 %3451
      %3453 = vrot.lane.b32.xlu0 %v2585, 56
      %v3454 = vpop.permute.xlu0 %3453
      %3455 = vrot.lane.b32.xlu0 %v2586, 56
      %v3456 = vpop.permute.xlu0 %3455
      %3457 = vrot.lane.b32.xlu0 %v2587, 56
      %v3458 = vpop.permute.xlu0 %3457
      %3459 = vrot.lane.b32.xlu0 %v2588, 56
      %v3460 = vpop.permute.xlu0 %3459
      %3461 = vrot.lane.b32.xlu0 %v2589, 56
      %v3462 = vpop.permute.xlu0 %3461
      %3463 = vrot.lane.b32.xlu0 %v2590, 56
      %v3464 = vpop.permute.xlu0 %3463
      %3465 = vrot.lane.b32.xlu0 %v2591, 56
      %v3466 = vpop.permute.xlu0 %3465
      %3467 = vrot.lane.b32.xlu0 %v2592, 56
      %v3468 = vpop.permute.xlu0 %3467
      %3469 = vrot.lane.b32.xlu0 %v2593, 56
      %v3470 = vpop.permute.xlu0 %3469
      %3471 = vrot.lane.b32.xlu0 %v2594, 56
      %v3472 = vpop.permute.xlu0 %3471
      %3473 = vrot.lane.b32.xlu0 %v2595, 56
      %v3474 = vpop.permute.xlu0 %3473
      %3475 = vrot.lane.b32.xlu0 %v2596, 56
      %v3476 = vpop.permute.xlu0 %3475
      %3477 = vrot.lane.b32.xlu0 %v2597, 56
      %v3478 = vpop.permute.xlu0 %3477
      %3479 = vrot.lane.b32.xlu0 %v2598, 56
      %v3480 = vpop.permute.xlu0 %3479
      %3481 = vrot.lane.b32.xlu0 %v2599, 56
      %v3482 = vpop.permute.xlu0 %3481
      %3483 = vrot.lane.b32.xlu0 %v2600, 56
      %v3484 = vpop.permute.xlu0 %3483
      %3485 = vrot.lane.b32.xlu0 %v2601, 56
      %v3486 = vpop.permute.xlu0 %3485
      %3487 = vrot.lane.b32.xlu0 %v2602, 56
      %v3488 = vpop.permute.xlu0 %3487
      %3489 = vrot.lane.b32.xlu0 %v2603, 56
      %v3490 = vpop.permute.xlu0 %3489
      %3491 = vrot.lane.b32.xlu0 %v2604, 56
      %v3492 = vpop.permute.xlu0 %3491
      %3493 = vrot.lane.b32.xlu0 %v2605, 56
      %v3494 = vpop.permute.xlu0 %3493
      %3495 = vrot.lane.b32.xlu0 %v2606, 56
      %v3496 = vpop.permute.xlu0 %3495
      %3497 = vrot.lane.b32.xlu0 %v2607, 56
      %v3498 = vpop.permute.xlu0 %3497
      %3499 = vrot.lane.b32.xlu0 %v2608, 56
      %v3500 = vpop.permute.xlu0 %3499
      %3501 = vrot.lane.b32.xlu0 %v2609, 56
      %v3502 = vpop.permute.xlu0 %3501
      %3503 = vrot.lane.b32.xlu0 %v2610, 56
      %v3504 = vpop.permute.xlu0 %3503
      %3505 = vrot.lane.b32.xlu0 %v2611, 56
      %v3506 = vpop.permute.xlu0 %3505
      %3507 = vrot.lane.b32.xlu0 %v2612, 56
      %v3508 = vpop.permute.xlu0 %3507
      %3573 = vrot.lane.b32.xlu0 %v2613, 64
      %v3574 = vpop.permute.xlu0 %3573
      %3575 = vrot.lane.b32.xlu0 %v2614, 64
      %v3576 = vpop.permute.xlu0 %3575
      %3577 = vrot.lane.b32.xlu0 %v2615, 64
      %v3578 = vpop.permute.xlu0 %3577
      %3579 = vrot.lane.b32.xlu0 %v2616, 64
      %v3580 = vpop.permute.xlu0 %3579
      %3581 = vrot.lane.b32.xlu0 %v2617, 64
      %v3582 = vpop.permute.xlu0 %3581
      %3583 = vrot.lane.b32.xlu0 %v2618, 64
      %v3584 = vpop.permute.xlu0 %3583
      %3585 = vrot.lane.b32.xlu0 %v2619, 64
      %v3586 = vpop.permute.xlu0 %3585
      %3587 = vrot.lane.b32.xlu0 %v2620, 64
      %v3588 = vpop.permute.xlu0 %3587
      %3589 = vrot.lane.b32.xlu0 %v2621, 64
      %v3590 = vpop.permute.xlu0 %3589
      %3591 = vrot.lane.b32.xlu0 %v2622, 64
      %v3592 = vpop.permute.xlu0 %3591
      %3593 = vrot.lane.b32.xlu0 %v2623, 64
      %v3594 = vpop.permute.xlu0 %3593
      %3595 = vrot.lane.b32.xlu0 %v2624, 64
      %v3596 = vpop.permute.xlu0 %3595
      %3597 = vrot.lane.b32.xlu0 %v2625, 64
      %v3598 = vpop.permute.xlu0 %3597
      %3599 = vrot.lane.b32.xlu0 %v2626, 64
      %v3600 = vpop.permute.xlu0 %3599
      %3601 = vrot.lane.b32.xlu0 %v2627, 64
      %v3602 = vpop.permute.xlu0 %3601
      %3603 = vrot.lane.b32.xlu0 %v2628, 64
      %v3604 = vpop.permute.xlu0 %3603
      %3605 = vrot.lane.b32.xlu0 %v2629, 64
      %v3606 = vpop.permute.xlu0 %3605
      %3607 = vrot.lane.b32.xlu0 %v2630, 64
      %v3608 = vpop.permute.xlu0 %3607
      %3609 = vrot.lane.b32.xlu0 %v2631, 64
      %v3610 = vpop.permute.xlu0 %3609
      %3611 = vrot.lane.b32.xlu0 %v2632, 64
      %v3612 = vpop.permute.xlu0 %3611
      %3613 = vrot.lane.b32.xlu0 %v2633, 64
      %v3614 = vpop.permute.xlu0 %3613
      %3615 = vrot.lane.b32.xlu0 %v2634, 64
      %v3616 = vpop.permute.xlu0 %3615
      %3617 = vrot.lane.b32.xlu0 %v2635, 64
      %v3618 = vpop.permute.xlu0 %3617
      %3619 = vrot.lane.b32.xlu0 %v2636, 64
      %v3620 = vpop.permute.xlu0 %3619
      %3621 = vrot.lane.b32.xlu0 %v2637, 64
      %v3622 = vpop.permute.xlu0 %3621
      %3623 = vrot.lane.b32.xlu0 %v2638, 64
      %v3624 = vpop.permute.xlu0 %3623
      %3625 = vrot.lane.b32.xlu0 %v2639, 64
      %v3626 = vpop.permute.xlu0 %3625
      %3627 = vrot.lane.b32.xlu0 %v2640, 64
      %v3628 = vpop.permute.xlu0 %3627
      %3629 = vrot.lane.b32.xlu0 %v2641, 64
      %v3630 = vpop.permute.xlu0 %3629
      %3631 = vrot.lane.b32.xlu0 %v2642, 64
      %v3632 = vpop.permute.xlu0 %3631
      %3633 = vrot.lane.b32.xlu0 %v2643, 64
      %v3634 = vpop.permute.xlu0 %3633
      %3635 = vrot.lane.b32.xlu0 %v2644, 64
      %v3636 = vpop.permute.xlu0 %3635
      %v3669 = vsel %vm254, %v2356, %v2678
      %v3670 = vsel %vm254, %v2357, %v2680
      %v3671 = vsel %vm254, %v2358, %v2682
      %v3672 = vsel %vm254, %v2359, %v2684
      %v3673 = vsel %vm254, %v2360, %v2686
      %v3674 = vsel %vm254, %v2361, %v2688
      %v3675 = vsel %vm254, %v2362, %v2690
      %v3676 = vsel %vm254, %v2363, %v2692
      %v3677 = vsel %vm254, %v2364, %v2694
      %v3678 = vsel %vm254, %v2365, %v2696
      %v3679 = vsel %vm254, %v2366, %v2698
      %v3680 = vsel %vm254, %v2367, %v2700
      %v3681 = vsel %vm254, %v2368, %v2702
      %v3682 = vsel %vm254, %v2369, %v2704
      %v3683 = vsel %vm254, %v2370, %v2706
      %v3684 = vsel %vm254, %v2371, %v2708
      %v3685 = vsel %vm254, %v2372, %v2710
      %v3686 = vsel %vm254, %v2373, %v2712
      %v3687 = vsel %vm254, %v2374, %v2714
      %v3688 = vsel %vm254, %v2375, %v2716
      %v3689 = vsel %vm254, %v2376, %v2718
      %v3690 = vsel %vm254, %v2377, %v2720
      %v3691 = vsel %vm254, %v2378, %v2722
      %v3692 = vsel %vm254, %v2379, %v2724
      %v3693 = vsel %vm254, %v2380, %v2726
      %v3694 = vsel %vm254, %v2381, %v2728
      %v3695 = vsel %vm254, %v2382, %v2730
      %v3696 = vsel %vm254, %v2383, %v2732
      %v3697 = vsel %vm254, %v2384, %v2734
      %v3698 = vsel %vm254, %v2385, %v2736
      %v3699 = vsel %vm254, %v2386, %v2738
      %v3700 = vsel %vm254, %v2387, %v2740
      %vm3701 = vcmask 130048
      %v3702 = vsel %vm3701, %v3669, %v2806
      %v3703 = vsel %vm3701, %v3670, %v2808
      %v3704 = vsel %vm3701, %v3671, %v2810
      %v3705 = vsel %vm3701, %v3672, %v2812
      %v3706 = vsel %vm3701, %v3673, %v2814
      %v3707 = vsel %vm3701, %v3674, %v2816
      %v3708 = vsel %vm3701, %v3675, %v2818
      %v3709 = vsel %vm3701, %v3676, %v2820
      %v3710 = vsel %vm3701, %v3677, %v2822
      %v3711 = vsel %vm3701, %v3678, %v2824
      %v3712 = vsel %vm3701, %v3679, %v2826
      %v3713 = vsel %vm3701, %v3680, %v2828
      %v3714 = vsel %vm3701, %v3681, %v2830
      %v3715 = vsel %vm3701, %v3682, %v2832
      %v3716 = vsel %vm3701, %v3683, %v2834
      %v3717 = vsel %vm3701, %v3684, %v2836
      %v3718 = vsel %vm3701, %v3685, %v2838
      %v3719 = vsel %vm3701, %v3686, %v2840
      %v3720 = vsel %vm3701, %v3687, %v2842
      %v3721 = vsel %vm3701, %v3688, %v2844
      %v3722 = vsel %vm3701, %v3689, %v2846
      %v3723 = vsel %vm3701, %v3690, %v2848
      %v3724 = vsel %vm3701, %v3691, %v2850
      %v3725 = vsel %vm3701, %v3692, %v2852
      %v3726 = vsel %vm3701, %v3693, %v2854
      %v3727 = vsel %vm3701, %v3694, %v2856
      %v3728 = vsel %vm3701, %v3695, %v2858
      %v3729 = vsel %vm3701, %v3696, %v2860
      %v3730 = vsel %vm3701, %v3697, %v2862
      %v3731 = vsel %vm3701, %v3698, %v2864
      %v3732 = vsel %vm3701, %v3699, %v2866
      %v3733 = vsel %vm3701, %v3700, %v2868
      %v3734 = vsel %vm1720, %v3702, %v2934
      %v3735 = vsel %vm1720, %v3703, %v2936
      %v3736 = vsel %vm1720, %v3704, %v2938
      %v3737 = vsel %vm1720, %v3705, %v2940
      %v3738 = vsel %vm1720, %v3706, %v2942
      %v3739 = vsel %vm1720, %v3707, %v2944
      %v3740 = vsel %vm1720, %v3708, %v2946
      %v3741 = vsel %vm1720, %v3709, %v2948
      %v3742 = vsel %vm1720, %v3710, %v2950
      %v3743 = vsel %vm1720, %v3711, %v2952
      %v3744 = vsel %vm1720, %v3712, %v2954
      %v3745 = vsel %vm1720, %v3713, %v2956
      %v3746 = vsel %vm1720, %v3714, %v2958
      %v3747 = vsel %vm1720, %v3715, %v2960
      %v3748 = vsel %vm1720, %v3716, %v2962
      %v3749 = vsel %vm1720, %v3717, %v2964
      %v3750 = vsel %vm1720, %v3718, %v2966
      %v3751 = vsel %vm1720, %v3719, %v2968
      %v3752 = vsel %vm1720, %v3720, %v2970
      %v3753 = vsel %vm1720, %v3721, %v2972
      %v3754 = vsel %vm1720, %v3722, %v2974
      %v3755 = vsel %vm1720, %v3723, %v2976
      %v3756 = vsel %vm1720, %v3724, %v2978
      %v3757 = vsel %vm1720, %v3725, %v2980
      %v3758 = vsel %vm1720, %v3726, %v2982
      %v3759 = vsel %vm1720, %v3727, %v2984
      %v3760 = vsel %vm1720, %v3728, %v2986
      %v3761 = vsel %vm1720, %v3729, %v2988
      %v3762 = vsel %vm1720, %v3730, %v2990
      %v3763 = vsel %vm1720, %v3731, %v2992
      %v3764 = vsel %vm1720, %v3732, %v2994
      %v3765 = vsel %vm1720, %v3733, %v2996
      %vm3766 = vcmask 261120
      %v3767 = vsel %vm3766, %v3734, %v3062
      %v3768 = vsel %vm3766, %v3735, %v3064
      %v3769 = vsel %vm3766, %v3736, %v3066
      %v3770 = vsel %vm3766, %v3737, %v3068
      %v3771 = vsel %vm3766, %v3738, %v3070
      %v3772 = vsel %vm3766, %v3739, %v3072
      %v3773 = vsel %vm3766, %v3740, %v3074
      %v3774 = vsel %vm3766, %v3741, %v3076
      %v3775 = vsel %vm3766, %v3742, %v3078
      %v3776 = vsel %vm3766, %v3743, %v3080
      %v3777 = vsel %vm3766, %v3744, %v3082
      %v3778 = vsel %vm3766, %v3745, %v3084
      %v3779 = vsel %vm3766, %v3746, %v3086
      %v3780 = vsel %vm3766, %v3747, %v3088
      %v3781 = vsel %vm3766, %v3748, %v3090
      %v3782 = vsel %vm3766, %v3749, %v3092
      %v3783 = vsel %vm3766, %v3750, %v3094
      %v3784 = vsel %vm3766, %v3751, %v3096
      %v3785 = vsel %vm3766, %v3752, %v3098
      %v3786 = vsel %vm3766, %v3753, %v3100
      %v3787 = vsel %vm3766, %v3754, %v3102
      %v3788 = vsel %vm3766, %v3755, %v3104
      %v3789 = vsel %vm3766, %v3756, %v3106
      %v3790 = vsel %vm3766, %v3757, %v3108
      %v3791 = vsel %vm3766, %v3758, %v3110
      %v3792 = vsel %vm3766, %v3759, %v3112
      %v3793 = vsel %vm3766, %v3760, %v3114
      %v3794 = vsel %vm3766, %v3761, %v3116
      %v3795 = vsel %vm3766, %v3762, %v3118
      %v3796 = vsel %vm3766, %v3763, %v3120
      %v3797 = vsel %vm3766, %v3764, %v3122
      %v3798 = vsel %vm3766, %v3765, %v3124
      %vm3799 = vcmask 326656
      %v3800 = vsel %vm3799, %v3767, %v3190
      %v3801 = vsel %vm3799, %v3768, %v3192
      %v3802 = vsel %vm3799, %v3769, %v3194
      %v3803 = vsel %vm3799, %v3770, %v3196
      %v3804 = vsel %vm3799, %v3771, %v3198
      %v3805 = vsel %vm3799, %v3772, %v3200
      %v3806 = vsel %vm3799, %v3773, %v3202
      %v3807 = vsel %vm3799, %v3774, %v3204
      %v3808 = vsel %vm3799, %v3775, %v3206
      %v3809 = vsel %vm3799, %v3776, %v3208
      %v3810 = vsel %vm3799, %v3777, %v3210
      %v3811 = vsel %vm3799, %v3778, %v3212
      %v3812 = vsel %vm3799, %v3779, %v3214
      %v3813 = vsel %vm3799, %v3780, %v3216
      %v3814 = vsel %vm3799, %v3781, %v3218
      %v3815 = vsel %vm3799, %v3782, %v3220
      %v3816 = vsel %vm3799, %v3783, %v3222
      %v3817 = vsel %vm3799, %v3784, %v3224
      %v3818 = vsel %vm3799, %v3785, %v3226
      %v3819 = vsel %vm3799, %v3786, %v3228
      %v3820 = vsel %vm3799, %v3787, %v3230
      %v3821 = vsel %vm3799, %v3788, %v3232
      %v3822 = vsel %vm3799, %v3789, %v3234
      %v3823 = vsel %vm3799, %v3790, %v3236
      %v3824 = vsel %vm3799, %v3791, %v3238
      %v3825 = vsel %vm3799, %v3792, %v3240
      %v3826 = vsel %vm3799, %v3793, %v3242
      %v3827 = vsel %vm3799, %v3794, %v3244
      %v3828 = vsel %vm3799, %v3795, %v3246
      %v3829 = vsel %vm3799, %v3796, %v3248
      %v3830 = vsel %vm3799, %v3797, %v3250
      %v3831 = vsel %vm3799, %v3798, %v3252
      %v3832 = vsel %vm1786, %v3800, %v3318
      %v3833 = vsel %vm1786, %v3801, %v3320
      %v3834 = vsel %vm1786, %v3802, %v3322
      %v3835 = vsel %vm1786, %v3803, %v3324
      %v3836 = vsel %vm1786, %v3804, %v3326
      %v3837 = vsel %vm1786, %v3805, %v3328
      %v3838 = vsel %vm1786, %v3806, %v3330
      %v3839 = vsel %vm1786, %v3807, %v3332
      %v3840 = vsel %vm1786, %v3808, %v3334
      %v3841 = vsel %vm1786, %v3809, %v3336
      %v3842 = vsel %vm1786, %v3810, %v3338
      %v3843 = vsel %vm1786, %v3811, %v3340
      %v3844 = vsel %vm1786, %v3812, %v3342
      %v3845 = vsel %vm1786, %v3813, %v3344
      %v3846 = vsel %vm1786, %v3814, %v3346
      %v3847 = vsel %vm1786, %v3815, %v3348
      %v3848 = vsel %vm1786, %v3816, %v3350
      %v3849 = vsel %vm1786, %v3817, %v3352
      %v3850 = vsel %vm1786, %v3818, %v3354
      %v3851 = vsel %vm1786, %v3819, %v3356
      %v3852 = vsel %vm1786, %v3820, %v3358
      %v3853 = vsel %vm1786, %v3821, %v3360
      %v3854 = vsel %vm1786, %v3822, %v3362
      %v3855 = vsel %vm1786, %v3823, %v3364
      %v3856 = vsel %vm1786, %v3824, %v3366
      %v3857 = vsel %vm1786, %v3825, %v3368
      %v3858 = vsel %vm1786, %v3826, %v3370
      %v3859 = vsel %vm1786, %v3827, %v3372
      %v3860 = vsel %vm1786, %v3828, %v3374
      %v3861 = vsel %vm1786, %v3829, %v3376
      %v3862 = vsel %vm1786, %v3830, %v3378
      %v3863 = vsel %vm1786, %v3831, %v3380
      %vm3864 = vcmask 457728
      %v3865 = vsel %vm3864, %v3832, %v3446
      %v3866 = vsel %vm3864, %v3833, %v3448
      %v3867 = vsel %vm3864, %v3834, %v3450
      %v3868 = vsel %vm3864, %v3835, %v3452
      %v3869 = vsel %vm3864, %v3836, %v3454
      %v3870 = vsel %vm3864, %v3837, %v3456
      %v3871 = vsel %vm3864, %v3838, %v3458
      %v3872 = vsel %vm3864, %v3839, %v3460
      %v3873 = vsel %vm3864, %v3840, %v3462
      %v3874 = vsel %vm3864, %v3841, %v3464
      %v3875 = vsel %vm3864, %v3842, %v3466
      %v3876 = vsel %vm3864, %v3843, %v3468
      %v3877 = vsel %vm3864, %v3844, %v3470
      %v3878 = vsel %vm3864, %v3845, %v3472
      %v3879 = vsel %vm3864, %v3846, %v3474
      %v3880 = vsel %vm3864, %v3847, %v3476
      %v3881 = vsel %vm3864, %v3848, %v3478
      %v3882 = vsel %vm3864, %v3849, %v3480
      %v3883 = vsel %vm3864, %v3850, %v3482
      %v3884 = vsel %vm3864, %v3851, %v3484
      %v3885 = vsel %vm3864, %v3852, %v3486
      %v3886 = vsel %vm3864, %v3853, %v3488
      %v3887 = vsel %vm3864, %v3854, %v3490
      %v3888 = vsel %vm3864, %v3855, %v3492
      %v3889 = vsel %vm3864, %v3856, %v3494
      %v3890 = vsel %vm3864, %v3857, %v3496
      %v3891 = vsel %vm3864, %v3858, %v3498
      %v3892 = vsel %vm3864, %v3859, %v3500
      %v3893 = vsel %vm3864, %v3860, %v3502
      %v3894 = vsel %vm3864, %v3861, %v3504
      %v3895 = vsel %vm3864, %v3862, %v3506
      %v3896 = vsel %vm3864, %v3863, %v3508
      %vm3897 = vcmask 523264
      %v3898 = vsel %vm3897, %v3865, %v3574
      %v3899 = vsel %vm3897, %v3866, %v3576
      %v3900 = vsel %vm3897, %v3867, %v3578
      %v3901 = vsel %vm3897, %v3868, %v3580
      %v3902 = vsel %vm3897, %v3869, %v3582
      %v3903 = vsel %vm3897, %v3870, %v3584
      %v3904 = vsel %vm3897, %v3871, %v3586
      %v3905 = vsel %vm3897, %v3872, %v3588
      %v3906 = vsel %vm3897, %v3873, %v3590
      %v3907 = vsel %vm3897, %v3874, %v3592
      %v3908 = vsel %vm3897, %v3875, %v3594
      %v3909 = vsel %vm3897, %v3876, %v3596
      %v3910 = vsel %vm3897, %v3877, %v3598
      %v3911 = vsel %vm3897, %v3878, %v3600
      %v3912 = vsel %vm3897, %v3879, %v3602
      %v3913 = vsel %vm3897, %v3880, %v3604
      %v3914 = vsel %vm3897, %v3881, %v3606
      %v3915 = vsel %vm3897, %v3882, %v3608
      %v3916 = vsel %vm3897, %v3883, %v3610
      %v3917 = vsel %vm3897, %v3884, %v3612
      %v3918 = vsel %vm3897, %v3885, %v3614
      %v3919 = vsel %vm3897, %v3886, %v3616
      %v3920 = vsel %vm3897, %v3887, %v3618
      %v3921 = vsel %vm3897, %v3888, %v3620
      %v3922 = vsel %vm3897, %v3889, %v3622
      %v3923 = vsel %vm3897, %v3890, %v3624
      %v3924 = vsel %vm3897, %v3891, %v3626
      %v3925 = vsel %vm3897, %v3892, %v3628
      %v3926 = vsel %vm3897, %v3893, %v3630
      %v3927 = vsel %vm3897, %v3894, %v3632
      %v3928 = vsel %vm3897, %v3895, %v3634
      %v3929 = vsel %vm3897, %v3896, %v3636
      %v3930 = vld [vmem:[%s2] sm:$0xff]
      %v3931 = vld [vmem:[%s2 + $0x8] sm:$0xff]
      %v3932 = vld [vmem:[%s2 + $0x10] sm:$0xff]
      %v3933 = vld [vmem:[%s2 + $0x18] sm:$0xff]
      %v3934 = vld [vmem:[%s2 + $0x20] sm:$0xff]
      %v3935 = vld [vmem:[%s2 + $0x28] sm:$0xff]
      %v3936 = vld [vmem:[%s2 + $0x30] sm:$0xff]
      %v3937 = vld [vmem:[%s2 + $0x38] sm:$0xff]
      %v3938 = vld [vmem:[%s2 + $0x40] sm:$0xff]
      %v3940 = vsel %vm1852, %v3898, 0
      %v3943 = vsel %vm1852, %v3899, 0
      %v3946 = vsel %vm1852, %v3900, 0
      %v3949 = vsel %vm1852, %v3901, 0
      %v3952 = vsel %vm1852, %v3902, 0
      %v3955 = vsel %vm1852, %v3903, 0
      %v3958 = vsel %vm1852, %v3904, 0
      %v3961 = vsel %vm1852, %v3905, 0
      %v3964 = vsel %vm1852, %v3906, 0
      %v3967 = vsel %vm1852, %v3907, 0
      %v3970 = vsel %vm1852, %v3908, 0
      %v3973 = vsel %vm1852, %v3909, 0
      %v3976 = vsel %vm1852, %v3910, 0
      %v3979 = vsel %vm1852, %v3911, 0
      %v3982 = vsel %vm1852, %v3912, 0
      %v3985 = vsel %vm1852, %v3913, 0
      %v3988 = vsel %vm1852, %v3914, 0
      %v3991 = vsel %vm1852, %v3915, 0
      %v3994 = vsel %vm1852, %v3916, 0
      %v3997 = vsel %vm1852, %v3917, 0
      %v4000 = vsel %vm1852, %v3918, 0
      %v4003 = vsel %vm1852, %v3919, 0
      %v4006 = vsel %vm1852, %v3920, 0
      %v4009 = vsel %vm1852, %v3921, 0
      %v4012 = vsel %vm1852, %v3922, 0
      %v4015 = vsel %vm1852, %v3923, 0
      %v4018 = vsel %vm1852, %v3924, 0
      %v4021 = vsel %vm1852, %v3925, 0
      %v4024 = vsel %vm1852, %v3926, 0
      %v4027 = vsel %vm1852, %v3927, 0
      %v4030 = vsel %vm1852, %v3928, 0
      %v4033 = vsel %vm1852, %v3929, 0
      %4035 = vmatprep.subr.mxu0 0.0
      %4036 = vmatpush1.msra.mxu0 %v3930
      %4037 = vmatprep.subr.mxu0 0.0
      %4038 = vmatpush1.msra.mxu0 %v3931
      %4039 = vmatprep.subr.mxu0 0.0
      %4040 = vmatpush1.msra.mxu0 %v3932
      %4041 = vmatprep.subr.mxu0 0.0
      %4042 = vmatpush1.msra.mxu0 %v3933
      %4043 = vmatprep.subr.mxu0 0.0
      %4044 = vmatpush1.msra.mxu0 %v3934
      %4045 = vmatprep.subr.mxu0 0.0
      %4046 = vmatpush1.msra.mxu0 %v3935
      %4047 = vmatprep.subr.mxu0 0.0
      %4048 = vmatpush1.msra.mxu0 %v3936
      %4049 = vmatprep.subr.mxu0 0.0
      %4050 = vmatpush1.msra.mxu0 %v3937
      %4051 = vmatprep.subr.mxu0 0.0
      %4052 = vmatpush1.msra.mxu0 %v3938
      %4053 = vmatprep.subr.mxu0 0.0
      %4054 = vmatpush1.msra.mxu0 0.0
      %4055 = vmatprep.subr.mxu0 0.0
      %4056 = vmatpush1.msra.mxu0 0.0
      %4057 = vmatprep.subr.mxu0 0.0
      %4058 = vmatpush1.msra.mxu0 0.0
      %4059 = vmatprep.subr.mxu0 0.0
      %4060 = vmatpush1.msra.mxu0 0.0
      %4061 = vmatprep.subr.mxu0 0.0
      %4062 = vmatpush1.msra.mxu0 0.0
      %4063 = vmatprep.subr.mxu0 0.0
      %4064 = vmatpush1.msra.mxu0 0.0
      %4065 = vmatprep.subr.mxu0 0.0
      %4066 = vmatpush1.msra.mxu0 0.0
      %4067 = vmatprep.subr.mxu0 0.0
      %4068 = vmatpush1.msra.mxu0 0.0
      %4069 = vmatprep.subr.mxu0 0.0
      %4070 = vmatpush1.msra.mxu0 0.0
      %4071 = vmatprep.subr.mxu0 0.0
      %4072 = vmatpush1.msra.mxu0 0.0
      %4073 = vmatprep.subr.mxu0 0.0
      %4074 = vmatpush1.msra.mxu0 0.0
      %4075 = vmatprep.subr.mxu0 0.0
      %4076 = vmatpush1.msra.mxu0 0.0
      %4077 = vmatprep.subr.mxu0 0.0
      %4078 = vmatpush1.msra.mxu0 0.0
      %4079 = vmatprep.subr.mxu0 0.0
      %4080 = vmatpush1.msra.mxu0 0.0
      %4081 = vmatprep.subr.mxu0 0.0
      %4082 = vmatpush1.msra.mxu0 0.0
      %4083 = vmatprep.subr.mxu0 0.0
      %4084 = vmatpush1.msra.mxu0 0.0
      %4085 = vmatprep.subr.mxu0 0.0
      %4086 = vmatpush1.msra.mxu0 0.0
      %4087 = vmatprep.subr.mxu0 0.0
      %4088 = vmatpush1.msra.mxu0 0.0
      %4089 = vmatprep.subr.mxu0 0.0
      %4090 = vmatpush1.msra.mxu0 0.0
      %4091 = vmatprep.subr.mxu0 0.0
      %4092 = vmatpush1.msra.mxu0 0.0
      %4093 = vmatprep.subr.mxu0 0.0
      %4094 = vmatpush1.msra.mxu0 0.0
      %4095 = vmatprep.subr.mxu0 0.0
      %4096 = vmatpush1.msra.mxu0 0.0
      %4097 = vmatprep.subr.mxu0 0.0
      %4098 = vmatpush1.msra.mxu0 0.0
      %4099 = vmatprep.mubr.f32.mxu0 0.0
      %4100 = vmatmul.mubr.f32.gmra.mrb[0].mxu0 %v3940
      %v4101 = vpop.f32.mrb[0].mxu0
      %v4102 = vadd.f32 0.0, %v4101
      %v4103 = vpop.f32.mrb[0].mxu0
      %4104 = vmatprep.mubr.f32.mxu0 0.0
      %4105 = vmatmul.mubr.f32.gmra.mrb[0].mxu0 %v3943
      %v4106 = vpop.f32.mrb[0].mxu0
      %v4107 = vadd.f32 0.0, %v4106
      %v4108 = vpop.f32.mrb[0].mxu0
      %4109 = vmatprep.mubr.f32.mxu0 0.0
      %4110 = vmatmul.mubr.f32.gmra.mrb[0].mxu0 %v3946
      %v4111 = vpop.f32.mrb[0].mxu0
      %v4112 = vadd.f32 0.0, %v4111
      %v4113 = vpop.f32.mrb[0].mxu0
      %4114 = vmatprep.mubr.f32.mxu0 0.0
      %4115 = vmatmul.mubr.f32.gmra.mrb[0].mxu0 %v3949
      %v4116 = vpop.f32.mrb[0].mxu0
      %v4117 = vadd.f32 0.0, %v4116
      %v4118 = vpop.f32.mrb[0].mxu0
      %4119 = vmatprep.mubr.f32.mxu0 0.0
      %4120 = vmatmul.mubr.f32.gmra.mrb[0].mxu0 %v3952
      %v4121 = vpop.f32.mrb[0].mxu0
      %v4122 = vadd.f32 0.0, %v4121
      %v4123 = vpop.f32.mrb[0].mxu0
      %4124 = vmatprep.mubr.f32.mxu0 0.0
      %4125 = vmatmul.mubr.f32.gmra.mrb[0].mxu0 %v3955
      %v4126 = vpop.f32.mrb[0].mxu0
      %v4127 = vadd.f32 0.0, %v4126
      %v4128 = vpop.f32.mrb[0].mxu0
      %4129 = vmatprep.mubr.f32.mxu0 0.0
      %4130 = vmatmul.mubr.f32.gmra.mrb[0].mxu0 %v3958
      %v4131 = vpop.f32.mrb[0].mxu0
      %v4132 = vadd.f32 0.0, %v4131
      %v4133 = vpop.f32.mrb[0].mxu0
      %4134 = vmatprep.mubr.f32.mxu0 0.0
      %4135 = vmatmul.mubr.f32.gmra.mrb[0].mxu0 %v3961
      %v4136 = vpop.f32.mrb[0].mxu0
      %v4137 = vadd.f32 0.0, %v4136
      %v4138 = vpop.f32.mrb[0].mxu0
      %4139 = vmatprep.mubr.f32.mxu0 0.0
      %4140 = vmatmul.mubr.f32.gmra.mrb[0].mxu0 %v3964
      %v4141 = vpop.f32.mrb[0].mxu0
      %v4142 = vadd.f32 0.0, %v4141
      %v4143 = vpop.f32.mrb[0].mxu0
      %4144 = vmatprep.mubr.f32.mxu0 0.0
      %4145 = vmatmul.mubr.f32.gmra.mrb[0].mxu0 %v3967
      %v4146 = vpop.f32.mrb[0].mxu0
      %v4147 = vadd.f32 0.0, %v4146
      %v4148 = vpop.f32.mrb[0].mxu0
      %4149 = vmatprep.mubr.f32.mxu0 0.0
      %4150 = vmatmul.mubr.f32.gmra.mrb[0].mxu0 %v3970
      %v4151 = vpop.f32.mrb[0].mxu0
      %v4152 = vadd.f32 0.0, %v4151
      %v4153 = vpop.f32.mrb[0].mxu0
      %4154 = vmatprep.mubr.f32.mxu0 0.0
      %4155 = vmatmul.mubr.f32.gmra.mrb[0].mxu0 %v3973
      %v4156 = vpop.f32.mrb[0].mxu0
      %v4157 = vadd.f32 0.0, %v4156
      %v4158 = vpop.f32.mrb[0].mxu0
      %4159 = vmatprep.mubr.f32.mxu0 0.0
      %4160 = vmatmul.mubr.f32.gmra.mrb[0].mxu0 %v3976
      %v4161 = vpop.f32.mrb[0].mxu0
      %v4162 = vadd.f32 0.0, %v4161
      %v4163 = vpop.f32.mrb[0].mxu0
      %4164 = vmatprep.mubr.f32.mxu0 0.0
      %4165 = vmatmul.mubr.f32.gmra.mrb[0].mxu0 %v3979
      %v4166 = vpop.f32.mrb[0].mxu0
      %v4167 = vadd.f32 0.0, %v4166
      %v4168 = vpop.f32.mrb[0].mxu0
      %4169 = vmatprep.mubr.f32.mxu0 0.0
      %4170 = vmatmul.mubr.f32.gmra.mrb[0].mxu0 %v3982
      %v4171 = vpop.f32.mrb[0].mxu0
      %v4172 = vadd.f32 0.0, %v4171
      %v4173 = vpop.f32.mrb[0].mxu0
      %4174 = vmatprep.mubr.f32.mxu0 0.0
      %4175 = vmatmul.mubr.f32.gmra.mrb[0].mxu0 %v3985
      %v4176 = vpop.f32.mrb[0].mxu0
      %v4177 = vadd.f32 0.0, %v4176
      %v4178 = vpop.f32.mrb[0].mxu0
      %4179 = vmatprep.mubr.f32.mxu0 0.0
      %4180 = vmatmul.mubr.f32.gmra.mrb[0].mxu0 %v3988
      %v4181 = vpop.f32.mrb[0].mxu0
      %v4182 = vadd.f32 0.0, %v4181
      %v4183 = vpop.f32.mrb[0].mxu0
      %4184 = vmatprep.mubr.f32.mxu0 0.0
      %4185 = vmatmul.mubr.f32.gmra.mrb[0].mxu0 %v3991
      %v4186 = vpop.f32.mrb[0].mxu0
      %v4187 = vadd.f32 0.0, %v4186
      %v4188 = vpop.f32.mrb[0].mxu0
      %4189 = vmatprep.mubr.f32.mxu0 0.0
      %4190 = vmatmul.mubr.f32.gmra.mrb[0].mxu0 %v3994
      %v4191 = vpop.f32.mrb[0].mxu0
      %v4192 = vadd.f32 0.0, %v4191
      %v4193 = vpop.f32.mrb[0].mxu0
      %4194 = vmatprep.mubr.f32.mxu0 0.0
      %4195 = vmatmul.mubr.f32.gmra.mrb[0].mxu0 %v3997
      %v4196 = vpop.f32.mrb[0].mxu0
      %v4197 = vadd.f32 0.0, %v4196
      %v4198 = vpop.f32.mrb[0].mxu0
      %4199 = vmatprep.mubr.f32.mxu0 0.0
      %4200 = vmatmul.mubr.f32.gmra.mrb[0].mxu0 %v4000
      %v4201 = vpop.f32.mrb[0].mxu0
      %v4202 = vadd.f32 0.0, %v4201
      %v4203 = vpop.f32.mrb[0].mxu0
      %4204 = vmatprep.mubr.f32.mxu0 0.0
      %4205 = vmatmul.mubr.f32.gmra.mrb[0].mxu0 %v4003
      %v4206 = vpop.f32.mrb[0].mxu0
      %v4207 = vadd.f32 0.0, %v4206
      %v4208 = vpop.f32.mrb[0].mxu0
      %4209 = vmatprep.mubr.f32.mxu0 0.0
      %4210 = vmatmul.mubr.f32.gmra.mrb[0].mxu0 %v4006
      %v4211 = vpop.f32.mrb[0].mxu0
      %v4212 = vadd.f32 0.0, %v4211
      %v4213 = vpop.f32.mrb[0].mxu0
      %4214 = vmatprep.mubr.f32.mxu0 0.0
      %4215 = vmatmul.mubr.f32.gmra.mrb[0].mxu0 %v4009
      %v4216 = vpop.f32.mrb[0].mxu0
      %v4217 = vadd.f32 0.0, %v4216
      %v4218 = vpop.f32.mrb[0].mxu0
      %4219 = vmatprep.mubr.f32.mxu0 0.0
      %4220 = vmatmul.mubr.f32.gmra.mrb[0].mxu0 %v4012
      %v4221 = vpop.f32.mrb[0].mxu0
      %v4222 = vadd.f32 0.0, %v4221
      %v4223 = vpop.f32.mrb[0].mxu0
      %4224 = vmatprep.mubr.f32.mxu0 0.0
      %4225 = vmatmul.mubr.f32.gmra.mrb[0].mxu0 %v4015
      %v4226 = vpop.f32.mrb[0].mxu0
      %v4227 = vadd.f32 0.0, %v4226
      %v4228 = vpop.f32.mrb[0].mxu0
      %4229 = vmatprep.mubr.f32.mxu0 0.0
      %4230 = vmatmul.mubr.f32.gmra.mrb[0].mxu0 %v4018
      %v4231 = vpop.f32.mrb[0].mxu0
      %v4232 = vadd.f32 0.0, %v4231
      %v4233 = vpop.f32.mrb[0].mxu0
      %4234 = vmatprep.mubr.f32.mxu0 0.0
      %4235 = vmatmul.mubr.f32.gmra.mrb[0].mxu0 %v4021
      %v4236 = vpop.f32.mrb[0].mxu0
      %v4237 = vadd.f32 0.0, %v4236
      %v4238 = vpop.f32.mrb[0].mxu0
      %4239 = vmatprep.mubr.f32.mxu0 0.0
      %4240 = vmatmul.mubr.f32.gmra.mrb[0].mxu0 %v4024
      %v4241 = vpop.f32.mrb[0].mxu0
      %v4242 = vadd.f32 0.0, %v4241
      %v4243 = vpop.f32.mrb[0].mxu0
      %4244 = vmatprep.mubr.f32.mxu0 0.0
      %4245 = vmatmul.mubr.f32.gmra.mrb[0].mxu0 %v4027
      %v4246 = vpop.f32.mrb[0].mxu0
      %v4247 = vadd.f32 0.0, %v4246
      %v4248 = vpop.f32.mrb[0].mxu0
      %4249 = vmatprep.mubr.f32.mxu0 0.0
      %4250 = vmatmul.mubr.f32.gmra.mrb[0].mxu0 %v4030
      %v4251 = vpop.f32.mrb[0].mxu0
      %v4252 = vadd.f32 0.0, %v4251
      %v4253 = vpop.f32.mrb[0].mxu0
      %4254 = vmatprep.mubr.f32.mxu0 0.0
      %4255 = vmatmul.mubr.f32.gmra.mrb[0].mxu0 %v4033
      %v4256 = vpop.f32.mrb[0].mxu0
      %v4257 = vadd.f32 0.0, %v4256
      %v4258 = vpop.f32.mrb[0].mxu0
      %4259 = vdwg.mxu0
      %v4260 = vmax.f32 %v4102, 0.0
      %v4261 = vmax.f32 %v4107, 0.0
      %v4262 = vmax.f32 %v4112, 0.0
      %v4263 = vmax.f32 %v4117, 0.0
      %v4264 = vmax.f32 %v4122, 0.0
      %v4265 = vmax.f32 %v4127, 0.0
      %v4266 = vmax.f32 %v4132, 0.0
      %v4267 = vmax.f32 %v4137, 0.0
      %v4268 = vmax.f32 %v4142, 0.0
      %v4269 = vmax.f32 %v4147, 0.0
      %v4270 = vmax.f32 %v4152, 0.0
      %v4271 = vmax.f32 %v4157, 0.0
      %v4272 = vmax.f32 %v4162, 0.0
      %v4273 = vmax.f32 %v4167, 0.0
      %v4274 = vmax.f32 %v4172, 0.0
      %v4275 = vmax.f32 %v4177, 0.0
      %v4276 = vmax.f32 %v4182, 0.0
      %v4277 = vmax.f32 %v4187, 0.0
      %v4278 = vmax.f32 %v4192, 0.0
      %v4279 = vmax.f32 %v4197, 0.0
      %v4280 = vmax.f32 %v4202, 0.0
      %v4281 = vmax.f32 %v4207, 0.0
      %v4282 = vmax.f32 %v4212, 0.0
      %v4283 = vmax.f32 %v4217, 0.0
      %v4284 = vmax.f32 %v4222, 0.0
      %v4285 = vmax.f32 %v4227, 0.0
      %v4286 = vmax.f32 %v4232, 0.0
      %v4287 = vmax.f32 %v4237, 0.0
      %v4288 = vmax.f32 %v4242, 0.0
      %v4289 = vmax.f32 %v4247, 0.0
      %v4290 = vmax.f32 %v4252, 0.0
      %v4291 = vmax.f32 %v4257, 0.0
      %4292 = vst.msk [vmem:[%s2323 + $0x1] sm:$0xff] %vm254, %v4260
      %4293 = vst.msk [vmem:[%s2323 + $0x9] sm:$0xff] %vm254, %v4261
      %4294 = vst.msk [vmem:[%s2323 + $0x19] sm:$0xff] %vm254, %v4262
      %4295 = vst.msk [vmem:[%s2323 + $0x21] sm:$0xff] %vm254, %v4263
      %4296 = vst.msk [vmem:[%s2323 + $0x31] sm:$0xff] %vm254, %v4264
      %4297 = vst.msk [vmem:[%s2323 + $0x39] sm:$0xff] %vm254, %v4265
      %4298 = vst.msk [vmem:[%s2323 + $0x49] sm:$0xff] %vm254, %v4266
      %4299 = vst.msk [vmem:[%s2323 + $0x51] sm:$0xff] %vm254, %v4267
      %4300 = vst.msk [vmem:[%s2323 + $0x61] sm:$0xff] %vm254, %v4268
      %4301 = vst.msk [vmem:[%s2323 + $0x69] sm:$0xff] %vm254, %v4269
      %4302 = vst.msk [vmem:[%s2323 + $0x79] sm:$0xff] %vm254, %v4270
      %4303 = vst.msk [vmem:[%s2323 + $0x81] sm:$0xff] %vm254, %v4271
      %4304 = vst.msk [vmem:[%s2323 + $0x91] sm:$0xff] %vm254, %v4272
      %4305 = vst.msk [vmem:[%s2323 + $0x99] sm:$0xff] %vm254, %v4273
      %4306 = vst.msk [vmem:[%s2323 + $0xa9] sm:$0xff] %vm254, %v4274
      %4307 = vst.msk [vmem:[%s2323 + $0xb1] sm:$0xff] %vm254, %v4275
      %4308 = vst.msk [vmem:[%s2323 + $0xc1] sm:$0xff] %vm254, %v4276
      %4309 = vst.msk [vmem:[%s2323 + $0xc9] sm:$0xff] %vm254, %v4277
      %4310 = vst.msk [vmem:[%s2323 + $0xd9] sm:$0xff] %vm254, %v4278
      %4311 = vst.msk [vmem:[%s2323 + $0xe1] sm:$0xff] %vm254, %v4279
      %4312 = vst.msk [vmem:[%s2323 + $0xf1] sm:$0xff] %vm254, %v4280
      %4313 = vst.msk [vmem:[%s2323 + $0xf9] sm:$0xff] %vm254, %v4281
      %4314 = vst.msk [vmem:[%s2323 + $0x109] sm:$0xff] %vm254, %v4282
      %4315 = vst.msk [vmem:[%s2323 + $0x111] sm:$0xff] %vm254, %v4283
      %4316 = vst.msk [vmem:[%s2323 + $0x121] sm:$0xff] %vm254, %v4284
      %4317 = vst.msk [vmem:[%s2323 + $0x129] sm:$0xff] %vm254, %v4285
      %4318 = vst.msk [vmem:[%s2323 + $0x139] sm:$0xff] %vm254, %v4286
      %4319 = vst.msk [vmem:[%s2323 + $0x141] sm:$0xff] %vm254, %v4287
      %4320 = vst.msk [vmem:[%s2323 + $0x151] sm:$0xff] %vm254, %v4288
      %4321 = vst.msk [vmem:[%s2323 + $0x159] sm:$0xff] %vm254, %v4289
      %4322 = vst.msk [vmem:[%s2323 + $0x169] sm:$0xff] %vm254, %v4290
      %4323 = vst.msk [vmem:[%s2323 + $0x171] sm:$0xff] %vm254, %v4291
      %v4324 = vld [vmem:[#allocation3] sm:$0xff]
      %v4325 = vld [vmem:[#allocation3 + $0x8] sm:$0xff]
      %v4326 = vld [vmem:[#allocation3 + $0x18] sm:$0xff]
      %v4327 = vld [vmem:[#allocation3 + $0x20] sm:$0xff]
      %v4328 = vld [vmem:[#allocation3 + $0x30] sm:$0xff]
      %v4329 = vld [vmem:[#allocation3 + $0x38] sm:$0xff]
      %v4330 = vld [vmem:[#allocation3 + $0x48] sm:$0xff]
      %v4331 = vld [vmem:[#allocation3 + $0x50] sm:$0xff]
      %v4332 = vld [vmem:[#allocation3 + $0x60] sm:$0xff]
      %v4333 = vld [vmem:[#allocation3 + $0x68] sm:$0xff]
      %v4334 = vld [vmem:[#allocation3 + $0x78] sm:$0xff]
      %v4335 = vld [vmem:[#allocation3 + $0x80] sm:$0xff]
      %v4336 = vld [vmem:[#allocation3 + $0x90] sm:$0xff]
      %v4337 = vld [vmem:[#allocation3 + $0x98] sm:$0xff]
      %v4338 = vld [vmem:[#allocation3 + $0xa8] sm:$0xff]
      %v4339 = vld [vmem:[#allocation3 + $0xb0] sm:$0xff]
      %v4340 = vld [vmem:[#allocation3 + $0xc0] sm:$0xff]
      %v4341 = vld [vmem:[#allocation3 + $0xc8] sm:$0xff]
      %v4342 = vld [vmem:[#allocation3 + $0xd8] sm:$0xff]
      %v4343 = vld [vmem:[#allocation3 + $0xe0] sm:$0xff]
      %v4344 = vld [vmem:[#allocation3 + $0xf0] sm:$0xff]
      %v4345 = vld [vmem:[#allocation3 + $0xf8] sm:$0xff]
      %v4346 = vld [vmem:[#allocation3 + $0x108] sm:$0xff]
      %v4347 = vld [vmem:[#allocation3 + $0x110] sm:$0xff]
      %v4348 = vld [vmem:[#allocation3 + $0x120] sm:$0xff]
      %v4349 = vld [vmem:[#allocation3 + $0x128] sm:$0xff]
      %v4350 = vld [vmem:[#allocation3 + $0x138] sm:$0xff]
      %v4351 = vld [vmem:[#allocation3 + $0x140] sm:$0xff]
      %v4352 = vld [vmem:[#allocation3 + $0x150] sm:$0xff]
      %v4353 = vld [vmem:[#allocation3 + $0x158] sm:$0xff]
      %v4354 = vld [vmem:[#allocation3 + $0x168] sm:$0xff]
      %v4355 = vld [vmem:[#allocation3 + $0x170] sm:$0xff]
      %v4356 = vld [vmem:[#allocation3 + $0x1] sm:$0xff]
      %v4357 = vld [vmem:[#allocation3 + $0x9] sm:$0xff]
      %v4358 = vld [vmem:[#allocation3 + $0x19] sm:$0xff]
      %v4359 = vld [vmem:[#allocation3 + $0x21] sm:$0xff]
      %v4360 = vld [vmem:[#allocation3 + $0x31] sm:$0xff]
      %v4361 = vld [vmem:[#allocation3 + $0x39] sm:$0xff]
      %v4362 = vld [vmem:[#allocation3 + $0x49] sm:$0xff]
      %v4363 = vld [vmem:[#allocation3 + $0x51] sm:$0xff]
      %v4364 = vld [vmem:[#allocation3 + $0x61] sm:$0xff]
      %v4365 = vld [vmem:[#allocation3 + $0x69] sm:$0xff]
      %v4366 = vld [vmem:[#allocation3 + $0x79] sm:$0xff]
      %v4367 = vld [vmem:[#allocation3 + $0x81] sm:$0xff]
      %v4368 = vld [vmem:[#allocation3 + $0x91] sm:$0xff]
      %v4369 = vld [vmem:[#allocation3 + $0x99] sm:$0xff]
      %v4370 = vld [vmem:[#allocation3 + $0xa9] sm:$0xff]
      %v4371 = vld [vmem:[#allocation3 + $0xb1] sm:$0xff]
      %v4372 = vld [vmem:[#allocation3 + $0xc1] sm:$0xff]
      %v4373 = vld [vmem:[#allocation3 + $0xc9] sm:$0xff]
      %v4374 = vld [vmem:[#allocation3 + $0xd9] sm:$0xff]
      %v4375 = vld [vmem:[#allocation3 + $0xe1] sm:$0xff]
      %v4376 = vld [vmem:[#allocation3 + $0xf1] sm:$0xff]
      %v4377 = vld [vmem:[#allocation3 + $0xf9] sm:$0xff]
      %v4378 = vld [vmem:[#allocation3 + $0x109] sm:$0xff]
      %v4379 = vld [vmem:[#allocation3 + $0x111] sm:$0xff]
      %v4380 = vld [vmem:[#allocation3 + $0x121] sm:$0xff]
      %v4381 = vld [vmem:[#allocation3 + $0x129] sm:$0xff]
      %v4382 = vld [vmem:[#allocation3 + $0x139] sm:$0xff]
      %v4383 = vld [vmem:[#allocation3 + $0x141] sm:$0xff]
      %v4384 = vld [vmem:[#allocation3 + $0x151] sm:$0xff]
      %v4385 = vld [vmem:[#allocation3 + $0x159] sm:$0xff]
      %v4386 = vld [vmem:[#allocation3 + $0x169] sm:$0xff]
      %v4387 = vld [vmem:[#allocation3 + $0x171] sm:$0xff]
      %v4388 = vld [vmem:[#allocation3 + $0x2] sm:$0xff]
      %v4389 = vld [vmem:[#allocation3 + $0xa] sm:$0xff]
      %v4390 = vld [vmem:[#allocation3 + $0x1a] sm:$0xff]
      %v4391 = vld [vmem:[#allocation3 + $0x22] sm:$0xff]
      %v4392 = vld [vmem:[#allocation3 + $0x32] sm:$0xff]
      %v4393 = vld [vmem:[#allocation3 + $0x3a] sm:$0xff]
      %v4394 = vld [vmem:[#allocation3 + $0x4a] sm:$0xff]
      %v4395 = vld [vmem:[#allocation3 + $0x52] sm:$0xff]
      %v4396 = vld [vmem:[#allocation3 + $0x62] sm:$0xff]
      %v4397 = vld [vmem:[#allocation3 + $0x6a] sm:$0xff]
      %v4398 = vld [vmem:[#allocation3 + $0x7a] sm:$0xff]
      %v4399 = vld [vmem:[#allocation3 + $0x82] sm:$0xff]
      %v4400 = vld [vmem:[#allocation3 + $0x92] sm:$0xff]
      %v4401 = vld [vmem:[#allocation3 + $0x9a] sm:$0xff]
      %v4402 = vld [vmem:[#allocation3 + $0xaa] sm:$0xff]
      %v4403 = vld [vmem:[#allocation3 + $0xb2] sm:$0xff]
      %v4404 = vld [vmem:[#allocation3 + $0xc2] sm:$0xff]
      %v4405 = vld [vmem:[#allocation3 + $0xca] sm:$0xff]
      %v4406 = vld [vmem:[#allocation3 + $0xda] sm:$0xff]
      %v4407 = vld [vmem:[#allocation3 + $0xe2] sm:$0xff]
      %v4408 = vld [vmem:[#allocation3 + $0xf2] sm:$0xff]
      %v4409 = vld [vmem:[#allocation3 + $0xfa] sm:$0xff]
      %v4410 = vld [vmem:[#allocation3 + $0x10a] sm:$0xff]
      %v4411 = vld [vmem:[#allocation3 + $0x112] sm:$0xff]
      %v4412 = vld [vmem:[#allocation3 + $0x122] sm:$0xff]
      %v4413 = vld [vmem:[#allocation3 + $0x12a] sm:$0xff]
      %v4414 = vld [vmem:[#allocation3 + $0x13a] sm:$0xff]
      %v4415 = vld [vmem:[#allocation3 + $0x142] sm:$0xff]
      %v4416 = vld [vmem:[#allocation3 + $0x152] sm:$0xff]
      %v4417 = vld [vmem:[#allocation3 + $0x15a] sm:$0xff]
      %v4418 = vld [vmem:[#allocation3 + $0x16a] sm:$0xff]
      %v4419 = vld [vmem:[#allocation3 + $0x172] sm:$0xff]
      %v4420 = vld [vmem:[%s2323] sm:$0xff]
      %v4421 = vld [vmem:[%s2323 + $0x8] sm:$0xff]
      %v4422 = vld [vmem:[%s2323 + $0x18] sm:$0xff]
      %v4423 = vld [vmem:[%s2323 + $0x20] sm:$0xff]
      %v4424 = vld [vmem:[%s2323 + $0x30] sm:$0xff]
      %v4425 = vld [vmem:[%s2323 + $0x38] sm:$0xff]
      %v4426 = vld [vmem:[%s2323 + $0x48] sm:$0xff]
      %v4427 = vld [vmem:[%s2323 + $0x50] sm:$0xff]
      %v4428 = vld [vmem:[%s2323 + $0x60] sm:$0xff]
      %v4429 = vld [vmem:[%s2323 + $0x68] sm:$0xff]
      %v4430 = vld [vmem:[%s2323 + $0x78] sm:$0xff]
      %v4431 = vld [vmem:[%s2323 + $0x80] sm:$0xff]
      %v4432 = vld [vmem:[%s2323 + $0x90] sm:$0xff]
      %v4433 = vld [vmem:[%s2323 + $0x98] sm:$0xff]
      %v4434 = vld [vmem:[%s2323 + $0xa8] sm:$0xff]
      %v4435 = vld [vmem:[%s2323 + $0xb0] sm:$0xff]
      %v4436 = vld [vmem:[%s2323 + $0xc0] sm:$0xff]
      %v4437 = vld [vmem:[%s2323 + $0xc8] sm:$0xff]
      %v4438 = vld [vmem:[%s2323 + $0xd8] sm:$0xff]
      %v4439 = vld [vmem:[%s2323 + $0xe0] sm:$0xff]
      %v4440 = vld [vmem:[%s2323 + $0xf0] sm:$0xff]
      %v4441 = vld [vmem:[%s2323 + $0xf8] sm:$0xff]
      %v4442 = vld [vmem:[%s2323 + $0x108] sm:$0xff]
      %v4443 = vld [vmem:[%s2323 + $0x110] sm:$0xff]
      %v4444 = vld [vmem:[%s2323 + $0x120] sm:$0xff]
      %v4445 = vld [vmem:[%s2323 + $0x128] sm:$0xff]
      %v4446 = vld [vmem:[%s2323 + $0x138] sm:$0xff]
      %v4447 = vld [vmem:[%s2323 + $0x140] sm:$0xff]
      %v4448 = vld [vmem:[%s2323 + $0x150] sm:$0xff]
      %v4449 = vld [vmem:[%s2323 + $0x158] sm:$0xff]
      %v4450 = vld [vmem:[%s2323 + $0x168] sm:$0xff]
      %v4451 = vld [vmem:[%s2323 + $0x170] sm:$0xff]
      %v4452 = vld [vmem:[%s2323 + $0x1] sm:$0xff]
      %v4453 = vld [vmem:[%s2323 + $0x9] sm:$0xff]
      %v4454 = vld [vmem:[%s2323 + $0x19] sm:$0xff]
      %v4455 = vld [vmem:[%s2323 + $0x21] sm:$0xff]
      %v4456 = vld [vmem:[%s2323 + $0x31] sm:$0xff]
      %v4457 = vld [vmem:[%s2323 + $0x39] sm:$0xff]
      %v4458 = vld [vmem:[%s2323 + $0x49] sm:$0xff]
      %v4459 = vld [vmem:[%s2323 + $0x51] sm:$0xff]
      %v4460 = vld [vmem:[%s2323 + $0x61] sm:$0xff]
      %v4461 = vld [vmem:[%s2323 + $0x69] sm:$0xff]
      %v4462 = vld [vmem:[%s2323 + $0x79] sm:$0xff]
      %v4463 = vld [vmem:[%s2323 + $0x81] sm:$0xff]
      %v4464 = vld [vmem:[%s2323 + $0x91] sm:$0xff]
      %v4465 = vld [vmem:[%s2323 + $0x99] sm:$0xff]
      %v4466 = vld [vmem:[%s2323 + $0xa9] sm:$0xff]
      %v4467 = vld [vmem:[%s2323 + $0xb1] sm:$0xff]
      %v4468 = vld [vmem:[%s2323 + $0xc1] sm:$0xff]
      %v4469 = vld [vmem:[%s2323 + $0xc9] sm:$0xff]
      %v4470 = vld [vmem:[%s2323 + $0xd9] sm:$0xff]
      %v4471 = vld [vmem:[%s2323 + $0xe1] sm:$0xff]
      %v4472 = vld [vmem:[%s2323 + $0xf1] sm:$0xff]
      %v4473 = vld [vmem:[%s2323 + $0xf9] sm:$0xff]
      %v4474 = vld [vmem:[%s2323 + $0x109] sm:$0xff]
      %v4475 = vld [vmem:[%s2323 + $0x111] sm:$0xff]
      %v4476 = vld [vmem:[%s2323 + $0x121] sm:$0xff]
      %v4477 = vld [vmem:[%s2323 + $0x129] sm:$0xff]
      %v4478 = vld [vmem:[%s2323 + $0x139] sm:$0xff]
      %v4479 = vld [vmem:[%s2323 + $0x141] sm:$0xff]
      %v4480 = vld [vmem:[%s2323 + $0x151] sm:$0xff]
      %v4481 = vld [vmem:[%s2323 + $0x159] sm:$0xff]
      %v4482 = vld [vmem:[%s2323 + $0x169] sm:$0xff]
      %v4483 = vld [vmem:[%s2323 + $0x171] sm:$0xff]
      %v4484 = vld [vmem:[%s2323 + $0x2] sm:$0xff]
      %v4485 = vld [vmem:[%s2323 + $0xa] sm:$0xff]
      %v4486 = vld [vmem:[%s2323 + $0x1a] sm:$0xff]
      %v4487 = vld [vmem:[%s2323 + $0x22] sm:$0xff]
      %v4488 = vld [vmem:[%s2323 + $0x32] sm:$0xff]
      %v4489 = vld [vmem:[%s2323 + $0x3a] sm:$0xff]
      %v4490 = vld [vmem:[%s2323 + $0x4a] sm:$0xff]
      %v4491 = vld [vmem:[%s2323 + $0x52] sm:$0xff]
      %v4492 = vld [vmem:[%s2323 + $0x62] sm:$0xff]
      %v4493 = vld [vmem:[%s2323 + $0x6a] sm:$0xff]
      %v4494 = vld [vmem:[%s2323 + $0x7a] sm:$0xff]
      %v4495 = vld [vmem:[%s2323 + $0x82] sm:$0xff]
      %v4496 = vld [vmem:[%s2323 + $0x92] sm:$0xff]
      %v4497 = vld [vmem:[%s2323 + $0x9a] sm:$0xff]
      %v4498 = vld [vmem:[%s2323 + $0xaa] sm:$0xff]
      %v4499 = vld [vmem:[%s2323 + $0xb2] sm:$0xff]
      %v4500 = vld [vmem:[%s2323 + $0xc2] sm:$0xff]
      %v4501 = vld [vmem:[%s2323 + $0xca] sm:$0xff]
      %v4502 = vld [vmem:[%s2323 + $0xda] sm:$0xff]
      %v4503 = vld [vmem:[%s2323 + $0xe2] sm:$0xff]
      %v4504 = vld [vmem:[%s2323 + $0xf2] sm:$0xff]
      %v4505 = vld [vmem:[%s2323 + $0xfa] sm:$0xff]
      %v4506 = vld [vmem:[%s2323 + $0x10a] sm:$0xff]
      %v4507 = vld [vmem:[%s2323 + $0x112] sm:$0xff]
      %v4508 = vld [vmem:[%s2323 + $0x122] sm:$0xff]
      %v4509 = vld [vmem:[%s2323 + $0x12a] sm:$0xff]
      %v4510 = vld [vmem:[%s2323 + $0x13a] sm:$0xff]
      %v4511 = vld [vmem:[%s2323 + $0x142] sm:$0xff]
      %v4512 = vld [vmem:[%s2323 + $0x152] sm:$0xff]
      %v4513 = vld [vmem:[%s2323 + $0x15a] sm:$0xff]
      %v4514 = vld [vmem:[%s2323 + $0x16a] sm:$0xff]
      %v4515 = vld [vmem:[%s2323 + $0x172] sm:$0xff]
      %v4516 = vld [vmem:[%s2548] sm:$0xff]
      %v4517 = vld [vmem:[%s2548 + $0x8] sm:$0xff]
      %v4518 = vld [vmem:[%s2548 + $0x18] sm:$0xff]
      %v4519 = vld [vmem:[%s2548 + $0x20] sm:$0xff]
      %v4520 = vld [vmem:[%s2548 + $0x30] sm:$0xff]
      %v4521 = vld [vmem:[%s2548 + $0x38] sm:$0xff]
      %v4522 = vld [vmem:[%s2548 + $0x48] sm:$0xff]
      %v4523 = vld [vmem:[%s2548 + $0x50] sm:$0xff]
      %v4524 = vld [vmem:[%s2548 + $0x60] sm:$0xff]
      %v4525 = vld [vmem:[%s2548 + $0x68] sm:$0xff]
      %v4526 = vld [vmem:[%s2548 + $0x78] sm:$0xff]
      %v4527 = vld [vmem:[%s2548 + $0x80] sm:$0xff]
      %v4528 = vld [vmem:[%s2548 + $0x90] sm:$0xff]
      %v4529 = vld [vmem:[%s2548 + $0x98] sm:$0xff]
      %v4530 = vld [vmem:[%s2548 + $0xa8] sm:$0xff]
      %v4531 = vld [vmem:[%s2548 + $0xb0] sm:$0xff]
      %v4532 = vld [vmem:[%s2548 + $0xc0] sm:$0xff]
      %v4533 = vld [vmem:[%s2548 + $0xc8] sm:$0xff]
      %v4534 = vld [vmem:[%s2548 + $0xd8] sm:$0xff]
      %v4535 = vld [vmem:[%s2548 + $0xe0] sm:$0xff]
      %v4536 = vld [vmem:[%s2548 + $0xf0] sm:$0xff]
      %v4537 = vld [vmem:[%s2548 + $0xf8] sm:$0xff]
      %v4538 = vld [vmem:[%s2548 + $0x108] sm:$0xff]
      %v4539 = vld [vmem:[%s2548 + $0x110] sm:$0xff]
      %v4540 = vld [vmem:[%s2548 + $0x120] sm:$0xff]
      %v4541 = vld [vmem:[%s2548 + $0x128] sm:$0xff]
      %v4542 = vld [vmem:[%s2548 + $0x138] sm:$0xff]
      %v4543 = vld [vmem:[%s2548 + $0x140] sm:$0xff]
      %v4544 = vld [vmem:[%s2548 + $0x150] sm:$0xff]
      %v4545 = vld [vmem:[%s2548 + $0x158] sm:$0xff]
      %v4546 = vld [vmem:[%s2548 + $0x168] sm:$0xff]
      %v4547 = vld [vmem:[%s2548 + $0x170] sm:$0xff]
      %v4548 = vld [vmem:[%s2548 + $0x1] sm:$0xff]
      %v4549 = vld [vmem:[%s2548 + $0x9] sm:$0xff]
      %v4550 = vld [vmem:[%s2548 + $0x19] sm:$0xff]
      %v4551 = vld [vmem:[%s2548 + $0x21] sm:$0xff]
      %v4552 = vld [vmem:[%s2548 + $0x31] sm:$0xff]
      %v4553 = vld [vmem:[%s2548 + $0x39] sm:$0xff]
      %v4554 = vld [vmem:[%s2548 + $0x49] sm:$0xff]
      %v4555 = vld [vmem:[%s2548 + $0x51] sm:$0xff]
      %v4556 = vld [vmem:[%s2548 + $0x61] sm:$0xff]
      %v4557 = vld [vmem:[%s2548 + $0x69] sm:$0xff]
      %v4558 = vld [vmem:[%s2548 + $0x79] sm:$0xff]
      %v4559 = vld [vmem:[%s2548 + $0x81] sm:$0xff]
      %v4560 = vld [vmem:[%s2548 + $0x91] sm:$0xff]
      %v4561 = vld [vmem:[%s2548 + $0x99] sm:$0xff]
      %v4562 = vld [vmem:[%s2548 + $0xa9] sm:$0xff]
      %v4563 = vld [vmem:[%s2548 + $0xb1] sm:$0xff]
      %v4564 = vld [vmem:[%s2548 + $0xc1] sm:$0xff]
      %v4565 = vld [vmem:[%s2548 + $0xc9] sm:$0xff]
      %v4566 = vld [vmem:[%s2548 + $0xd9] sm:$0xff]
      %v4567 = vld [vmem:[%s2548 + $0xe1] sm:$0xff]
      %v4568 = vld [vmem:[%s2548 + $0xf1] sm:$0xff]
      %v4569 = vld [vmem:[%s2548 + $0xf9] sm:$0xff]
      %v4570 = vld [vmem:[%s2548 + $0x109] sm:$0xff]
      %v4571 = vld [vmem:[%s2548 + $0x111] sm:$0xff]
      %v4572 = vld [vmem:[%s2548 + $0x121] sm:$0xff]
      %v4573 = vld [vmem:[%s2548 + $0x129] sm:$0xff]
      %v4574 = vld [vmem:[%s2548 + $0x139] sm:$0xff]
      %v4575 = vld [vmem:[%s2548 + $0x141] sm:$0xff]
      %v4576 = vld [vmem:[%s2548 + $0x151] sm:$0xff]
      %v4577 = vld [vmem:[%s2548 + $0x159] sm:$0xff]
      %v4578 = vld [vmem:[%s2548 + $0x169] sm:$0xff]
      %v4579 = vld [vmem:[%s2548 + $0x171] sm:$0xff]
      %v4580 = vld [vmem:[%s2548 + $0x2] sm:$0xff]
      %v4581 = vld [vmem:[%s2548 + $0xa] sm:$0xff]
      %v4582 = vld [vmem:[%s2548 + $0x1a] sm:$0xff]
      %v4583 = vld [vmem:[%s2548 + $0x22] sm:$0xff]
      %v4584 = vld [vmem:[%s2548 + $0x32] sm:$0xff]
      %v4585 = vld [vmem:[%s2548 + $0x3a] sm:$0xff]
      %v4586 = vld [vmem:[%s2548 + $0x4a] sm:$0xff]
      %v4587 = vld [vmem:[%s2548 + $0x52] sm:$0xff]
      %v4588 = vld [vmem:[%s2548 + $0x62] sm:$0xff]
      %v4589 = vld [vmem:[%s2548 + $0x6a] sm:$0xff]
      %v4590 = vld [vmem:[%s2548 + $0x7a] sm:$0xff]
      %v4591 = vld [vmem:[%s2548 + $0x82] sm:$0xff]
      %v4592 = vld [vmem:[%s2548 + $0x92] sm:$0xff]
      %v4593 = vld [vmem:[%s2548 + $0x9a] sm:$0xff]
      %v4594 = vld [vmem:[%s2548 + $0xaa] sm:$0xff]
      %v4595 = vld [vmem:[%s2548 + $0xb2] sm:$0xff]
      %v4596 = vld [vmem:[%s2548 + $0xc2] sm:$0xff]
      %v4597 = vld [vmem:[%s2548 + $0xca] sm:$0xff]
      %v4598 = vld [vmem:[%s2548 + $0xda] sm:$0xff]
      %v4599 = vld [vmem:[%s2548 + $0xe2] sm:$0xff]
      %v4600 = vld [vmem:[%s2548 + $0xf2] sm:$0xff]
      %v4601 = vld [vmem:[%s2548 + $0xfa] sm:$0xff]
      %v4602 = vld [vmem:[%s2548 + $0x10a] sm:$0xff]
      %v4603 = vld [vmem:[%s2548 + $0x112] sm:$0xff]
      %v4604 = vld [vmem:[%s2548 + $0x122] sm:$0xff]
      %v4605 = vld [vmem:[%s2548 + $0x12a] sm:$0xff]
      %v4606 = vld [vmem:[%s2548 + $0x13a] sm:$0xff]
      %v4607 = vld [vmem:[%s2548 + $0x142] sm:$0xff]
      %v4608 = vld [vmem:[%s2548 + $0x152] sm:$0xff]
      %v4609 = vld [vmem:[%s2548 + $0x15a] sm:$0xff]
      %v4610 = vld [vmem:[%s2548 + $0x16a] sm:$0xff]
      %v4611 = vld [vmem:[%s2548 + $0x172] sm:$0xff]
      %4644 = vrot.lane.b32.xlu0 %v4356, 8
      %v4645 = vpop.permute.xlu0 %4644
      %4646 = vrot.lane.b32.xlu0 %v4357, 8
      %v4647 = vpop.permute.xlu0 %4646
      %4648 = vrot.lane.b32.xlu0 %v4358, 8
      %v4649 = vpop.permute.xlu0 %4648
      %4650 = vrot.lane.b32.xlu0 %v4359, 8
      %v4651 = vpop.permute.xlu0 %4650
      %4652 = vrot.lane.b32.xlu0 %v4360, 8
      %v4653 = vpop.permute.xlu0 %4652
      %4654 = vrot.lane.b32.xlu0 %v4361, 8
      %v4655 = vpop.permute.xlu0 %4654
      %4656 = vrot.lane.b32.xlu0 %v4362, 8
      %v4657 = vpop.permute.xlu0 %4656
      %4658 = vrot.lane.b32.xlu0 %v4363, 8
      %v4659 = vpop.permute.xlu0 %4658
      %4660 = vrot.lane.b32.xlu0 %v4364, 8
      %v4661 = vpop.permute.xlu0 %4660
      %4662 = vrot.lane.b32.xlu0 %v4365, 8
      %v4663 = vpop.permute.xlu0 %4662
      %4664 = vrot.lane.b32.xlu0 %v4366, 8
      %v4665 = vpop.permute.xlu0 %4664
      %4666 = vrot.lane.b32.xlu0 %v4367, 8
      %v4667 = vpop.permute.xlu0 %4666
      %4668 = vrot.lane.b32.xlu0 %v4368, 8
      %v4669 = vpop.permute.xlu0 %4668
      %4670 = vrot.lane.b32.xlu0 %v4369, 8
      %v4671 = vpop.permute.xlu0 %4670
      %4672 = vrot.lane.b32.xlu0 %v4370, 8
      %v4673 = vpop.permute.xlu0 %4672
      %4674 = vrot.lane.b32.xlu0 %v4371, 8
      %v4675 = vpop.permute.xlu0 %4674
      %4676 = vrot.lane.b32.xlu0 %v4372, 8
      %v4677 = vpop.permute.xlu0 %4676
      %4678 = vrot.lane.b32.xlu0 %v4373, 8
      %v4679 = vpop.permute.xlu0 %4678
      %4680 = vrot.lane.b32.xlu0 %v4374, 8
      %v4681 = vpop.permute.xlu0 %4680
      %4682 = vrot.lane.b32.xlu0 %v4375, 8
      %v4683 = vpop.permute.xlu0 %4682
      %4684 = vrot.lane.b32.xlu0 %v4376, 8
      %v4685 = vpop.permute.xlu0 %4684
      %4686 = vrot.lane.b32.xlu0 %v4377, 8
      %v4687 = vpop.permute.xlu0 %4686
      %4688 = vrot.lane.b32.xlu0 %v4378, 8
      %v4689 = vpop.permute.xlu0 %4688
      %4690 = vrot.lane.b32.xlu0 %v4379, 8
      %v4691 = vpop.permute.xlu0 %4690
      %4692 = vrot.lane.b32.xlu0 %v4380, 8
      %v4693 = vpop.permute.xlu0 %4692
      %4694 = vrot.lane.b32.xlu0 %v4381, 8
      %v4695 = vpop.permute.xlu0 %4694
      %4696 = vrot.lane.b32.xlu0 %v4382, 8
      %v4697 = vpop.permute.xlu0 %4696
      %4698 = vrot.lane.b32.xlu0 %v4383, 8
      %v4699 = vpop.permute.xlu0 %4698
      %4700 = vrot.lane.b32.xlu0 %v4384, 8
      %v4701 = vpop.permute.xlu0 %4700
      %4702 = vrot.lane.b32.xlu0 %v4385, 8
      %v4703 = vpop.permute.xlu0 %4702
      %4704 = vrot.lane.b32.xlu0 %v4386, 8
      %v4705 = vpop.permute.xlu0 %4704
      %4706 = vrot.lane.b32.xlu0 %v4387, 8
      %v4707 = vpop.permute.xlu0 %4706
      %4772 = vrot.lane.b32.xlu0 %v4388, 16
      %v4773 = vpop.permute.xlu0 %4772
      %4774 = vrot.lane.b32.xlu0 %v4389, 16
      %v4775 = vpop.permute.xlu0 %4774
      %4776 = vrot.lane.b32.xlu0 %v4390, 16
      %v4777 = vpop.permute.xlu0 %4776
      %4778 = vrot.lane.b32.xlu0 %v4391, 16
      %v4779 = vpop.permute.xlu0 %4778
      %4780 = vrot.lane.b32.xlu0 %v4392, 16
      %v4781 = vpop.permute.xlu0 %4780
      %4782 = vrot.lane.b32.xlu0 %v4393, 16
      %v4783 = vpop.permute.xlu0 %4782
      %4784 = vrot.lane.b32.xlu0 %v4394, 16
      %v4785 = vpop.permute.xlu0 %4784
      %4786 = vrot.lane.b32.xlu0 %v4395, 16
      %v4787 = vpop.permute.xlu0 %4786
      %4788 = vrot.lane.b32.xlu0 %v4396, 16
      %v4789 = vpop.permute.xlu0 %4788
      %4790 = vrot.lane.b32.xlu0 %v4397, 16
      %v4791 = vpop.permute.xlu0 %4790
      %4792 = vrot.lane.b32.xlu0 %v4398, 16
      %v4793 = vpop.permute.xlu0 %4792
      %4794 = vrot.lane.b32.xlu0 %v4399, 16
      %v4795 = vpop.permute.xlu0 %4794
      %4796 = vrot.lane.b32.xlu0 %v4400, 16
      %v4797 = vpop.permute.xlu0 %4796
      %4798 = vrot.lane.b32.xlu0 %v4401, 16
      %v4799 = vpop.permute.xlu0 %4798
      %4800 = vrot.lane.b32.xlu0 %v4402, 16
      %v4801 = vpop.permute.xlu0 %4800
      %4802 = vrot.lane.b32.xlu0 %v4403, 16
      %v4803 = vpop.permute.xlu0 %4802
      %4804 = vrot.lane.b32.xlu0 %v4404, 16
      %v4805 = vpop.permute.xlu0 %4804
      %4806 = vrot.lane.b32.xlu0 %v4405, 16
      %v4807 = vpop.permute.xlu0 %4806
      %4808 = vrot.lane.b32.xlu0 %v4406, 16
      %v4809 = vpop.permute.xlu0 %4808
      %4810 = vrot.lane.b32.xlu0 %v4407, 16
      %v4811 = vpop.permute.xlu0 %4810
      %4812 = vrot.lane.b32.xlu0 %v4408, 16
      %v4813 = vpop.permute.xlu0 %4812
      %4814 = vrot.lane.b32.xlu0 %v4409, 16
      %v4815 = vpop.permute.xlu0 %4814
      %4816 = vrot.lane.b32.xlu0 %v4410, 16
      %v4817 = vpop.permute.xlu0 %4816
      %4818 = vrot.lane.b32.xlu0 %v4411, 16
      %v4819 = vpop.permute.xlu0 %4818
      %4820 = vrot.lane.b32.xlu0 %v4412, 16
      %v4821 = vpop.permute.xlu0 %4820
      %4822 = vrot.lane.b32.xlu0 %v4413, 16
      %v4823 = vpop.permute.xlu0 %4822
      %4824 = vrot.lane.b32.xlu0 %v4414, 16
      %v4825 = vpop.permute.xlu0 %4824
      %4826 = vrot.lane.b32.xlu0 %v4415, 16
      %v4827 = vpop.permute.xlu0 %4826
      %4828 = vrot.lane.b32.xlu0 %v4416, 16
      %v4829 = vpop.permute.xlu0 %4828
      %4830 = vrot.lane.b32.xlu0 %v4417, 16
      %v4831 = vpop.permute.xlu0 %4830
      %4832 = vrot.lane.b32.xlu0 %v4418, 16
      %v4833 = vpop.permute.xlu0 %4832
      %4834 = vrot.lane.b32.xlu0 %v4419, 16
      %v4835 = vpop.permute.xlu0 %4834
      %4900 = vrot.lane.b32.xlu0 %v4420, 24
      %v4901 = vpop.permute.xlu0 %4900
      %4902 = vrot.lane.b32.xlu0 %v4421, 24
      %v4903 = vpop.permute.xlu0 %4902
      %4904 = vrot.lane.b32.xlu0 %v4422, 24
      %v4905 = vpop.permute.xlu0 %4904
      %4906 = vrot.lane.b32.xlu0 %v4423, 24
      %v4907 = vpop.permute.xlu0 %4906
      %4908 = vrot.lane.b32.xlu0 %v4424, 24
      %v4909 = vpop.permute.xlu0 %4908
      %4910 = vrot.lane.b32.xlu0 %v4425, 24
      %v4911 = vpop.permute.xlu0 %4910
      %4912 = vrot.lane.b32.xlu0 %v4426, 24
      %v4913 = vpop.permute.xlu0 %4912
      %4914 = vrot.lane.b32.xlu0 %v4427, 24
      %v4915 = vpop.permute.xlu0 %4914
      %4916 = vrot.lane.b32.xlu0 %v4428, 24
      %v4917 = vpop.permute.xlu0 %4916
      %4918 = vrot.lane.b32.xlu0 %v4429, 24
      %v4919 = vpop.permute.xlu0 %4918
      %4920 = vrot.lane.b32.xlu0 %v4430, 24
      %v4921 = vpop.permute.xlu0 %4920
      %4922 = vrot.lane.b32.xlu0 %v4431, 24
      %v4923 = vpop.permute.xlu0 %4922
      %4924 = vrot.lane.b32.xlu0 %v4432, 24
      %v4925 = vpop.permute.xlu0 %4924
      %4926 = vrot.lane.b32.xlu0 %v4433, 24
      %v4927 = vpop.permute.xlu0 %4926
      %4928 = vrot.lane.b32.xlu0 %v4434, 24
      %v4929 = vpop.permute.xlu0 %4928
      %4930 = vrot.lane.b32.xlu0 %v4435, 24
      %v4931 = vpop.permute.xlu0 %4930
      %4932 = vrot.lane.b32.xlu0 %v4436, 24
      %v4933 = vpop.permute.xlu0 %4932
      %4934 = vrot.lane.b32.xlu0 %v4437, 24
      %v4935 = vpop.permute.xlu0 %4934
      %4936 = vrot.lane.b32.xlu0 %v4438, 24
      %v4937 = vpop.permute.xlu0 %4936
      %4938 = vrot.lane.b32.xlu0 %v4439, 24
      %v4939 = vpop.permute.xlu0 %4938
      %4940 = vrot.lane.b32.xlu0 %v4440, 24
      %v4941 = vpop.permute.xlu0 %4940
      %4942 = vrot.lane.b32.xlu0 %v4441, 24
      %v4943 = vpop.permute.xlu0 %4942
      %4944 = vrot.lane.b32.xlu0 %v4442, 24
      %v4945 = vpop.permute.xlu0 %4944
      %4946 = vrot.lane.b32.xlu0 %v4443, 24
      %v4947 = vpop.permute.xlu0 %4946
      %4948 = vrot.lane.b32.xlu0 %v4444, 24
      %v4949 = vpop.permute.xlu0 %4948
      %4950 = vrot.lane.b32.xlu0 %v4445, 24
      %v4951 = vpop.permute.xlu0 %4950
      %4952 = vrot.lane.b32.xlu0 %v4446, 24
      %v4953 = vpop.permute.xlu0 %4952
      %4954 = vrot.lane.b32.xlu0 %v4447, 24
      %v4955 = vpop.permute.xlu0 %4954
      %4956 = vrot.lane.b32.xlu0 %v4448, 24
      %v4957 = vpop.permute.xlu0 %4956
      %4958 = vrot.lane.b32.xlu0 %v4449, 24
      %v4959 = vpop.permute.xlu0 %4958
      %4960 = vrot.lane.b32.xlu0 %v4450, 24
      %v4961 = vpop.permute.xlu0 %4960
      %4962 = vrot.lane.b32.xlu0 %v4451, 24
      %v4963 = vpop.permute.xlu0 %4962
      %5028 = vrot.lane.b32.xlu0 %v4452, 32
      %v5029 = vpop.permute.xlu0 %5028
      %5030 = vrot.lane.b32.xlu0 %v4453, 32
      %v5031 = vpop.permute.xlu0 %5030
      %5032 = vrot.lane.b32.xlu0 %v4454, 32
      %v5033 = vpop.permute.xlu0 %5032
      %5034 = vrot.lane.b32.xlu0 %v4455, 32
      %v5035 = vpop.permute.xlu0 %5034
      %5036 = vrot.lane.b32.xlu0 %v4456, 32
      %v5037 = vpop.permute.xlu0 %5036
      %5038 = vrot.lane.b32.xlu0 %v4457, 32
      %v5039 = vpop.permute.xlu0 %5038
      %5040 = vrot.lane.b32.xlu0 %v4458, 32
      %v5041 = vpop.permute.xlu0 %5040
      %5042 = vrot.lane.b32.xlu0 %v4459, 32
      %v5043 = vpop.permute.xlu0 %5042
      %5044 = vrot.lane.b32.xlu0 %v4460, 32
      %v5045 = vpop.permute.xlu0 %5044
      %5046 = vrot.lane.b32.xlu0 %v4461, 32
      %v5047 = vpop.permute.xlu0 %5046
      %5048 = vrot.lane.b32.xlu0 %v4462, 32
      %v5049 = vpop.permute.xlu0 %5048
      %5050 = vrot.lane.b32.xlu0 %v4463, 32
      %v5051 = vpop.permute.xlu0 %5050
      %5052 = vrot.lane.b32.xlu0 %v4464, 32
      %v5053 = vpop.permute.xlu0 %5052
      %5054 = vrot.lane.b32.xlu0 %v4465, 32
      %v5055 = vpop.permute.xlu0 %5054
      %5056 = vrot.lane.b32.xlu0 %v4466, 32
      %v5057 = vpop.permute.xlu0 %5056
      %5058 = vrot.lane.b32.xlu0 %v4467, 32
      %v5059 = vpop.permute.xlu0 %5058
      %5060 = vrot.lane.b32.xlu0 %v4468, 32
      %v5061 = vpop.permute.xlu0 %5060
      %5062 = vrot.lane.b32.xlu0 %v4469, 32
      %v5063 = vpop.permute.xlu0 %5062
      %5064 = vrot.lane.b32.xlu0 %v4470, 32
      %v5065 = vpop.permute.xlu0 %5064
      %5066 = vrot.lane.b32.xlu0 %v4471, 32
      %v5067 = vpop.permute.xlu0 %5066
      %5068 = vrot.lane.b32.xlu0 %v4472, 32
      %v5069 = vpop.permute.xlu0 %5068
      %5070 = vrot.lane.b32.xlu0 %v4473, 32
      %v5071 = vpop.permute.xlu0 %5070
      %5072 = vrot.lane.b32.xlu0 %v4474, 32
      %v5073 = vpop.permute.xlu0 %5072
      %5074 = vrot.lane.b32.xlu0 %v4475, 32
      %v5075 = vpop.permute.xlu0 %5074
      %5076 = vrot.lane.b32.xlu0 %v4476, 32
      %v5077 = vpop.permute.xlu0 %5076
      %5078 = vrot.lane.b32.xlu0 %v4477, 32
      %v5079 = vpop.permute.xlu0 %5078
      %5080 = vrot.lane.b32.xlu0 %v4478, 32
      %v5081 = vpop.permute.xlu0 %5080
      %5082 = vrot.lane.b32.xlu0 %v4479, 32
      %v5083 = vpop.permute.xlu0 %5082
      %5084 = vrot.lane.b32.xlu0 %v4480, 32
      %v5085 = vpop.permute.xlu0 %5084
      %5086 = vrot.lane.b32.xlu0 %v4481, 32
      %v5087 = vpop.permute.xlu0 %5086
      %5088 = vrot.lane.b32.xlu0 %v4482, 32
      %v5089 = vpop.permute.xlu0 %5088
      %5090 = vrot.lane.b32.xlu0 %v4483, 32
      %v5091 = vpop.permute.xlu0 %5090
      %5156 = vrot.lane.b32.xlu0 %v4484, 40
      %v5157 = vpop.permute.xlu0 %5156
      %5158 = vrot.lane.b32.xlu0 %v4485, 40
      %v5159 = vpop.permute.xlu0 %5158
      %5160 = vrot.lane.b32.xlu0 %v4486, 40
      %v5161 = vpop.permute.xlu0 %5160
      %5162 = vrot.lane.b32.xlu0 %v4487, 40
      %v5163 = vpop.permute.xlu0 %5162
      %5164 = vrot.lane.b32.xlu0 %v4488, 40
      %v5165 = vpop.permute.xlu0 %5164
      %5166 = vrot.lane.b32.xlu0 %v4489, 40
      %v5167 = vpop.permute.xlu0 %5166
      %5168 = vrot.lane.b32.xlu0 %v4490, 40
      %v5169 = vpop.permute.xlu0 %5168
      %5170 = vrot.lane.b32.xlu0 %v4491, 40
      %v5171 = vpop.permute.xlu0 %5170
      %5172 = vrot.lane.b32.xlu0 %v4492, 40
      %v5173 = vpop.permute.xlu0 %5172
      %5174 = vrot.lane.b32.xlu0 %v4493, 40
      %v5175 = vpop.permute.xlu0 %5174
      %5176 = vrot.lane.b32.xlu0 %v4494, 40
      %v5177 = vpop.permute.xlu0 %5176
      %5178 = vrot.lane.b32.xlu0 %v4495, 40
      %v5179 = vpop.permute.xlu0 %5178
      %5180 = vrot.lane.b32.xlu0 %v4496, 40
      %v5181 = vpop.permute.xlu0 %5180
      %5182 = vrot.lane.b32.xlu0 %v4497, 40
      %v5183 = vpop.permute.xlu0 %5182
      %5184 = vrot.lane.b32.xlu0 %v4498, 40
      %v5185 = vpop.permute.xlu0 %5184
      %5186 = vrot.lane.b32.xlu0 %v4499, 40
      %v5187 = vpop.permute.xlu0 %5186
      %5188 = vrot.lane.b32.xlu0 %v4500, 40
      %v5189 = vpop.permute.xlu0 %5188
      %5190 = vrot.lane.b32.xlu0 %v4501, 40
      %v5191 = vpop.permute.xlu0 %5190
      %5192 = vrot.lane.b32.xlu0 %v4502, 40
      %v5193 = vpop.permute.xlu0 %5192
      %5194 = vrot.lane.b32.xlu0 %v4503, 40
      %v5195 = vpop.permute.xlu0 %5194
      %5196 = vrot.lane.b32.xlu0 %v4504, 40
      %v5197 = vpop.permute.xlu0 %5196
      %5198 = vrot.lane.b32.xlu0 %v4505, 40
      %v5199 = vpop.permute.xlu0 %5198
      %5200 = vrot.lane.b32.xlu0 %v4506, 40
      %v5201 = vpop.permute.xlu0 %5200
      %5202 = vrot.lane.b32.xlu0 %v4507, 40
      %v5203 = vpop.permute.xlu0 %5202
      %5204 = vrot.lane.b32.xlu0 %v4508, 40
      %v5205 = vpop.permute.xlu0 %5204
      %5206 = vrot.lane.b32.xlu0 %v4509, 40
      %v5207 = vpop.permute.xlu0 %5206
      %5208 = vrot.lane.b32.xlu0 %v4510, 40
      %v5209 = vpop.permute.xlu0 %5208
      %5210 = vrot.lane.b32.xlu0 %v4511, 40
      %v5211 = vpop.permute.xlu0 %5210
      %5212 = vrot.lane.b32.xlu0 %v4512, 40
      %v5213 = vpop.permute.xlu0 %5212
      %5214 = vrot.lane.b32.xlu0 %v4513, 40
      %v5215 = vpop.permute.xlu0 %5214
      %5216 = vrot.lane.b32.xlu0 %v4514, 40
      %v5217 = vpop.permute.xlu0 %5216
      %5218 = vrot.lane.b32.xlu0 %v4515, 40
      %v5219 = vpop.permute.xlu0 %5218
      %5284 = vrot.lane.b32.xlu0 %v4516, 48
      %v5285 = vpop.permute.xlu0 %5284
      %5286 = vrot.lane.b32.xlu0 %v4517, 48
      %v5287 = vpop.permute.xlu0 %5286
      %5288 = vrot.lane.b32.xlu0 %v4518, 48
      %v5289 = vpop.permute.xlu0 %5288
      %5290 = vrot.lane.b32.xlu0 %v4519, 48
      %v5291 = vpop.permute.xlu0 %5290
      %5292 = vrot.lane.b32.xlu0 %v4520, 48
      %v5293 = vpop.permute.xlu0 %5292
      %5294 = vrot.lane.b32.xlu0 %v4521, 48
      %v5295 = vpop.permute.xlu0 %5294
      %5296 = vrot.lane.b32.xlu0 %v4522, 48
      %v5297 = vpop.permute.xlu0 %5296
      %5298 = vrot.lane.b32.xlu0 %v4523, 48
      %v5299 = vpop.permute.xlu0 %5298
      %5300 = vrot.lane.b32.xlu0 %v4524, 48
      %v5301 = vpop.permute.xlu0 %5300
      %5302 = vrot.lane.b32.xlu0 %v4525, 48
      %v5303 = vpop.permute.xlu0 %5302
      %5304 = vrot.lane.b32.xlu0 %v4526, 48
      %v5305 = vpop.permute.xlu0 %5304
      %5306 = vrot.lane.b32.xlu0 %v4527, 48
      %v5307 = vpop.permute.xlu0 %5306
      %5308 = vrot.lane.b32.xlu0 %v4528, 48
      %v5309 = vpop.permute.xlu0 %5308
      %5310 = vrot.lane.b32.xlu0 %v4529, 48
      %v5311 = vpop.permute.xlu0 %5310
      %5312 = vrot.lane.b32.xlu0 %v4530, 48
      %v5313 = vpop.permute.xlu0 %5312
      %5314 = vrot.lane.b32.xlu0 %v4531, 48
      %v5315 = vpop.permute.xlu0 %5314
      %5316 = vrot.lane.b32.xlu0 %v4532, 48
      %v5317 = vpop.permute.xlu0 %5316
      %5318 = vrot.lane.b32.xlu0 %v4533, 48
      %v5319 = vpop.permute.xlu0 %5318
      %5320 = vrot.lane.b32.xlu0 %v4534, 48
      %v5321 = vpop.permute.xlu0 %5320
      %5322 = vrot.lane.b32.xlu0 %v4535, 48
      %v5323 = vpop.permute.xlu0 %5322
      %5324 = vrot.lane.b32.xlu0 %v4536, 48
      %v5325 = vpop.permute.xlu0 %5324
      %5326 = vrot.lane.b32.xlu0 %v4537, 48
      %v5327 = vpop.permute.xlu0 %5326
      %5328 = vrot.lane.b32.xlu0 %v4538, 48
      %v5329 = vpop.permute.xlu0 %5328
      %5330 = vrot.lane.b32.xlu0 %v4539, 48
      %v5331 = vpop.permute.xlu0 %5330
      %5332 = vrot.lane.b32.xlu0 %v4540, 48
      %v5333 = vpop.permute.xlu0 %5332
      %5334 = vrot.lane.b32.xlu0 %v4541, 48
      %v5335 = vpop.permute.xlu0 %5334
      %5336 = vrot.lane.b32.xlu0 %v4542, 48
      %v5337 = vpop.permute.xlu0 %5336
      %5338 = vrot.lane.b32.xlu0 %v4543, 48
      %v5339 = vpop.permute.xlu0 %5338
      %5340 = vrot.lane.b32.xlu0 %v4544, 48
      %v5341 = vpop.permute.xlu0 %5340
      %5342 = vrot.lane.b32.xlu0 %v4545, 48
      %v5343 = vpop.permute.xlu0 %5342
      %5344 = vrot.lane.b32.xlu0 %v4546, 48
      %v5345 = vpop.permute.xlu0 %5344
      %5346 = vrot.lane.b32.xlu0 %v4547, 48
      %v5347 = vpop.permute.xlu0 %5346
      %5412 = vrot.lane.b32.xlu0 %v4548, 56
      %v5413 = vpop.permute.xlu0 %5412
      %5414 = vrot.lane.b32.xlu0 %v4549, 56
      %v5415 = vpop.permute.xlu0 %5414
      %5416 = vrot.lane.b32.xlu0 %v4550, 56
      %v5417 = vpop.permute.xlu0 %5416
      %5418 = vrot.lane.b32.xlu0 %v4551, 56
      %v5419 = vpop.permute.xlu0 %5418
      %5420 = vrot.lane.b32.xlu0 %v4552, 56
      %v5421 = vpop.permute.xlu0 %5420
      %5422 = vrot.lane.b32.xlu0 %v4553, 56
      %v5423 = vpop.permute.xlu0 %5422
      %5424 = vrot.lane.b32.xlu0 %v4554, 56
      %v5425 = vpop.permute.xlu0 %5424
      %5426 = vrot.lane.b32.xlu0 %v4555, 56
      %v5427 = vpop.permute.xlu0 %5426
      %5428 = vrot.lane.b32.xlu0 %v4556, 56
      %v5429 = vpop.permute.xlu0 %5428
      %5430 = vrot.lane.b32.xlu0 %v4557, 56
      %v5431 = vpop.permute.xlu0 %5430
      %5432 = vrot.lane.b32.xlu0 %v4558, 56
      %v5433 = vpop.permute.xlu0 %5432
      %5434 = vrot.lane.b32.xlu0 %v4559, 56
      %v5435 = vpop.permute.xlu0 %5434
      %5436 = vrot.lane.b32.xlu0 %v4560, 56
      %v5437 = vpop.permute.xlu0 %5436
      %5438 = vrot.lane.b32.xlu0 %v4561, 56
      %v5439 = vpop.permute.xlu0 %5438
      %5440 = vrot.lane.b32.xlu0 %v4562, 56
      %v5441 = vpop.permute.xlu0 %5440
      %5442 = vrot.lane.b32.xlu0 %v4563, 56
      %v5443 = vpop.permute.xlu0 %5442
      %5444 = vrot.lane.b32.xlu0 %v4564, 56
      %v5445 = vpop.permute.xlu0 %5444
      %5446 = vrot.lane.b32.xlu0 %v4565, 56
      %v5447 = vpop.permute.xlu0 %5446
      %5448 = vrot.lane.b32.xlu0 %v4566, 56
      %v5449 = vpop.permute.xlu0 %5448
      %5450 = vrot.lane.b32.xlu0 %v4567, 56
      %v5451 = vpop.permute.xlu0 %5450
      %5452 = vrot.lane.b32.xlu0 %v4568, 56
      %v5453 = vpop.permute.xlu0 %5452
      %5454 = vrot.lane.b32.xlu0 %v4569, 56
      %v5455 = vpop.permute.xlu0 %5454
      %5456 = vrot.lane.b32.xlu0 %v4570, 56
      %v5457 = vpop.permute.xlu0 %5456
      %5458 = vrot.lane.b32.xlu0 %v4571, 56
      %v5459 = vpop.permute.xlu0 %5458
      %5460 = vrot.lane.b32.xlu0 %v4572, 56
      %v5461 = vpop.permute.xlu0 %5460
      %5462 = vrot.lane.b32.xlu0 %v4573, 56
      %v5463 = vpop.permute.xlu0 %5462
      %5464 = vrot.lane.b32.xlu0 %v4574, 56
      %v5465 = vpop.permute.xlu0 %5464
      %5466 = vrot.lane.b32.xlu0 %v4575, 56
      %v5467 = vpop.permute.xlu0 %5466
      %5468 = vrot.lane.b32.xlu0 %v4576, 56
      %v5469 = vpop.permute.xlu0 %5468
      %5470 = vrot.lane.b32.xlu0 %v4577, 56
      %v5471 = vpop.permute.xlu0 %5470
      %5472 = vrot.lane.b32.xlu0 %v4578, 56
      %v5473 = vpop.permute.xlu0 %5472
      %5474 = vrot.lane.b32.xlu0 %v4579, 56
      %v5475 = vpop.permute.xlu0 %5474
      %5540 = vrot.lane.b32.xlu0 %v4580, 64
      %v5541 = vpop.permute.xlu0 %5540
      %5542 = vrot.lane.b32.xlu0 %v4581, 64
      %v5543 = vpop.permute.xlu0 %5542
      %5544 = vrot.lane.b32.xlu0 %v4582, 64
      %v5545 = vpop.permute.xlu0 %5544
      %5546 = vrot.lane.b32.xlu0 %v4583, 64
      %v5547 = vpop.permute.xlu0 %5546
      %5548 = vrot.lane.b32.xlu0 %v4584, 64
      %v5549 = vpop.permute.xlu0 %5548
      %5550 = vrot.lane.b32.xlu0 %v4585, 64
      %v5551 = vpop.permute.xlu0 %5550
      %5552 = vrot.lane.b32.xlu0 %v4586, 64
      %v5553 = vpop.permute.xlu0 %5552
      %5554 = vrot.lane.b32.xlu0 %v4587, 64
      %v5555 = vpop.permute.xlu0 %5554
      %5556 = vrot.lane.b32.xlu0 %v4588, 64
      %v5557 = vpop.permute.xlu0 %5556
      %5558 = vrot.lane.b32.xlu0 %v4589, 64
      %v5559 = vpop.permute.xlu0 %5558
      %5560 = vrot.lane.b32.xlu0 %v4590, 64
      %v5561 = vpop.permute.xlu0 %5560
      %5562 = vrot.lane.b32.xlu0 %v4591, 64
      %v5563 = vpop.permute.xlu0 %5562
      %5564 = vrot.lane.b32.xlu0 %v4592, 64
      %v5565 = vpop.permute.xlu0 %5564
      %5566 = vrot.lane.b32.xlu0 %v4593, 64
      %v5567 = vpop.permute.xlu0 %5566
      %5568 = vrot.lane.b32.xlu0 %v4594, 64
      %v5569 = vpop.permute.xlu0 %5568
      %5570 = vrot.lane.b32.xlu0 %v4595, 64
      %v5571 = vpop.permute.xlu0 %5570
      %5572 = vrot.lane.b32.xlu0 %v4596, 64
      %v5573 = vpop.permute.xlu0 %5572
      %5574 = vrot.lane.b32.xlu0 %v4597, 64
      %v5575 = vpop.permute.xlu0 %5574
      %5576 = vrot.lane.b32.xlu0 %v4598, 64
      %v5577 = vpop.permute.xlu0 %5576
      %5578 = vrot.lane.b32.xlu0 %v4599, 64
      %v5579 = vpop.permute.xlu0 %5578
      %5580 = vrot.lane.b32.xlu0 %v4600, 64
      %v5581 = vpop.permute.xlu0 %5580
      %5582 = vrot.lane.b32.xlu0 %v4601, 64
      %v5583 = vpop.permute.xlu0 %5582
      %5584 = vrot.lane.b32.xlu0 %v4602, 64
      %v5585 = vpop.permute.xlu0 %5584
      %5586 = vrot.lane.b32.xlu0 %v4603, 64
      %v5587 = vpop.permute.xlu0 %5586
      %5588 = vrot.lane.b32.xlu0 %v4604, 64
      %v5589 = vpop.permute.xlu0 %5588
      %5590 = vrot.lane.b32.xlu0 %v4605, 64
      %v5591 = vpop.permute.xlu0 %5590
      %5592 = vrot.lane.b32.xlu0 %v4606, 64
      %v5593 = vpop.permute.xlu0 %5592
      %5594 = vrot.lane.b32.xlu0 %v4607, 64
      %v5595 = vpop.permute.xlu0 %5594
      %5596 = vrot.lane.b32.xlu0 %v4608, 64
      %v5597 = vpop.permute.xlu0 %5596
      %5598 = vrot.lane.b32.xlu0 %v4609, 64
      %v5599 = vpop.permute.xlu0 %5598
      %5600 = vrot.lane.b32.xlu0 %v4610, 64
      %v5601 = vpop.permute.xlu0 %5600
      %5602 = vrot.lane.b32.xlu0 %v4611, 64
      %v5603 = vpop.permute.xlu0 %5602
      %v5636 = vsel %vm254, %v4324, %v4645
      %v5637 = vsel %vm254, %v4325, %v4647
      %v5638 = vsel %vm254, %v4326, %v4649
      %v5639 = vsel %vm254, %v4327, %v4651
      %v5640 = vsel %vm254, %v4328, %v4653
      %v5641 = vsel %vm254, %v4329, %v4655
      %v5642 = vsel %vm254, %v4330, %v4657
      %v5643 = vsel %vm254, %v4331, %v4659
      %v5644 = vsel %vm254, %v4332, %v4661
      %v5645 = vsel %vm254, %v4333, %v4663
      %v5646 = vsel %vm254, %v4334, %v4665
      %v5647 = vsel %vm254, %v4335, %v4667
      %v5648 = vsel %vm254, %v4336, %v4669
      %v5649 = vsel %vm254, %v4337, %v4671
      %v5650 = vsel %vm254, %v4338, %v4673
      %v5651 = vsel %vm254, %v4339, %v4675
      %v5652 = vsel %vm254, %v4340, %v4677
      %v5653 = vsel %vm254, %v4341, %v4679
      %v5654 = vsel %vm254, %v4342, %v4681
      %v5655 = vsel %vm254, %v4343, %v4683
      %v5656 = vsel %vm254, %v4344, %v4685
      %v5657 = vsel %vm254, %v4345, %v4687
      %v5658 = vsel %vm254, %v4346, %v4689
      %v5659 = vsel %vm254, %v4347, %v4691
      %v5660 = vsel %vm254, %v4348, %v4693
      %v5661 = vsel %vm254, %v4349, %v4695
      %v5662 = vsel %vm254, %v4350, %v4697
      %v5663 = vsel %vm254, %v4351, %v4699
      %v5664 = vsel %vm254, %v4352, %v4701
      %v5665 = vsel %vm254, %v4353, %v4703
      %v5666 = vsel %vm254, %v4354, %v4705
      %v5667 = vsel %vm254, %v4355, %v4707
      %v5668 = vsel %vm3701, %v5636, %v4773
      %v5669 = vsel %vm3701, %v5637, %v4775
      %v5670 = vsel %vm3701, %v5638, %v4777
      %v5671 = vsel %vm3701, %v5639, %v4779
      %v5672 = vsel %vm3701, %v5640, %v4781
      %v5673 = vsel %vm3701, %v5641, %v4783
      %v5674 = vsel %vm3701, %v5642, %v4785
      %v5675 = vsel %vm3701, %v5643, %v4787
      %v5676 = vsel %vm3701, %v5644, %v4789
      %v5677 = vsel %vm3701, %v5645, %v4791
      %v5678 = vsel %vm3701, %v5646, %v4793
      %v5679 = vsel %vm3701, %v5647, %v4795
      %v5680 = vsel %vm3701, %v5648, %v4797
      %v5681 = vsel %vm3701, %v5649, %v4799
      %v5682 = vsel %vm3701, %v5650, %v4801
      %v5683 = vsel %vm3701, %v5651, %v4803
      %v5684 = vsel %vm3701, %v5652, %v4805
      %v5685 = vsel %vm3701, %v5653, %v4807
      %v5686 = vsel %vm3701, %v5654, %v4809
      %v5687 = vsel %vm3701, %v5655, %v4811
      %v5688 = vsel %vm3701, %v5656, %v4813
      %v5689 = vsel %vm3701, %v5657, %v4815
      %v5690 = vsel %vm3701, %v5658, %v4817
      %v5691 = vsel %vm3701, %v5659, %v4819
      %v5692 = vsel %vm3701, %v5660, %v4821
      %v5693 = vsel %vm3701, %v5661, %v4823
      %v5694 = vsel %vm3701, %v5662, %v4825
      %v5695 = vsel %vm3701, %v5663, %v4827
      %v5696 = vsel %vm3701, %v5664, %v4829
      %v5697 = vsel %vm3701, %v5665, %v4831
      %v5698 = vsel %vm3701, %v5666, %v4833
      %v5699 = vsel %vm3701, %v5667, %v4835
      %v5700 = vsel %vm1720, %v5668, %v4901
      %v5701 = vsel %vm1720, %v5669, %v4903
      %v5702 = vsel %vm1720, %v5670, %v4905
      %v5703 = vsel %vm1720, %v5671, %v4907
      %v5704 = vsel %vm1720, %v5672, %v4909
      %v5705 = vsel %vm1720, %v5673, %v4911
      %v5706 = vsel %vm1720, %v5674, %v4913
      %v5707 = vsel %vm1720, %v5675, %v4915
      %v5708 = vsel %vm1720, %v5676, %v4917
      %v5709 = vsel %vm1720, %v5677, %v4919
      %v5710 = vsel %vm1720, %v5678, %v4921
      %v5711 = vsel %vm1720, %v5679, %v4923
      %v5712 = vsel %vm1720, %v5680, %v4925
      %v5713 = vsel %vm1720, %v5681, %v4927
      %v5714 = vsel %vm1720, %v5682, %v4929
      %v5715 = vsel %vm1720, %v5683, %v4931
      %v5716 = vsel %vm1720, %v5684, %v4933
      %v5717 = vsel %vm1720, %v5685, %v4935
      %v5718 = vsel %vm1720, %v5686, %v4937
      %v5719 = vsel %vm1720, %v5687, %v4939
      %v5720 = vsel %vm1720, %v5688, %v4941
      %v5721 = vsel %vm1720, %v5689, %v4943
      %v5722 = vsel %vm1720, %v5690, %v4945
      %v5723 = vsel %vm1720, %v5691, %v4947
      %v5724 = vsel %vm1720, %v5692, %v4949
      %v5725 = vsel %vm1720, %v5693, %v4951
      %v5726 = vsel %vm1720, %v5694, %v4953
      %v5727 = vsel %vm1720, %v5695, %v4955
      %v5728 = vsel %vm1720, %v5696, %v4957
      %v5729 = vsel %vm1720, %v5697, %v4959
      %v5730 = vsel %vm1720, %v5698, %v4961
      %v5731 = vsel %vm1720, %v5699, %v4963
      %v5732 = vsel %vm3766, %v5700, %v5029
      %v5733 = vsel %vm3766, %v5701, %v5031
      %v5734 = vsel %vm3766, %v5702, %v5033
      %v5735 = vsel %vm3766, %v5703, %v5035
      %v5736 = vsel %vm3766, %v5704, %v5037
      %v5737 = vsel %vm3766, %v5705, %v5039
      %v5738 = vsel %vm3766, %v5706, %v5041
      %v5739 = vsel %vm3766, %v5707, %v5043
      %v5740 = vsel %vm3766, %v5708, %v5045
      %v5741 = vsel %vm3766, %v5709, %v5047
      %v5742 = vsel %vm3766, %v5710, %v5049
      %v5743 = vsel %vm3766, %v5711, %v5051
      %v5744 = vsel %vm3766, %v5712, %v5053
      %v5745 = vsel %vm3766, %v5713, %v5055
      %v5746 = vsel %vm3766, %v5714, %v5057
      %v5747 = vsel %vm3766, %v5715, %v5059
      %v5748 = vsel %vm3766, %v5716, %v5061
      %v5749 = vsel %vm3766, %v5717, %v5063
      %v5750 = vsel %vm3766, %v5718, %v5065
      %v5751 = vsel %vm3766, %v5719, %v5067
      %v5752 = vsel %vm3766, %v5720, %v5069
      %v5753 = vsel %vm3766, %v5721, %v5071
      %v5754 = vsel %vm3766, %v5722, %v5073
      %v5755 = vsel %vm3766, %v5723, %v5075
      %v5756 = vsel %vm3766, %v5724, %v5077
      %v5757 = vsel %vm3766, %v5725, %v5079
      %v5758 = vsel %vm3766, %v5726, %v5081
      %v5759 = vsel %vm3766, %v5727, %v5083
      %v5760 = vsel %vm3766, %v5728, %v5085
      %v5761 = vsel %vm3766, %v5729, %v5087
      %v5762 = vsel %vm3766, %v5730, %v5089
      %v5763 = vsel %vm3766, %v5731, %v5091
      %v5764 = vsel %vm3799, %v5732, %v5157
      %v5765 = vsel %vm3799, %v5733, %v5159
      %v5766 = vsel %vm3799, %v5734, %v5161
      %v5767 = vsel %vm3799, %v5735, %v5163
      %v5768 = vsel %vm3799, %v5736, %v5165
      %v5769 = vsel %vm3799, %v5737, %v5167
      %v5770 = vsel %vm3799, %v5738, %v5169
      %v5771 = vsel %vm3799, %v5739, %v5171
      %v5772 = vsel %vm3799, %v5740, %v5173
      %v5773 = vsel %vm3799, %v5741, %v5175
      %v5774 = vsel %vm3799, %v5742, %v5177
      %v5775 = vsel %vm3799, %v5743, %v5179
      %v5776 = vsel %vm3799, %v5744, %v5181
      %v5777 = vsel %vm3799, %v5745, %v5183
      %v5778 = vsel %vm3799, %v5746, %v5185
      %v5779 = vsel %vm3799, %v5747, %v5187
      %v5780 = vsel %vm3799, %v5748, %v5189
      %v5781 = vsel %vm3799, %v5749, %v5191
      %v5782 = vsel %vm3799, %v5750, %v5193
      %v5783 = vsel %vm3799, %v5751, %v5195
      %v5784 = vsel %vm3799, %v5752, %v5197
      %v5785 = vsel %vm3799, %v5753, %v5199
      %v5786 = vsel %vm3799, %v5754, %v5201
      %v5787 = vsel %vm3799, %v5755, %v5203
      %v5788 = vsel %vm3799, %v5756, %v5205
      %v5789 = vsel %vm3799, %v5757, %v5207
      %v5790 = vsel %vm3799, %v5758, %v5209
      %v5791 = vsel %vm3799, %v5759, %v5211
      %v5792 = vsel %vm3799, %v5760, %v5213
      %v5793 = vsel %vm3799, %v5761, %v5215
      %v5794 = vsel %vm3799, %v5762, %v5217
      %v5795 = vsel %vm3799, %v5763, %v5219
      %v5796 = vsel %vm1786, %v5764, %v5285
      %v5797 = vsel %vm1786, %v5765, %v5287
      %v5798 = vsel %vm1786, %v5766, %v5289
      %v5799 = vsel %vm1786, %v5767, %v5291
      %v5800 = vsel %vm1786, %v5768, %v5293
      %v5801 = vsel %vm1786, %v5769, %v5295
      %v5802 = vsel %vm1786, %v5770, %v5297
      %v5803 = vsel %vm1786, %v5771, %v5299
      %v5804 = vsel %vm1786, %v5772, %v5301
      %v5805 = vsel %vm1786, %v5773, %v5303
      %v5806 = vsel %vm1786, %v5774, %v5305
      %v5807 = vsel %vm1786, %v5775, %v5307
      %v5808 = vsel %vm1786, %v5776, %v5309
      %v5809 = vsel %vm1786, %v5777, %v5311
      %v5810 = vsel %vm1786, %v5778, %v5313
      %v5811 = vsel %vm1786, %v5779, %v5315
      %v5812 = vsel %vm1786, %v5780, %v5317
      %v5813 = vsel %vm1786, %v5781, %v5319
      %v5814 = vsel %vm1786, %v5782, %v5321
      %v5815 = vsel %vm1786, %v5783, %v5323
      %v5816 = vsel %vm1786, %v5784, %v5325
      %v5817 = vsel %vm1786, %v5785, %v5327
      %v5818 = vsel %vm1786, %v5786, %v5329
      %v5819 = vsel %vm1786, %v5787, %v5331
      %v5820 = vsel %vm1786, %v5788, %v5333
      %v5821 = vsel %vm1786, %v5789, %v5335
      %v5822 = vsel %vm1786, %v5790, %v5337
      %v5823 = vsel %vm1786, %v5791, %v5339
      %v5824 = vsel %vm1786, %v5792, %v5341
      %v5825 = vsel %vm1786, %v5793, %v5343
      %v5826 = vsel %vm1786, %v5794, %v5345
      %v5827 = vsel %vm1786, %v5795, %v5347
      %v5828 = vsel %vm3864, %v5796, %v5413
      %v5829 = vsel %vm3864, %v5797, %v5415
      %v5830 = vsel %vm3864, %v5798, %v5417
      %v5831 = vsel %vm3864, %v5799, %v5419
      %v5832 = vsel %vm3864, %v5800, %v5421
      %v5833 = vsel %vm3864, %v5801, %v5423
      %v5834 = vsel %vm3864, %v5802, %v5425
      %v5835 = vsel %vm3864, %v5803, %v5427
      %v5836 = vsel %vm3864, %v5804, %v5429
      %v5837 = vsel %vm3864, %v5805, %v5431
      %v5838 = vsel %vm3864, %v5806, %v5433
      %v5839 = vsel %vm3864, %v5807, %v5435
      %v5840 = vsel %vm3864, %v5808, %v5437
      %v5841 = vsel %vm3864, %v5809, %v5439
      %v5842 = vsel %vm3864, %v5810, %v5441
      %v5843 = vsel %vm3864, %v5811, %v5443
      %v5844 = vsel %vm3864, %v5812, %v5445
      %v5845 = vsel %vm3864, %v5813, %v5447
      %v5846 = vsel %vm3864, %v5814, %v5449
      %v5847 = vsel %vm3864, %v5815, %v5451
      %v5848 = vsel %vm3864, %v5816, %v5453
      %v5849 = vsel %vm3864, %v5817, %v5455
      %v5850 = vsel %vm3864, %v5818, %v5457
      %v5851 = vsel %vm3864, %v5819, %v5459
      %v5852 = vsel %vm3864, %v5820, %v5461
      %v5853 = vsel %vm3864, %v5821, %v5463
      %v5854 = vsel %vm3864, %v5822, %v5465
      %v5855 = vsel %vm3864, %v5823, %v5467
      %v5856 = vsel %vm3864, %v5824, %v5469
      %v5857 = vsel %vm3864, %v5825, %v5471
      %v5858 = vsel %vm3864, %v5826, %v5473
      %v5859 = vsel %vm3864, %v5827, %v5475
      %v5860 = vsel %vm3897, %v5828, %v5541
      %v5861 = vsel %vm3897, %v5829, %v5543
      %v5862 = vsel %vm3897, %v5830, %v5545
      %v5863 = vsel %vm3897, %v5831, %v5547
      %v5864 = vsel %vm3897, %v5832, %v5549
      %v5865 = vsel %vm3897, %v5833, %v5551
      %v5866 = vsel %vm3897, %v5834, %v5553
      %v5867 = vsel %vm3897, %v5835, %v5555
      %v5868 = vsel %vm3897, %v5836, %v5557
      %v5869 = vsel %vm3897, %v5837, %v5559
      %v5870 = vsel %vm3897, %v5838, %v5561
      %v5871 = vsel %vm3897, %v5839, %v5563
      %v5872 = vsel %vm3897, %v5840, %v5565
      %v5873 = vsel %vm3897, %v5841, %v5567
      %v5874 = vsel %vm3897, %v5842, %v5569
      %v5875 = vsel %vm3897, %v5843, %v5571
      %v5876 = vsel %vm3897, %v5844, %v5573
      %v5877 = vsel %vm3897, %v5845, %v5575
      %v5878 = vsel %vm3897, %v5846, %v5577
      %v5879 = vsel %vm3897, %v5847, %v5579
      %v5880 = vsel %vm3897, %v5848, %v5581
      %v5881 = vsel %vm3897, %v5849, %v5583
      %v5882 = vsel %vm3897, %v5850, %v5585
      %v5883 = vsel %vm3897, %v5851, %v5587
      %v5884 = vsel %vm3897, %v5852, %v5589
      %v5885 = vsel %vm3897, %v5853, %v5591
      %v5886 = vsel %vm3897, %v5854, %v5593
      %v5887 = vsel %vm3897, %v5855, %v5595
      %v5888 = vsel %vm3897, %v5856, %v5597
      %v5889 = vsel %vm3897, %v5857, %v5599
      %v5890 = vsel %vm3897, %v5858, %v5601
      %v5891 = vsel %vm3897, %v5859, %v5603
      %v5892 = vld [vmem:[%s3] sm:$0xff]
      %v5894 = vsel %vm1852, %v5892, 0
      %v5897 = vsel %vm1852, %v5860, 0
      %v5900 = vsel %vm1852, %v5861, 0
      %v5903 = vsel %vm1852, %v5862, 0
      %v5906 = vsel %vm1852, %v5863, 0
      %v5909 = vsel %vm1852, %v5864, 0
      %v5912 = vsel %vm1852, %v5865, 0
      %v5915 = vsel %vm1852, %v5866, 0
      %v5918 = vsel %vm1852, %v5867, 0
      %v5921 = vsel %vm1852, %v5868, 0
      %v5924 = vsel %vm1852, %v5869, 0
      %v5927 = vsel %vm1852, %v5870, 0
      %v5930 = vsel %vm1852, %v5871, 0
      %v5933 = vsel %vm1852, %v5872, 0
      %v5936 = vsel %vm1852, %v5873, 0
      %v5939 = vsel %vm1852, %v5874, 0
      %v5942 = vsel %vm1852, %v5875, 0
      %v5945 = vsel %vm1852, %v5876, 0
      %v5948 = vsel %vm1852, %v5877, 0
      %v5951 = vsel %vm1852, %v5878, 0
      %v5954 = vsel %vm1852, %v5879, 0
      %v5957 = vsel %vm1852, %v5880, 0
      %v5960 = vsel %vm1852, %v5881, 0
      %v5963 = vsel %vm1852, %v5882, 0
      %v5966 = vsel %vm1852, %v5883, 0
      %v5969 = vsel %vm1852, %v5884, 0
      %v5972 = vsel %vm1852, %v5885, 0
      %v5975 = vsel %vm1852, %v5886, 0
      %v5978 = vsel %vm1852, %v5887, 0
      %v5981 = vsel %vm1852, %v5888, 0
      %v5984 = vsel %vm1852, %v5889, 0
      %v5987 = vsel %vm1852, %v5890, 0
      %v5990 = vsel %vm1852, %v5891, 0
      %5992 = vmatprep.subr.mxu0 0.0
      %5993 = vmatpush1.xpose.msra.mxu0 %v5897
      %5994 = vmatprep.subr.mxu0 0.0
      %5995 = vmatpush1.xpose.msra.mxu0 %v5900
      %5996 = vmatprep.subr.mxu0 0.0
      %5997 = vmatpush1.xpose.msra.mxu0 %v5903
      %5998 = vmatprep.subr.mxu0 0.0
      %5999 = vmatpush1.xpose.msra.mxu0 %v5906
      %6000 = vmatprep.subr.mxu0 0.0
      %6001 = vmatpush1.xpose.msra.mxu0 %v5909
      %6002 = vmatprep.subr.mxu0 0.0
      %6003 = vmatpush1.xpose.msra.mxu0 %v5912
      %6004 = vmatprep.subr.mxu0 0.0
      %6005 = vmatpush1.xpose.msra.mxu0 %v5915
      %6006 = vmatprep.subr.mxu0 0.0
      %6007 = vmatpush1.xpose.msra.mxu0 %v5918
      %6008 = vmatprep.subr.mxu0 0.0
      %6009 = vmatpush1.xpose.msra.mxu0 %v5921
      %6010 = vmatprep.subr.mxu0 0.0
      %6011 = vmatpush1.xpose.msra.mxu0 %v5924
      %6012 = vmatprep.subr.mxu0 0.0
      %6013 = vmatpush1.xpose.msra.mxu0 %v5927
      %6014 = vmatprep.subr.mxu0 0.0
      %6015 = vmatpush1.xpose.msra.mxu0 %v5930
      %6016 = vmatprep.subr.mxu0 0.0
      %6017 = vmatpush1.xpose.msra.mxu0 %v5933
      %6018 = vmatprep.subr.mxu0 0.0
      %6019 = vmatpush1.xpose.msra.mxu0 %v5936
      %6020 = vmatprep.subr.mxu0 0.0
      %6021 = vmatpush1.xpose.msra.mxu0 %v5939
      %6022 = vmatprep.subr.mxu0 0.0
      %6023 = vmatpush1.xpose.msra.mxu0 %v5942
      %6024 = vmatprep.subr.mxu0 0.0
      %6025 = vmatpush1.xpose.msra.mxu0 %v5945
      %6026 = vmatprep.subr.mxu0 0.0
      %6027 = vmatpush1.xpose.msra.mxu0 %v5948
      %6028 = vmatprep.subr.mxu0 0.0
      %6029 = vmatpush1.xpose.msra.mxu0 %v5951
      %6030 = vmatprep.subr.mxu0 0.0
      %6031 = vmatpush1.xpose.msra.mxu0 %v5954
      %6032 = vmatprep.subr.mxu0 0.0
      %6033 = vmatpush1.xpose.msra.mxu0 %v5957
      %6034 = vmatprep.subr.mxu0 0.0
      %6035 = vmatpush1.xpose.msra.mxu0 %v5960
      %6036 = vmatprep.subr.mxu0 0.0
      %6037 = vmatpush1.xpose.msra.mxu0 %v5963
      %6038 = vmatprep.subr.mxu0 0.0
      %6039 = vmatpush1.xpose.msra.mxu0 %v5966
      %6040 = vmatprep.subr.mxu0 0.0
      %6041 = vmatpush1.xpose.msra.mxu0 %v5969
      %6042 = vmatprep.subr.mxu0 0.0
      %6043 = vmatpush1.xpose.msra.mxu0 %v5972
      %6044 = vmatprep.subr.mxu0 0.0
      %6045 = vmatpush1.xpose.msra.mxu0 %v5975
      %6046 = vmatprep.subr.mxu0 0.0
      %6047 = vmatpush1.xpose.msra.mxu0 %v5978
      %6048 = vmatprep.subr.mxu0 0.0
      %6049 = vmatpush1.xpose.msra.mxu0 %v5981
      %6050 = vmatprep.subr.mxu0 0.0
      %6051 = vmatpush1.xpose.msra.mxu0 %v5984
      %6052 = vmatprep.subr.mxu0 0.0
      %6053 = vmatpush1.xpose.msra.mxu0 %v5987
      %6054 = vmatprep.subr.mxu0 0.0
      %6055 = vmatpush1.xpose.msra.mxu0 %v5990
      %6056 = vmatprep.mubr.f32.mxu0 0.0
      %6057 = vmatmul.mubr.f32.gmra.mrb[0].mxu0 %v5894
      %v6058 = vpop.f32.mrb[0].mxu0
      %v6059 = vadd.f32 0.0, %v6058
      %v6060 = vpop.f32.mrb[0].mxu0
      %v6061 = vadd.f32 0.0, %v6060
      %6062 = vdwg.mxu0
      %v6063 = vmax.f32 %v6059, 0.0
      %v6064 = vmax.f32 %v6061, 0.0
      %6065 = vst [vmem:[%s197] sm:$0xff] %v6063
      %6066 = vst [vmem:[%s197 + $0x8] sm:$0xff] %v6064
      %p6067 = scmp.lt.s32.totalorder %s15, 1
      %s6068 = scalar_select %p6067, %s15, 1
      %s6069 = smul.addr %s6068, 2
      %s6070 = smul.addr %s6069, 8
      %s6071 = scalar_lea.vmem %s4, %s6070
      // Predicated region
      $region37: #{stack_decoder_forward.1} parent=35 // pred_check
        %p6072 = pneg %p122
      $region38: #{stack_decoder_forward.1} parent=35 // pred_check_branch
        %6074 = sbr.rel (%p6072) target = $region40
      $region39: #{stack_decoder_forward.1} parent=35 // pred_region
        _
      $region40: #{stack_decoder_forward.1} parent=35 // pred_fallthru
        _
    $region36: #{stack_decoder_forward.1} parent=5 // pred_fallthru
      _
    %p6075 = scmp.le.s32.totalorder 2, %s10
    // Predicated region
    $region41: #{stack_decoder_forward.1} parent=5 // pred_check
      %p6076 = pneg %p6075
    $region42: #{stack_decoder_forward.1} parent=5 // pred_check_branch
      %6078 = sbr.rel (%p6076) target = $region44
    $region43: #{stack_decoder_forward.1} parent=5 // pred_region
      %s6079 = ssub.s32 %s10, 2
      // Predicated region
      $region45: #{stack_decoder_forward.1} parent=43 // pred_check
        %p6080 = pneg %p128
      $region46: #{stack_decoder_forward.1} parent=43 // pred_check_branch
        %6082 = sbr.rel (%p6080) target = $region48
      $region47: #{stack_decoder_forward.1} parent=43 // pred_region
        %p6083 = scmp.lt.s32.totalorder %s16, 1
        %s6084 = scalar_select %p6083, %s16, 1
        %s6085 = smul.addr %s6084, 2
        %s6086 = smul.addr %s6085, 8
        %s6087 = scalar_lea.vmem %s4, %s6086
      $region48: #{stack_decoder_forward.1} parent=43 // pred_fallthru
        _
    $region44: #{stack_decoder_forward.1} parent=5 // pred_fallthru
      _
  $region6: #{stack_decoder_forward.1} parent=0 // loop_footer
    %s14 = sadd.s32 1, %s10
  $region7: #{stack_decoder_forward.1} parent=0 // loop_footer_branch
    %9 = sbr.rel target = $region3
  $region8: #{stack_decoder_forward.1} parent=0 // loop_exit
    _

</llo_original>
